<compile_context>
chip_gen: v7x
topology: tpu7x:2x2x1
jax: 0.10.0
libtpu: 0.0.40
codegen_flags: <defaults>
</compile_context>

<pallas_src>
import functools

import jax
import jax.numpy as jnp
from jax.experimental import pallas as pl
from jax.experimental.pallas import tpu as pltpu

# ----------------------------- config ---------------------------------------
BATCH      = 64     # number of independent graphs processed per call
N_NODES    = 8      # nodes per graph
N_FEATURE  = 16     # input feature dim
HIDDEN     = 32     # hidden width of predSeq (fixed by the module)
N_CLASS    = 4      # number of classes
C_PAD      = 128    # lane-dense padded class axis used INSIDE the kernel
PROP_RANGE = 2      # propagation range
ALPHA      = 0.9
BETA       = 1.0
NEG_BIG    = -1e30  # "minus infinity" for masked / padded class lanes


def _default_graphs_per_block(batch):
    """One fat grid step on 1-TC chips (v5e/v6e); two parallel steps on v7x."""
    try:
        kind = jax.devices()[0].device_kind.lower()
    except Exception:
        kind = ""
    if ("v7" in kind or "7x" in kind) and batch % 2 == 0:
        return batch // 2          # 2 grid steps -> one per TensorCore
    return batch                   # single step: zero per-step overhead


def _softmax_lastdim(z, *, approx):
    """softmax over the last (class) axis; matches nn.Softmax(dim=1) on (N, C)."""
    m = jnp.max(z, axis=-1, keepdims=True)
    e = jnp.exp(z - m)
    s = jnp.sum(e, axis=-1, keepdims=True)
    if approx:
        # approx reciprocal -> EUP vrcp slot (otherwise idle); ~1e-4 rel error
        return e * pl.reciprocal(s, approx=True)
    return e / s                   # exact normalization for the final output


def plp_kernel(adj_bd_ref, x_ref, w1_ref, b1_ref, w2_ref, b2_ref, out_ref,
               *, prop_range, alpha, beta):
    gb, n, c = out_ref.shape            # (GB, N, C)
    c_pad = w2_ref.shape[-1]            # 128 (lane-dense working width)

    # ---- predSeq on the whole (GB*N, F) slab: Linear(F,32)->ReLU->Linear ----
    x = x_ref[...]                                                  # (GB*N, F)
    h = jnp.dot(x, w1_ref[...], preferred_element_type=jnp.float32) + b1_ref[...]
    h = jnp.maximum(h, 0.0)                                         # ReLU
    logits = jnp.dot(h, w2_ref[...], preferred_element_type=jnp.float32) + b2_ref[...]
    # padded class columns carry a -1e30 bias -> exactly 0 after softmax
    p = _softmax_lastdim(logits, approx=True)                       # (GB*N, 128)

    # ---- propagation, mode == 'none': tanh(alpha * A @ P) * beta per hop ----
    # One block-diagonal MXU matmul per hop (replaces the former (GB,N,N,128)
    # VPU broadcast + sublane reduce that spilled the entire vreg file).
    adj_bd = adj_bd_ref[...]                                        # (GB*N, GB*N)
    for _ in range(prop_range):                                     # small static loop
        ap = jnp.dot(adj_bd, p, preferred_element_type=jnp.float32)  # (GB*N, 128)
        p = jnp.tanh(alpha * ap)
        if beta != 1.0:                 # static check: skip the no-op multiply
            p = p * beta
        # Dropout(0.5) is identity at inference time.
        # Padded class lanes stay exactly 0 through every hop (tanh(0) == 0).

    # ---- final softmax over classes, padded lanes masked out ----------------
    lane = jax.lax.broadcasted_iota(jnp.int32, p.shape, dimension=1)
    p = jnp.where(lane < c, p, jnp.float32(NEG_BIG))
    y = _softmax_lastdim(p, approx=False)                            # (GB*N, 128)
    # Store only the live classes: (GB, N, C) block (masked vst on 4 lanes),
    # which removes the 32x dead HBM writeback + follow-up XLA slice.
    out_ref[...] = y.reshape(gb, n, c_pad)[:, :, :c]


def plp_forward(adj, x, w1, b1, w2, b2,
                prop_range=PROP_RANGE, alpha=ALPHA, beta=BETA,
                graphs_per_block=None):
    B, N, _ = adj.shape
    F = x.shape[-1]
    H = w1.shape[1]
    C = w2.shape[1]
    gb = graphs_per_block or _default_graphs_per_block(B)
    assert B % gb == 0

    # Pad the class axis of the second Linear to 128 lanes.  Padded columns of
    # w2 are 0 and padded bias is -1e30 so padded logits vanish under softmax.
    w2p = jnp.zeros((H, C_PAD), jnp.float32).at[:, :C].set(w2)
    b2p = jnp.full((1, C_PAD), NEG_BIG, jnp.float32).at[:, :C].set(b2)

    # Features as one (B*N, F) slab: predSeq is graph-independent.
    x_flat = x.reshape(B * N, F)

    # Block-diagonal propagation matrix (B*N, B*N): each hop becomes a single
    # MXU matmul per grid step.  1 MB at B=64, N=8 -- negligible.
    eye = jnp.eye(B, dtype=adj.dtype)
    adj_bd = jnp.einsum('bij,bc->bicj', adj, eye).reshape(B * N, B * N)

    kern = functools.partial(plp_kernel, prop_range=prop_range,
                             alpha=alpha, beta=beta)

    # TODO(synk): at realistic graph sizes (N >= ~2048) adj must be row-tiled
    # and the block-diag construction revisited (v7x VMEM is 64 MiB);
    # irrelevant at N=8 (per-step VMEM here is ~1-2 MB).
    return pl.pallas_call(
        kern,
        out_shape=jax.ShapeDtypeStruct((B, N, C), jnp.float32),
        grid=(B // gb,),
        in_specs=[
            pl.BlockSpec((gb * N, gb * N), lambda b: (b, b)),   # diag block of adj_bd
            pl.BlockSpec((gb * N, F),      lambda b: (b, 0)),   # feature slab
            pl.BlockSpec((F, H),           lambda b: (0, 0)),   # w1 (shared)
            pl.BlockSpec((1, H),           lambda b: (0, 0)),   # b1
            pl.BlockSpec((H, C_PAD),       lambda b: (0, 0)),   # w2 (padded)
            pl.BlockSpec((1, C_PAD),       lambda b: (0, 0)),   # b2 (padded)
        ],
        out_specs=pl.BlockSpec((gb, N, C), lambda b: (b, 0, 0)),
        compiler_params=pltpu.CompilerParams(
            dimension_semantics=("parallel",)),   # v7x: one step per TensorCore
    )(adj_bd, x_flat, w1, b1, w2p, b2p)


def reference_forward(adj, x, w1, b1, w2, b2,
                      prop_range=PROP_RANGE, alpha=ALPHA, beta=BETA):
    """Pure-JAX batched reference of the module's forward (mode='none')."""
    h = jnp.maximum(jnp.einsum('bnf,fh->bnh', x, w1) + b1, 0.0)
    p = jax.nn.softmax(jnp.einsum('bnh,hc->bnc', h, w2) + b2, axis=-1)
    for _ in range(prop_range):
        p = jnp.tanh(alpha * jnp.einsum('bij,bjc->bic', adj, p)) * beta
    return jax.nn.softmax(p, axis=-1)


if __name__ == "__main__":
    key = jax.random.PRNGKey(0)
    k_adj, k_x, k_w1, k_b1, k_w2, k_b2 = jax.random.split(key, 6)

    # B independent graphs: row-normalized random propagation matrices.
    adj_raw = jax.random.uniform(k_adj, (BATCH, N_NODES, N_NODES), jnp.float32)
    adj = adj_raw / jnp.sum(adj_raw, axis=2, keepdims=True)

    x = jax.random.normal(k_x, (BATCH, N_NODES, N_FEATURE), jnp.float32)

    # shared parameters (shapes match nn.Linear(F,32), nn.Linear(32,C))
    w1 = jax.random.normal(k_w1, (N_FEATURE, HIDDEN), jnp.float32) * 0.1
    b1 = jax.random.normal(k_b1, (1, HIDDEN), jnp.float32) * 0.01
    w2 = jax.random.normal(k_w2, (HIDDEN, N_CLASS), jnp.float32) * 0.1
    b2 = jax.random.normal(k_b2, (1, N_CLASS), jnp.float32) * 0.01

    # jit fuses block-diag construction + weight padding + pallas_call into one
    # dispatch (no separate eager XLA ops per call).
    fwd = jax.jit(plp_forward)
    y = jax.block_until_ready(fwd(adj, x, w1, b1, w2, b2))

    y_ref = reference_forward(adj, x, w1, b1, w2, b2)
    assert y.shape == (BATCH, N_NODES, N_CLASS)
    # final softmax uses an exact reciprocal -> rows sum to 1 tightly
    assert jnp.allclose(jnp.sum(y, axis=-1), 1.0, atol=1e-4)
    # intermediate softmax still uses pl.reciprocal(approx=True)
    assert jnp.allclose(y, y_ref, atol=3e-3, rtol=3e-3)

    print("KERNEL_OK")
</pallas_src>

<mosaic_0001>
module attributes {stable_mosaic.version = 11 : i64} {
  func.func @plp_kernel(%arg0: i32, %arg1: memref<512x512xf32, #tpu.memory_space<vmem>>, %arg2: memref<512x16xf32, #tpu.memory_space<vmem>>, %arg3: memref<16x32xf32, #tpu.memory_space<vmem>>, %arg4: memref<1x32xf32, #tpu.memory_space<vmem>>, %arg5: memref<32x128xf32, #tpu.memory_space<vmem>>, %arg6: memref<1x128xf32, #tpu.memory_space<vmem>>, %arg7: memref<64x8x4xf32, #tpu.memory_space<vmem>>) attributes {dimension_semantics = [#tpu.dimension_semantics<parallel>], iteration_bounds = array<i64: 1>, scalar_prefetch = 0 : i64, scratch_operands = 0 : i64, tpu.core_type = #tpu.core_type<tc>, window_params = [{transform_indices = @transform_0, window_bounds = array<i64: 512, 512>}, {transform_indices = @transform_1, window_bounds = array<i64: 512, 16>}, {pipeline_mode = #tpu.pipeline_mode<synchronous>, transform_indices = @transform_2, window_bounds = array<i64: 16, 32>}, {pipeline_mode = #tpu.pipeline_mode<synchronous>, transform_indices = @transform_3, window_bounds = array<i64: 1, 32>}, {pipeline_mode = #tpu.pipeline_mode<synchronous>, transform_indices = @transform_4, window_bounds = array<i64: 32, 128>}, {pipeline_mode = #tpu.pipeline_mode<synchronous>, transform_indices = @transform_5, window_bounds = array<i64: 1, 128>}, {transform_indices = @transform_6, window_bounds = array<i64: 64, 8, 4>}]} {
    %c0 = arith.constant 0 : index
    %c0_0 = arith.constant 0 : index
    %0 = vector.load %arg2[%c0, %c0_0] : memref<512x16xf32, #tpu.memory_space<vmem>>, vector<512x16xf32>
    %c0_1 = arith.constant 0 : index
    %c0_2 = arith.constant 0 : index
    %1 = vector.load %arg3[%c0_1, %c0_2] : memref<16x32xf32, #tpu.memory_space<vmem>>, vector<16x32xf32>
    %cst = arith.constant dense<0.000000e+00> : vector<512x32xf32>
    %2 = tpu.matmul %0, %1, %cst {dimension_numbers = #tpu.dot_dimension_numbers<[1], [0], [0], [1], [0, 0, 1, 1], [], []>} : vector<512x16xf32>, vector<16x32xf32>, vector<512x32xf32> -> vector<512x32xf32>
    %c0_3 = arith.constant 0 : index
    %c0_4 = arith.constant 0 : index
    %3 = vector.load %arg4[%c0_3, %c0_4] : memref<1x32xf32, #tpu.memory_space<vmem>>, vector<1x32xf32>
    %4 = vector.broadcast %3 : vector<1x32xf32> to vector<512x32xf32>
    %5 = arith.addf %2, %4 : vector<512x32xf32>
    %cst_5 = arith.constant 0.000000e+00 : f32
    %6 = vector.broadcast %cst_5 : f32 to vector<512x32xf32>
    %7 = arith.maximumf %5, %6 : vector<512x32xf32>
    %c0_6 = arith.constant 0 : index
    %c0_7 = arith.constant 0 : index
    %8 = vector.load %arg5[%c0_6, %c0_7] : memref<32x128xf32, #tpu.memory_space<vmem>>, vector<32x128xf32>
    %cst_8 = arith.constant dense<0.000000e+00> : vector<512x128xf32>
    %9 = tpu.matmul %7, %8, %cst_8 {dimension_numbers = #tpu.dot_dimension_numbers<[1], [0], [0], [1], [0, 0, 1, 1], [], []>} : vector<512x32xf32>, vector<32x128xf32>, vector<512x128xf32> -> vector<512x128xf32>
    %c0_9 = arith.constant 0 : index
    %c0_10 = arith.constant 0 : index
    %10 = vector.load %arg6[%c0_9, %c0_10] : memref<1x128xf32, #tpu.memory_space<vmem>>, vector<1x128xf32>
    %11 = vector.broadcast %10 : vector<1x128xf32> to vector<512x128xf32>
    %12 = arith.addf %9, %11 : vector<512x128xf32>
    %cst_11 = arith.constant dense<0xFF800000> : vector<512xf32>
    %13 = vector.multi_reduction <maximumf>, %12, %cst_11 [1] : vector<512x128xf32> to vector<512xf32>
    %14 = vector.shape_cast %13 : vector<512xf32> to vector<512x1xf32>
    %15 = vector.broadcast %14 : vector<512x1xf32> to vector<512x128xf32>
    %16 = arith.subf %12, %15 : vector<512x128xf32>
    %17 = math.exp %16 : vector<512x128xf32>
    %cst_12 = arith.constant dense<0.000000e+00> : vector<512xf32>
    %18 = vector.multi_reduction <add>, %17, %cst_12 [1] : vector<512x128xf32> to vector<512xf32>
    %19 = vector.shape_cast %18 : vector<512xf32> to vector<512x1xf32>
    %20 = tpu.reciprocal %19 {approx = true} : vector<512x1xf32> -> vector<512x1xf32>
    %21 = vector.broadcast %20 : vector<512x1xf32> to vector<512x128xf32>
    %22 = arith.mulf %17, %21 : vector<512x128xf32>
    %c0_13 = arith.constant 0 : index
    %c0_14 = arith.constant 0 : index
    %23 = vector.load %arg1[%c0_13, %c0_14] : memref<512x512xf32, #tpu.memory_space<vmem>>, vector<512x512xf32>
    %cst_15 = arith.constant dense<0.000000e+00> : vector<512x128xf32>
    %24 = tpu.matmul %23, %22, %cst_15 {dimension_numbers = #tpu.dot_dimension_numbers<[1], [0], [0], [1], [0, 0, 1, 1], [], []>} : vector<512x512xf32>, vector<512x128xf32>, vector<512x128xf32> -> vector<512x128xf32>
    %cst_16 = arith.constant 0.899999976 : f32
    %25 = vector.broadcast %cst_16 : f32 to vector<512x128xf32>
    %26 = arith.mulf %25, %24 : vector<512x128xf32>
    %27 = math.tanh %26 : vector<512x128xf32>
    %cst_17 = arith.constant dense<0.000000e+00> : vector<512x128xf32>
    %28 = tpu.matmul %23, %27, %cst_17 {dimension_numbers = #tpu.dot_dimension_numbers<[1], [0], [0], [1], [0, 0, 1, 1], [], []>} : vector<512x512xf32>, vector<512x128xf32>, vector<512x128xf32> -> vector<512x128xf32>
    %cst_18 = arith.constant 0.899999976 : f32
    %29 = vector.broadcast %cst_18 : f32 to vector<512x128xf32>
    %30 = arith.mulf %29, %28 : vector<512x128xf32>
    %31 = math.tanh %30 : vector<512x128xf32>
    %32 = tpu.iota {dimensions = array<i32: 1>} : vector<512x128xi32>
    %c4_i32 = arith.constant 4 : i32
    %33 = vector.broadcast %c4_i32 : i32 to vector<512x128xi32>
    %34 = arith.cmpi slt, %32, %33 : vector<512x128xi32>
    %cst_19 = arith.constant -1.000000e+30 : f32
    %35 = vector.broadcast %cst_19 : f32 to vector<512x128xf32>
    %36 = arith.select %34, %31, %35 : vector<512x128xi1>, vector<512x128xf32>
    %cst_20 = arith.constant dense<0xFF800000> : vector<512xf32>
    %37 = vector.multi_reduction <maximumf>, %36, %cst_20 [1] : vector<512x128xf32> to vector<512xf32>
    %38 = vector.shape_cast %37 : vector<512xf32> to vector<512x1xf32>
    %39 = vector.broadcast %38 : vector<512x1xf32> to vector<512x128xf32>
    %40 = arith.subf %36, %39 : vector<512x128xf32>
    %41 = math.exp %40 : vector<512x128xf32>
    %cst_21 = arith.constant dense<0.000000e+00> : vector<512xf32>
    %42 = vector.multi_reduction <add>, %41, %cst_21 [1] : vector<512x128xf32> to vector<512xf32>
    %43 = vector.shape_cast %42 : vector<512xf32> to vector<512x1xf32>
    %44 = vector.broadcast %43 : vector<512x1xf32> to vector<512x128xf32>
    %45 = arith.divf %41, %44 : vector<512x128xf32>
    %46 = vector.shape_cast %45 : vector<512x128xf32> to vector<64x8x128xf32>
    %47 = vector.extract_strided_slice %46 {offsets = [0, 0, 0], sizes = [64, 8, 4], strides = [1, 1, 1]} : vector<64x8x128xf32> to vector<64x8x4xf32>
    %c0_22 = arith.constant 0 : index
    %c0_23 = arith.constant 0 : index
    %c0_24 = arith.constant 0 : index
    %48 = vector.load %arg7[%c0_22, %c0_23, %c0_24] : memref<64x8x4xf32, #tpu.memory_space<vmem>>, vector<64x8x4xf32>
    tpu.vector_store %arg7[%c0_22, %c0_23, %c0_24], %47 {strides = array<i32>} : memref<64x8x4xf32, #tpu.memory_space<vmem>>, vector<64x8x4xf32>,
    return
  }
  func.func @transform_0(%arg0: i32) -> (i32, i32) {
    %c0_i32 = arith.constant 0 : i32
    return %arg0, %arg0 : i32, i32
  }
  func.func @transform_1(%arg0: i32) -> (i32, i32) {
    %c0_i32 = arith.constant 0 : i32
    %c0_i32_0 = arith.constant 0 : i32
    return %arg0, %c0_i32 : i32, i32
  }
  func.func @transform_2(%arg0: i32) -> (i32, i32) {
    %c0_i32 = arith.constant 0 : i32
    %c0_i32_0 = arith.constant 0 : i32
    %c0_i32_1 = arith.constant 0 : i32
    return %c0_i32, %c0_i32_0 : i32, i32
  }
  func.func @transform_3(%arg0: i32) -> (i32, i32) {
    %c0_i32 = arith.constant 0 : i32
    %c0_i32_0 = arith.constant 0 : i32
    %c0_i32_1 = arith.constant 0 : i32
    return %c0_i32, %c0_i32_0 : i32, i32
  }
  func.func @transform_4(%arg0: i32) -> (i32, i32) {
    %c0_i32 = arith.constant 0 : i32
    %c0_i32_0 = arith.constant 0 : i32
    %c0_i32_1 = arith.constant 0 : i32
    return %c0_i32, %c0_i32_0 : i32, i32
  }
  func.func @transform_5(%arg0: i32) -> (i32, i32) {
    %c0_i32 = arith.constant 0 : i32
    %c0_i32_0 = arith.constant 0 : i32
    %c0_i32_1 = arith.constant 0 : i32
    return %c0_i32, %c0_i32_0 : i32, i32
  }
  func.func @transform_6(%arg0: i32) -> (i32, i32, i32) {
    %c0_i32 = arith.constant 0 : i32
    %c0_i32_0 = arith.constant 0 : i32
    %c0_i32_1 = arith.constant 0 : i32
    return %arg0, %c0_i32, %c0_i32_0 : i32, i32, i32
  }
}

</mosaic_0001>

<llo_original>
// kernel: plp_forward.1
$region0: #{plp_forward.1}
  #allocation0 [shape = 'u32[]', space=smem, size = 0x4, offset = 0x4, fixed_abs, tag = 'smem constant byte address 0x4 - core index']
  #allocation1 [shape = 'u32[144,128]{1,0:T(1,128)}', space=vmem, size = 0x12000, scoped, tag = 'internal scratch']
  %s0 = inlined_call_operand.vmem [shape: f32[512,512], index: 0, kind: input, shape index: {}]
  %s1 = inlined_call_operand.vmem [shape: f32[512,16], index: 1, kind: input, shape index: {}]
  %s2 = inlined_call_operand.vmem [shape: f32[16,32], index: 2, kind: input, shape index: {}]
  %s3 = inlined_call_operand.vmem [shape: f32[1,32], index: 3, kind: input, shape index: {}]
  %s4 = inlined_call_operand.vmem [shape: f32[32,128], index: 4, kind: input, shape index: {}]
  %s5 = inlined_call_operand.vmem [shape: f32[1,128], index: 5, kind: input, shape index: {}]
  %s6 = inlined_call_operand.vmem [shape: f32[64,8,4], index: 6, kind: output, shape index: {}]
  %s7 = sld [smem:[#allocation0]]
  $region34: #{plp_forward.1} parent=0
    _
  %s9 = ssub.s32 1, %s7
  %s10 = scalar_select 0, %s9, %s7
  // Predicated region
  $region2: #{plp_forward.1} parent=0 // pred_check
    _
  $region3: #{plp_forward.1} parent=0 // pred_check_branch
    %12 = sbr.rel (0) target = $region5
  $region4: #{plp_forward.1} parent=0 // pred_region
    _
  $region5: #{plp_forward.1} parent=0 // pred_fallthru
    _
  // Predicated region
  $region6: #{plp_forward.1} parent=0 // pred_check
    _
  $region7: #{plp_forward.1} parent=0 // pred_check_branch
    %14 = sbr.rel (0) target = $region9
  $region8: #{plp_forward.1} parent=0 // pred_region
    _
  $region9: #{plp_forward.1} parent=0 // pred_fallthru
    _
  // Predicated region
  $region10: #{plp_forward.1} parent=0 // pred_check
    _
  $region11: #{plp_forward.1} parent=0 // pred_check_branch
    %16 = sbr.rel (0) target = $region13
  $region12: #{plp_forward.1} parent=0 // pred_region
    _
  $region13: #{plp_forward.1} parent=0 // pred_fallthru
    _
  // Predicated region
  $region14: #{plp_forward.1} parent=0 // pred_check
    _
  $region15: #{plp_forward.1} parent=0 // pred_check_branch
    %18 = sbr.rel (0) target = $region17
  $region16: #{plp_forward.1} parent=0 // pred_region
    _
  $region17: #{plp_forward.1} parent=0 // pred_fallthru
    _
  // Predicated region
  $region18: #{plp_forward.1} parent=0 // pred_check
    _
  $region19: #{plp_forward.1} parent=0 // pred_check_branch
    %20 = sbr.rel (0) target = $region21
  $region20: #{plp_forward.1} parent=0 // pred_region
    _
  $region21: #{plp_forward.1} parent=0 // pred_fallthru
    _
  // Predicated region
  $region22: #{plp_forward.1} parent=0 // pred_check
    _
  $region23: #{plp_forward.1} parent=0 // pred_check_branch
    %22 = sbr.rel (0) target = $region25
  $region24: #{plp_forward.1} parent=0 // pred_region
    _
  $region25: #{plp_forward.1} parent=0 // pred_fallthru
    _
  %v23 = vld [vmem:[%s1] sm:$0xff]
  %v24 = vld [vmem:[%s1 + $0x8] sm:$0xff]
  %v25 = vld [vmem:[%s1 + $0x10] sm:$0xff]
  %v26 = vld [vmem:[%s1 + $0x18] sm:$0xff]
  %v27 = vld [vmem:[%s1 + $0x20] sm:$0xff]
  %v28 = vld [vmem:[%s1 + $0x28] sm:$0xff]
  %v29 = vld [vmem:[%s1 + $0x30] sm:$0xff]
  %v30 = vld [vmem:[%s1 + $0x38] sm:$0xff]
  %v31 = vld [vmem:[%s1 + $0x40] sm:$0xff]
  %v32 = vld [vmem:[%s1 + $0x48] sm:$0xff]
  %v33 = vld [vmem:[%s1 + $0x50] sm:$0xff]
  %v34 = vld [vmem:[%s1 + $0x58] sm:$0xff]
  %v35 = vld [vmem:[%s1 + $0x60] sm:$0xff]
  %v36 = vld [vmem:[%s1 + $0x68] sm:$0xff]
  %v37 = vld [vmem:[%s1 + $0x70] sm:$0xff]
  %v38 = vld [vmem:[%s1 + $0x78] sm:$0xff]
  %v39 = vld [vmem:[%s1 + $0x80] sm:$0xff]
  %v40 = vld [vmem:[%s1 + $0x88] sm:$0xff]
  %v41 = vld [vmem:[%s1 + $0x90] sm:$0xff]
  %v42 = vld [vmem:[%s1 + $0x98] sm:$0xff]
  %v43 = vld [vmem:[%s1 + $0xa0] sm:$0xff]
  %v44 = vld [vmem:[%s1 + $0xa8] sm:$0xff]
  %v45 = vld [vmem:[%s1 + $0xb0] sm:$0xff]
  %v46 = vld [vmem:[%s1 + $0xb8] sm:$0xff]
  %v47 = vld [vmem:[%s1 + $0xc0] sm:$0xff]
  %v48 = vld [vmem:[%s1 + $0xc8] sm:$0xff]
  %v49 = vld [vmem:[%s1 + $0xd0] sm:$0xff]
  %v50 = vld [vmem:[%s1 + $0xd8] sm:$0xff]
  %v51 = vld [vmem:[%s1 + $0xe0] sm:$0xff]
  %v52 = vld [vmem:[%s1 + $0xe8] sm:$0xff]
  %v53 = vld [vmem:[%s1 + $0xf0] sm:$0xff]
  %v54 = vld [vmem:[%s1 + $0xf8] sm:$0xff]
  %v55 = vld [vmem:[%s1 + $0x100] sm:$0xff]
  %v56 = vld [vmem:[%s1 + $0x108] sm:$0xff]
  %v57 = vld [vmem:[%s1 + $0x110] sm:$0xff]
  %v58 = vld [vmem:[%s1 + $0x118] sm:$0xff]
  %v59 = vld [vmem:[%s1 + $0x120] sm:$0xff]
  %v60 = vld [vmem:[%s1 + $0x128] sm:$0xff]
  %v61 = vld [vmem:[%s1 + $0x130] sm:$0xff]
  %v62 = vld [vmem:[%s1 + $0x138] sm:$0xff]
  %v63 = vld [vmem:[%s1 + $0x140] sm:$0xff]
  %v64 = vld [vmem:[%s1 + $0x148] sm:$0xff]
  %v65 = vld [vmem:[%s1 + $0x150] sm:$0xff]
  %v66 = vld [vmem:[%s1 + $0x158] sm:$0xff]
  %v67 = vld [vmem:[%s1 + $0x160] sm:$0xff]
  %v68 = vld [vmem:[%s1 + $0x168] sm:$0xff]
  %v69 = vld [vmem:[%s1 + $0x170] sm:$0xff]
  %v70 = vld [vmem:[%s1 + $0x178] sm:$0xff]
  %v71 = vld [vmem:[%s1 + $0x180] sm:$0xff]
  %v72 = vld [vmem:[%s1 + $0x188] sm:$0xff]
  %v73 = vld [vmem:[%s1 + $0x190] sm:$0xff]
  %v74 = vld [vmem:[%s1 + $0x198] sm:$0xff]
  %v75 = vld [vmem:[%s1 + $0x1a0] sm:$0xff]
  %v76 = vld [vmem:[%s1 + $0x1a8] sm:$0xff]
  %v77 = vld [vmem:[%s1 + $0x1b0] sm:$0xff]
  %v78 = vld [vmem:[%s1 + $0x1b8] sm:$0xff]
  %v79 = vld [vmem:[%s1 + $0x1c0] sm:$0xff]
  %v80 = vld [vmem:[%s1 + $0x1c8] sm:$0xff]
  %v81 = vld [vmem:[%s1 + $0x1d0] sm:$0xff]
  %v82 = vld [vmem:[%s1 + $0x1d8] sm:$0xff]
  %v83 = vld [vmem:[%s1 + $0x1e0] sm:$0xff]
  %v84 = vld [vmem:[%s1 + $0x1e8] sm:$0xff]
  %v85 = vld [vmem:[%s1 + $0x1f0] sm:$0xff]
  %v86 = vld [vmem:[%s1 + $0x1f8] sm:$0xff]
  %v87 = vld [vmem:[%s2] sm:$0xff]
  %v88 = vld [vmem:[%s2 + $0x8] sm:$0xff]
  %v89 = vld [vmem:[%s3] sm:$0x1]
  %v91 = vlaneseq
  %v92 = vshrl.u32 %v91, 7
  %v93 = vsub.s32 0, %v92
  %v94 = vrot.slane %v89, %v93
  %vm96 = vcmask 130048
  %v98 = vsel %vm96, %v23, 0
  %v101 = vsel %vm96, %v24, 0
  %v104 = vsel %vm96, %v25, 0
  %v107 = vsel %vm96, %v26, 0
  %v110 = vsel %vm96, %v27, 0
  %v113 = vsel %vm96, %v28, 0
  %v116 = vsel %vm96, %v29, 0
  %v119 = vsel %vm96, %v30, 0
  %v122 = vsel %vm96, %v31, 0
  %v125 = vsel %vm96, %v32, 0
  %v128 = vsel %vm96, %v33, 0
  %v131 = vsel %vm96, %v34, 0
  %v134 = vsel %vm96, %v35, 0
  %v137 = vsel %vm96, %v36, 0
  %v140 = vsel %vm96, %v37, 0
  %v143 = vsel %vm96, %v38, 0
  %v146 = vsel %vm96, %v39, 0
  %v149 = vsel %vm96, %v40, 0
  %v152 = vsel %vm96, %v41, 0
  %v155 = vsel %vm96, %v42, 0
  %v158 = vsel %vm96, %v43, 0
  %v161 = vsel %vm96, %v44, 0
  %v164 = vsel %vm96, %v45, 0
  %v167 = vsel %vm96, %v46, 0
  %v170 = vsel %vm96, %v47, 0
  %v173 = vsel %vm96, %v48, 0
  %v176 = vsel %vm96, %v49, 0
  %v179 = vsel %vm96, %v50, 0
  %v182 = vsel %vm96, %v51, 0
  %v185 = vsel %vm96, %v52, 0
  %v188 = vsel %vm96, %v53, 0
  %v191 = vsel %vm96, %v54, 0
  %v194 = vsel %vm96, %v55, 0
  %v197 = vsel %vm96, %v56, 0
  %v200 = vsel %vm96, %v57, 0
  %v203 = vsel %vm96, %v58, 0
  %v206 = vsel %vm96, %v59, 0
  %v209 = vsel %vm96, %v60, 0
  %v212 = vsel %vm96, %v61, 0
  %v215 = vsel %vm96, %v62, 0
  %v218 = vsel %vm96, %v63, 0
  %v221 = vsel %vm96, %v64, 0
  %v224 = vsel %vm96, %v65, 0
  %v227 = vsel %vm96, %v66, 0
  %v230 = vsel %vm96, %v67, 0
  %v233 = vsel %vm96, %v68, 0
  %v236 = vsel %vm96, %v69, 0
  %v239 = vsel %vm96, %v70, 0
  %v242 = vsel %vm96, %v71, 0
  %v245 = vsel %vm96, %v72, 0
  %v248 = vsel %vm96, %v73, 0
  %v251 = vsel %vm96, %v74, 0
  %v254 = vsel %vm96, %v75, 0
  %v257 = vsel %vm96, %v76, 0
  %v260 = vsel %vm96, %v77, 0
  %v263 = vsel %vm96, %v78, 0
  %v266 = vsel %vm96, %v79, 0
  %v269 = vsel %vm96, %v80, 0
  %v272 = vsel %vm96, %v81, 0
  %v275 = vsel %vm96, %v82, 0
  %v278 = vsel %vm96, %v83, 0
  %v281 = vsel %vm96, %v84, 0
  %v284 = vsel %vm96, %v85, 0
  %v287 = vsel %vm96, %v86, 0
  %289 = vmatprep.subr.mxu0 0.0
  %290 = vmatpush1.msra.mxu0 %v87
  %291 = vmatprep.subr.mxu0 0.0
  %292 = vmatpush1.msra.mxu0 %v88
  %293 = vmatprep.subr.mxu0 0.0
  %294 = vmatpush1.msra.mxu0 0.0
  %295 = vmatprep.subr.mxu0 0.0
  %296 = vmatpush1.msra.mxu0 0.0
  %297 = vmatprep.subr.mxu0 0.0
  %298 = vmatpush1.msra.mxu0 0.0
  %299 = vmatprep.subr.mxu0 0.0
  %300 = vmatpush1.msra.mxu0 0.0
  %301 = vmatprep.subr.mxu0 0.0
  %302 = vmatpush1.msra.mxu0 0.0
  %303 = vmatprep.subr.mxu0 0.0
  %304 = vmatpush1.msra.mxu0 0.0
  %305 = vmatprep.subr.mxu0 0.0
  %306 = vmatpush1.msra.mxu0 0.0
  %307 = vmatprep.subr.mxu0 0.0
  %308 = vmatpush1.msra.mxu0 0.0
  %309 = vmatprep.subr.mxu0 0.0
  %310 = vmatpush1.msra.mxu0 0.0
  %311 = vmatprep.subr.mxu0 0.0
  %312 = vmatpush1.msra.mxu0 0.0
  %313 = vmatprep.subr.mxu0 0.0
  %314 = vmatpush1.msra.mxu0 0.0
  %315 = vmatprep.subr.mxu0 0.0
  %316 = vmatpush1.msra.mxu0 0.0
  %317 = vmatprep.subr.mxu0 0.0
  %318 = vmatpush1.msra.mxu0 0.0
  %319 = vmatprep.subr.mxu0 0.0
  %320 = vmatpush1.msra.mxu0 0.0
  %321 = vmatprep.subr.mxu0 0.0
  %322 = vmatpush1.msra.mxu0 0.0
  %323 = vmatprep.subr.mxu0 0.0
  %324 = vmatpush1.msra.mxu0 0.0
  %325 = vmatprep.subr.mxu0 0.0
  %326 = vmatpush1.msra.mxu0 0.0
  %327 = vmatprep.subr.mxu0 0.0
  %328 = vmatpush1.msra.mxu0 0.0
  %329 = vmatprep.subr.mxu0 0.0
  %330 = vmatpush1.msra.mxu0 0.0
  %331 = vmatprep.subr.mxu0 0.0
  %332 = vmatpush1.msra.mxu0 0.0
  %333 = vmatprep.subr.mxu0 0.0
  %334 = vmatpush1.msra.mxu0 0.0
  %335 = vmatprep.subr.mxu0 0.0
  %336 = vmatpush1.msra.mxu0 0.0
  %337 = vmatprep.subr.mxu0 0.0
  %338 = vmatpush1.msra.mxu0 0.0
  %339 = vmatprep.subr.mxu0 0.0
  %340 = vmatpush1.msra.mxu0 0.0
  %341 = vmatprep.subr.mxu0 0.0
  %342 = vmatpush1.msra.mxu0 0.0
  %343 = vmatprep.subr.mxu0 0.0
  %344 = vmatpush1.msra.mxu0 0.0
  %345 = vmatprep.subr.mxu0 0.0
  %346 = vmatpush1.msra.mxu0 0.0
  %347 = vmatprep.subr.mxu0 0.0
  %348 = vmatpush1.msra.mxu0 0.0
  %349 = vmatprep.subr.mxu0 0.0
  %350 = vmatpush1.msra.mxu0 0.0
  %351 = vmatprep.subr.mxu0 0.0
  %352 = vmatpush1.msra.mxu0 0.0
  %353 = vmatprep.mubr.f32.mxu0 0.0
  %354 = vmatmul.mubr.f32.gmra.mrb[0].mxu0 %v98
  %v355 = vpop.f32.mrb[0].mxu0
  %v356 = vadd.f32 %v94, %v355
  %v357 = vpop.f32.mrb[0].mxu0
  %358 = vmatprep.mubr.f32.mxu0 0.0
  %359 = vmatmul.mubr.f32.gmra.mrb[0].mxu0 %v101
  %v360 = vpop.f32.mrb[0].mxu0
  %v361 = vadd.f32 %v94, %v360
  %v362 = vpop.f32.mrb[0].mxu0
  %363 = vmatprep.mubr.f32.mxu0 0.0
  %364 = vmatmul.mubr.f32.gmra.mrb[0].mxu0 %v104
  %v365 = vpop.f32.mrb[0].mxu0
  %v366 = vadd.f32 %v94, %v365
  %v367 = vpop.f32.mrb[0].mxu0
  %368 = vmatprep.mubr.f32.mxu0 0.0
  %369 = vmatmul.mubr.f32.gmra.mrb[0].mxu0 %v107
  %v370 = vpop.f32.mrb[0].mxu0
  %v371 = vadd.f32 %v94, %v370
  %v372 = vpop.f32.mrb[0].mxu0
  %373 = vmatprep.mubr.f32.mxu0 0.0
  %374 = vmatmul.mubr.f32.gmra.mrb[0].mxu0 %v110
  %v375 = vpop.f32.mrb[0].mxu0
  %v376 = vadd.f32 %v94, %v375
  %v377 = vpop.f32.mrb[0].mxu0
  %378 = vmatprep.mubr.f32.mxu0 0.0
  %379 = vmatmul.mubr.f32.gmra.mrb[0].mxu0 %v113
  %v380 = vpop.f32.mrb[0].mxu0
  %v381 = vadd.f32 %v94, %v380
  %v382 = vpop.f32.mrb[0].mxu0
  %383 = vmatprep.mubr.f32.mxu0 0.0
  %384 = vmatmul.mubr.f32.gmra.mrb[0].mxu0 %v116
  %v385 = vpop.f32.mrb[0].mxu0
  %v386 = vadd.f32 %v94, %v385
  %v387 = vpop.f32.mrb[0].mxu0
  %388 = vmatprep.mubr.f32.mxu0 0.0
  %389 = vmatmul.mubr.f32.gmra.mrb[0].mxu0 %v119
  %v390 = vpop.f32.mrb[0].mxu0
  %v391 = vadd.f32 %v94, %v390
  %v392 = vpop.f32.mrb[0].mxu0
  %393 = vmatprep.mubr.f32.mxu0 0.0
  %394 = vmatmul.mubr.f32.gmra.mrb[0].mxu0 %v122
  %v395 = vpop.f32.mrb[0].mxu0
  %v396 = vadd.f32 %v94, %v395
  %v397 = vpop.f32.mrb[0].mxu0
  %398 = vmatprep.mubr.f32.mxu0 0.0
  %399 = vmatmul.mubr.f32.gmra.mrb[0].mxu0 %v125
  %v400 = vpop.f32.mrb[0].mxu0
  %v401 = vadd.f32 %v94, %v400
  %v402 = vpop.f32.mrb[0].mxu0
  %403 = vmatprep.mubr.f32.mxu0 0.0
  %404 = vmatmul.mubr.f32.gmra.mrb[0].mxu0 %v128
  %v405 = vpop.f32.mrb[0].mxu0
  %v406 = vadd.f32 %v94, %v405
  %v407 = vpop.f32.mrb[0].mxu0
  %408 = vmatprep.mubr.f32.mxu0 0.0
  %409 = vmatmul.mubr.f32.gmra.mrb[0].mxu0 %v131
  %v410 = vpop.f32.mrb[0].mxu0
  %v411 = vadd.f32 %v94, %v410
  %v412 = vpop.f32.mrb[0].mxu0
  %413 = vmatprep.mubr.f32.mxu0 0.0
  %414 = vmatmul.mubr.f32.gmra.mrb[0].mxu0 %v134
  %v415 = vpop.f32.mrb[0].mxu0
  %v416 = vadd.f32 %v94, %v415
  %v417 = vpop.f32.mrb[0].mxu0
  %418 = vmatprep.mubr.f32.mxu0 0.0
  %419 = vmatmul.mubr.f32.gmra.mrb[0].mxu0 %v137
  %v420 = vpop.f32.mrb[0].mxu0
  %v421 = vadd.f32 %v94, %v420
  %v422 = vpop.f32.mrb[0].mxu0
  %423 = vmatprep.mubr.f32.mxu0 0.0
  %424 = vmatmul.mubr.f32.gmra.mrb[0].mxu0 %v140
  %v425 = vpop.f32.mrb[0].mxu0
  %v426 = vadd.f32 %v94, %v425
  %v427 = vpop.f32.mrb[0].mxu0
  %428 = vmatprep.mubr.f32.mxu0 0.0
  %429 = vmatmul.mubr.f32.gmra.mrb[0].mxu0 %v143
  %v430 = vpop.f32.mrb[0].mxu0
  %v431 = vadd.f32 %v94, %v430
  %v432 = vpop.f32.mrb[0].mxu0
  %433 = vmatprep.mubr.f32.mxu0 0.0
  %434 = vmatmul.mubr.f32.gmra.mrb[0].mxu0 %v146
  %v435 = vpop.f32.mrb[0].mxu0
  %v436 = vadd.f32 %v94, %v435
  %v437 = vpop.f32.mrb[0].mxu0
  %438 = vmatprep.mubr.f32.mxu0 0.0
  %439 = vmatmul.mubr.f32.gmra.mrb[0].mxu0 %v149
  %v440 = vpop.f32.mrb[0].mxu0
  %v441 = vadd.f32 %v94, %v440
  %v442 = vpop.f32.mrb[0].mxu0
  %443 = vmatprep.mubr.f32.mxu0 0.0
  %444 = vmatmul.mubr.f32.gmra.mrb[0].mxu0 %v152
  %v445 = vpop.f32.mrb[0].mxu0
  %v446 = vadd.f32 %v94, %v445
  %v447 = vpop.f32.mrb[0].mxu0
  %448 = vmatprep.mubr.f32.mxu0 0.0
  %449 = vmatmul.mubr.f32.gmra.mrb[0].mxu0 %v155
  %v450 = vpop.f32.mrb[0].mxu0
  %v451 = vadd.f32 %v94, %v450
  %v452 = vpop.f32.mrb[0].mxu0
  %453 = vmatprep.mubr.f32.mxu0 0.0
  %454 = vmatmul.mubr.f32.gmra.mrb[0].mxu0 %v158
  %v455 = vpop.f32.mrb[0].mxu0
  %v456 = vadd.f32 %v94, %v455
  %v457 = vpop.f32.mrb[0].mxu0
  %458 = vmatprep.mubr.f32.mxu0 0.0
  %459 = vmatmul.mubr.f32.gmra.mrb[0].mxu0 %v161
  %v460 = vpop.f32.mrb[0].mxu0
  %v461 = vadd.f32 %v94, %v460
  %v462 = vpop.f32.mrb[0].mxu0
  %463 = vmatprep.mubr.f32.mxu0 0.0
  %464 = vmatmul.mubr.f32.gmra.mrb[0].mxu0 %v164
  %v465 = vpop.f32.mrb[0].mxu0
  %v466 = vadd.f32 %v94, %v465
  %v467 = vpop.f32.mrb[0].mxu0
  %468 = vmatprep.mubr.f32.mxu0 0.0
  %469 = vmatmul.mubr.f32.gmra.mrb[0].mxu0 %v167
  %v470 = vpop.f32.mrb[0].mxu0
  %v471 = vadd.f32 %v94, %v470
  %v472 = vpop.f32.mrb[0].mxu0
  %473 = vmatprep.mubr.f32.mxu0 0.0
  %474 = vmatmul.mubr.f32.gmra.mrb[0].mxu0 %v170
  %v475 = vpop.f32.mrb[0].mxu0
  %v476 = vadd.f32 %v94, %v475
  %v477 = vpop.f32.mrb[0].mxu0
  %478 = vmatprep.mubr.f32.mxu0 0.0
  %479 = vmatmul.mubr.f32.gmra.mrb[0].mxu0 %v173
  %v480 = vpop.f32.mrb[0].mxu0
  %v481 = vadd.f32 %v94, %v480
  %v482 = vpop.f32.mrb[0].mxu0
  %483 = vmatprep.mubr.f32.mxu0 0.0
  %484 = vmatmul.mubr.f32.gmra.mrb[0].mxu0 %v176
  %v485 = vpop.f32.mrb[0].mxu0
  %v486 = vadd.f32 %v94, %v485
  %v487 = vpop.f32.mrb[0].mxu0
  %488 = vmatprep.mubr.f32.mxu0 0.0
  %489 = vmatmul.mubr.f32.gmra.mrb[0].mxu0 %v179
  %v490 = vpop.f32.mrb[0].mxu0
  %v491 = vadd.f32 %v94, %v490
  %v492 = vpop.f32.mrb[0].mxu0
  %493 = vmatprep.mubr.f32.mxu0 0.0
  %494 = vmatmul.mubr.f32.gmra.mrb[0].mxu0 %v182
  %v495 = vpop.f32.mrb[0].mxu0
  %v496 = vadd.f32 %v94, %v495
  %v497 = vpop.f32.mrb[0].mxu0
  %498 = vmatprep.mubr.f32.mxu0 0.0
  %499 = vmatmul.mubr.f32.gmra.mrb[0].mxu0 %v185
  %v500 = vpop.f32.mrb[0].mxu0
  %v501 = vadd.f32 %v94, %v500
  %v502 = vpop.f32.mrb[0].mxu0
  %503 = vmatprep.mubr.f32.mxu0 0.0
  %504 = vmatmul.mubr.f32.gmra.mrb[0].mxu0 %v188
  %v505 = vpop.f32.mrb[0].mxu0
  %v506 = vadd.f32 %v94, %v505
  %v507 = vpop.f32.mrb[0].mxu0
  %508 = vmatprep.mubr.f32.mxu0 0.0
  %509 = vmatmul.mubr.f32.gmra.mrb[0].mxu0 %v191
  %v510 = vpop.f32.mrb[0].mxu0
  %v511 = vadd.f32 %v94, %v510
  %v512 = vpop.f32.mrb[0].mxu0
  %513 = vmatprep.mubr.f32.mxu0 0.0
  %514 = vmatmul.mubr.f32.gmra.mrb[0].mxu0 %v194
  %v515 = vpop.f32.mrb[0].mxu0
  %v516 = vadd.f32 %v94, %v515
  %v517 = vpop.f32.mrb[0].mxu0
  %518 = vmatprep.mubr.f32.mxu0 0.0
  %519 = vmatmul.mubr.f32.gmra.mrb[0].mxu0 %v197
  %v520 = vpop.f32.mrb[0].mxu0
  %v521 = vadd.f32 %v94, %v520
  %v522 = vpop.f32.mrb[0].mxu0
  %523 = vmatprep.mubr.f32.mxu0 0.0
  %524 = vmatmul.mubr.f32.gmra.mrb[0].mxu0 %v200
  %v525 = vpop.f32.mrb[0].mxu0
  %v526 = vadd.f32 %v94, %v525
  %v527 = vpop.f32.mrb[0].mxu0
  %528 = vmatprep.mubr.f32.mxu0 0.0
  %529 = vmatmul.mubr.f32.gmra.mrb[0].mxu0 %v203
  %v530 = vpop.f32.mrb[0].mxu0
  %v531 = vadd.f32 %v94, %v530
  %v532 = vpop.f32.mrb[0].mxu0
  %533 = vmatprep.mubr.f32.mxu0 0.0
  %534 = vmatmul.mubr.f32.gmra.mrb[0].mxu0 %v206
  %v535 = vpop.f32.mrb[0].mxu0
  %v536 = vadd.f32 %v94, %v535
  %v537 = vpop.f32.mrb[0].mxu0
  %538 = vmatprep.mubr.f32.mxu0 0.0
  %539 = vmatmul.mubr.f32.gmra.mrb[0].mxu0 %v209
  %v540 = vpop.f32.mrb[0].mxu0
  %v541 = vadd.f32 %v94, %v540
  %v542 = vpop.f32.mrb[0].mxu0
  %543 = vmatprep.mubr.f32.mxu0 0.0
  %544 = vmatmul.mubr.f32.gmra.mrb[0].mxu0 %v212
  %v545 = vpop.f32.mrb[0].mxu0
  %v546 = vadd.f32 %v94, %v545
  %v547 = vpop.f32.mrb[0].mxu0
  %548 = vmatprep.mubr.f32.mxu0 0.0
  %549 = vmatmul.mubr.f32.gmra.mrb[0].mxu0 %v215
  %v550 = vpop.f32.mrb[0].mxu0
  %v551 = vadd.f32 %v94, %v550
  %v552 = vpop.f32.mrb[0].mxu0
  %553 = vmatprep.mubr.f32.mxu0 0.0
  %554 = vmatmul.mubr.f32.gmra.mrb[0].mxu0 %v218
  %v555 = vpop.f32.mrb[0].mxu0
  %v556 = vadd.f32 %v94, %v555
  %v557 = vpop.f32.mrb[0].mxu0
  %558 = vmatprep.mubr.f32.mxu0 0.0
  %559 = vmatmul.mubr.f32.gmra.mrb[0].mxu0 %v221
  %v560 = vpop.f32.mrb[0].mxu0
  %v561 = vadd.f32 %v94, %v560
  %v562 = vpop.f32.mrb[0].mxu0
  %563 = vmatprep.mubr.f32.mxu0 0.0
  %564 = vmatmul.mubr.f32.gmra.mrb[0].mxu0 %v224
  %v565 = vpop.f32.mrb[0].mxu0
  %v566 = vadd.f32 %v94, %v565
  %v567 = vpop.f32.mrb[0].mxu0
  %568 = vmatprep.mubr.f32.mxu0 0.0
  %569 = vmatmul.mubr.f32.gmra.mrb[0].mxu0 %v227
  %v570 = vpop.f32.mrb[0].mxu0
  %v571 = vadd.f32 %v94, %v570
  %v572 = vpop.f32.mrb[0].mxu0
  %573 = vmatprep.mubr.f32.mxu0 0.0
  %574 = vmatmul.mubr.f32.gmra.mrb[0].mxu0 %v230
  %v575 = vpop.f32.mrb[0].mxu0
  %v576 = vadd.f32 %v94, %v575
  %v577 = vpop.f32.mrb[0].mxu0
  %578 = vmatprep.mubr.f32.mxu0 0.0
  %579 = vmatmul.mubr.f32.gmra.mrb[0].mxu0 %v233
  %v580 = vpop.f32.mrb[0].mxu0
  %v581 = vadd.f32 %v94, %v580
  %v582 = vpop.f32.mrb[0].mxu0
  %583 = vmatprep.mubr.f32.mxu0 0.0
  %584 = vmatmul.mubr.f32.gmra.mrb[0].mxu0 %v236
  %v585 = vpop.f32.mrb[0].mxu0
  %v586 = vadd.f32 %v94, %v585
  %v587 = vpop.f32.mrb[0].mxu0
  %588 = vmatprep.mubr.f32.mxu0 0.0
  %589 = vmatmul.mubr.f32.gmra.mrb[0].mxu0 %v239
  %v590 = vpop.f32.mrb[0].mxu0
  %v591 = vadd.f32 %v94, %v590
  %v592 = vpop.f32.mrb[0].mxu0
  %593 = vmatprep.mubr.f32.mxu0 0.0
  %594 = vmatmul.mubr.f32.gmra.mrb[0].mxu0 %v242
  %v595 = vpop.f32.mrb[0].mxu0
  %v596 = vadd.f32 %v94, %v595
  %v597 = vpop.f32.mrb[0].mxu0
  %598 = vmatprep.mubr.f32.mxu0 0.0
  %599 = vmatmul.mubr.f32.gmra.mrb[0].mxu0 %v245
  %v600 = vpop.f32.mrb[0].mxu0
  %v601 = vadd.f32 %v94, %v600
  %v602 = vpop.f32.mrb[0].mxu0
  %603 = vmatprep.mubr.f32.mxu0 0.0
  %604 = vmatmul.mubr.f32.gmra.mrb[0].mxu0 %v248
  %v605 = vpop.f32.mrb[0].mxu0
  %v606 = vadd.f32 %v94, %v605
  %v607 = vpop.f32.mrb[0].mxu0
  %608 = vmatprep.mubr.f32.mxu0 0.0
  %609 = vmatmul.mubr.f32.gmra.mrb[0].mxu0 %v251
  %v610 = vpop.f32.mrb[0].mxu0
  %v611 = vadd.f32 %v94, %v610
  %v612 = vpop.f32.mrb[0].mxu0
  %613 = vmatprep.mubr.f32.mxu0 0.0
  %614 = vmatmul.mubr.f32.gmra.mrb[0].mxu0 %v254
  %v615 = vpop.f32.mrb[0].mxu0
  %v616 = vadd.f32 %v94, %v615
  %v617 = vpop.f32.mrb[0].mxu0
  %618 = vmatprep.mubr.f32.mxu0 0.0
  %619 = vmatmul.mubr.f32.gmra.mrb[0].mxu0 %v257
  %v620 = vpop.f32.mrb[0].mxu0
  %v621 = vadd.f32 %v94, %v620
  %v622 = vpop.f32.mrb[0].mxu0
  %623 = vmatprep.mubr.f32.mxu0 0.0
  %624 = vmatmul.mubr.f32.gmra.mrb[0].mxu0 %v260
  %v625 = vpop.f32.mrb[0].mxu0
  %v626 = vadd.f32 %v94, %v625
  %v627 = vpop.f32.mrb[0].mxu0
  %628 = vmatprep.mubr.f32.mxu0 0.0
  %629 = vmatmul.mubr.f32.gmra.mrb[0].mxu0 %v263
  %v630 = vpop.f32.mrb[0].mxu0
  %v631 = vadd.f32 %v94, %v630
  %v632 = vpop.f32.mrb[0].mxu0
  %633 = vmatprep.mubr.f32.mxu0 0.0
  %634 = vmatmul.mubr.f32.gmra.mrb[0].mxu0 %v266
  %v635 = vpop.f32.mrb[0].mxu0
  %v636 = vadd.f32 %v94, %v635
  %v637 = vpop.f32.mrb[0].mxu0
  %638 = vmatprep.mubr.f32.mxu0 0.0
  %639 = vmatmul.mubr.f32.gmra.mrb[0].mxu0 %v269
  %v640 = vpop.f32.mrb[0].mxu0
  %v641 = vadd.f32 %v94, %v640
  %v642 = vpop.f32.mrb[0].mxu0
  %643 = vmatprep.mubr.f32.mxu0 0.0
  %644 = vmatmul.mubr.f32.gmra.mrb[0].mxu0 %v272
  %v645 = vpop.f32.mrb[0].mxu0
  %v646 = vadd.f32 %v94, %v645
  %v647 = vpop.f32.mrb[0].mxu0
  %648 = vmatprep.mubr.f32.mxu0 0.0
  %649 = vmatmul.mubr.f32.gmra.mrb[0].mxu0 %v275
  %v650 = vpop.f32.mrb[0].mxu0
  %v651 = vadd.f32 %v94, %v650
  %v652 = vpop.f32.mrb[0].mxu0
  %653 = vmatprep.mubr.f32.mxu0 0.0
  %654 = vmatmul.mubr.f32.gmra.mrb[0].mxu0 %v278
  %v655 = vpop.f32.mrb[0].mxu0
  %v656 = vadd.f32 %v94, %v655
  %v657 = vpop.f32.mrb[0].mxu0
  %658 = vmatprep.mubr.f32.mxu0 0.0
  %659 = vmatmul.mubr.f32.gmra.mrb[0].mxu0 %v281
  %v660 = vpop.f32.mrb[0].mxu0
  %v661 = vadd.f32 %v94, %v660
  %v662 = vpop.f32.mrb[0].mxu0
  %663 = vmatprep.mubr.f32.mxu0 0.0
  %664 = vmatmul.mubr.f32.gmra.mrb[0].mxu0 %v284
  %v665 = vpop.f32.mrb[0].mxu0
  %v666 = vadd.f32 %v94, %v665
  %v667 = vpop.f32.mrb[0].mxu0
  %668 = vmatprep.mubr.f32.mxu0 0.0
  %669 = vmatmul.mubr.f32.gmra.mrb[0].mxu0 %v287
  %v670 = vpop.f32.mrb[0].mxu0
  %v671 = vadd.f32 %v94, %v670
  %v672 = vpop.f32.mrb[0].mxu0
  %673 = vdwg.mxu0
  %v674 = vmax.f32 %v356, 0.0
  %v675 = vmax.f32 %v361, 0.0
  %v676 = vmax.f32 %v366, 0.0
  %v677 = vmax.f32 %v371, 0.0
  %v678 = vmax.f32 %v376, 0.0
  %v679 = vmax.f32 %v381, 0.0
  %v680 = vmax.f32 %v386, 0.0
  %v681 = vmax.f32 %v391, 0.0
  %v682 = vmax.f32 %v396, 0.0
  %v683 = vmax.f32 %v401, 0.0
  %v684 = vmax.f32 %v406, 0.0
  %v685 = vmax.f32 %v411, 0.0
  %v686 = vmax.f32 %v416, 0.0
  %v687 = vmax.f32 %v421, 0.0
  %v688 = vmax.f32 %v426, 0.0
  %v689 = vmax.f32 %v431, 0.0
  %v690 = vmax.f32 %v436, 0.0
  %v691 = vmax.f32 %v441, 0.0
  %v692 = vmax.f32 %v446, 0.0
  %v693 = vmax.f32 %v451, 0.0
  %v694 = vmax.f32 %v456, 0.0
  %v695 = vmax.f32 %v461, 0.0
  %v696 = vmax.f32 %v466, 0.0
  %v697 = vmax.f32 %v471, 0.0
  %v698 = vmax.f32 %v476, 0.0
  %v699 = vmax.f32 %v481, 0.0
  %v700 = vmax.f32 %v486, 0.0
  %v701 = vmax.f32 %v491, 0.0
  %v702 = vmax.f32 %v496, 0.0
  %v703 = vmax.f32 %v501, 0.0
  %v704 = vmax.f32 %v506, 0.0
  %v705 = vmax.f32 %v511, 0.0
  %v706 = vmax.f32 %v516, 0.0
  %v707 = vmax.f32 %v521, 0.0
  %v708 = vmax.f32 %v526, 0.0
  %v709 = vmax.f32 %v531, 0.0
  %v710 = vmax.f32 %v536, 0.0
  %v711 = vmax.f32 %v541, 0.0
  %v712 = vmax.f32 %v546, 0.0
  %v713 = vmax.f32 %v551, 0.0
  %v714 = vmax.f32 %v556, 0.0
  %v715 = vmax.f32 %v561, 0.0
  %v716 = vmax.f32 %v566, 0.0
  %v717 = vmax.f32 %v571, 0.0
  %v718 = vmax.f32 %v576, 0.0
  %v719 = vmax.f32 %v581, 0.0
  %v720 = vmax.f32 %v586, 0.0
  %v721 = vmax.f32 %v591, 0.0
  %v722 = vmax.f32 %v596, 0.0
  %v723 = vmax.f32 %v601, 0.0
  %v724 = vmax.f32 %v606, 0.0
  %v725 = vmax.f32 %v611, 0.0
  %v726 = vmax.f32 %v616, 0.0
  %v727 = vmax.f32 %v621, 0.0
  %v728 = vmax.f32 %v626, 0.0
  %v729 = vmax.f32 %v631, 0.0
  %v730 = vmax.f32 %v636, 0.0
  %v731 = vmax.f32 %v641, 0.0
  %v732 = vmax.f32 %v646, 0.0
  %v733 = vmax.f32 %v651, 0.0
  %v734 = vmax.f32 %v656, 0.0
  %v735 = vmax.f32 %v661, 0.0
  %v736 = vmax.f32 %v666, 0.0
  %v737 = vmax.f32 %v671, 0.0
  %v738 = vld [vmem:[%s4] sm:$0xff]
  %v739 = vld [vmem:[%s4 + $0x8] sm:$0xff]
  %v740 = vld [vmem:[%s4 + $0x10] sm:$0xff]
  %v741 = vld [vmem:[%s4 + $0x18] sm:$0xff]
  %v742 = vld [vmem:[%s5] sm:$0x1]
  %v744 = vlaneseq
  %v745 = vshrl.u32 %v744, 7
  %v746 = vsub.s32 0, %v745
  %v747 = vrot.slane %v742, %v746
  %vm749 = vcmask 261120
  %v751 = vsel %vm749, %v674, 0
  %v754 = vsel %vm749, %v675, 0
  %v757 = vsel %vm749, %v676, 0
  %v760 = vsel %vm749, %v677, 0
  %v763 = vsel %vm749, %v678, 0
  %v766 = vsel %vm749, %v679, 0
  %v769 = vsel %vm749, %v680, 0
  %v772 = vsel %vm749, %v681, 0
  %v775 = vsel %vm749, %v682, 0
  %v778 = vsel %vm749, %v683, 0
  %v781 = vsel %vm749, %v684, 0
  %v784 = vsel %vm749, %v685, 0
  %v787 = vsel %vm749, %v686, 0
  %v790 = vsel %vm749, %v687, 0
  %v793 = vsel %vm749, %v688, 0
  %v796 = vsel %vm749, %v689, 0
  %v799 = vsel %vm749, %v690, 0
  %v802 = vsel %vm749, %v691, 0
  %v805 = vsel %vm749, %v692, 0
  %v808 = vsel %vm749, %v693, 0
  %v811 = vsel %vm749, %v694, 0
  %v814 = vsel %vm749, %v695, 0
  %v817 = vsel %vm749, %v696, 0
  %v820 = vsel %vm749, %v697, 0
  %v823 = vsel %vm749, %v698, 0
  %v826 = vsel %vm749, %v699, 0
  %v829 = vsel %vm749, %v700, 0
  %v832 = vsel %vm749, %v701, 0
  %v835 = vsel %vm749, %v702, 0
  %v838 = vsel %vm749, %v703, 0
  %v841 = vsel %vm749, %v704, 0
  %v844 = vsel %vm749, %v705, 0
  %v847 = vsel %vm749, %v706, 0
  %v850 = vsel %vm749, %v707, 0
  %v853 = vsel %vm749, %v708, 0
  %v856 = vsel %vm749, %v709, 0
  %v859 = vsel %vm749, %v710, 0
  %v862 = vsel %vm749, %v711, 0
  %v865 = vsel %vm749, %v712, 0
  %v868 = vsel %vm749, %v713, 0
  %v871 = vsel %vm749, %v714, 0
  %v874 = vsel %vm749, %v715, 0
  %v877 = vsel %vm749, %v716, 0
  %v880 = vsel %vm749, %v717, 0
  %v883 = vsel %vm749, %v718, 0
  %v886 = vsel %vm749, %v719, 0
  %v889 = vsel %vm749, %v720, 0
  %v892 = vsel %vm749, %v721, 0
  %v895 = vsel %vm749, %v722, 0
  %v898 = vsel %vm749, %v723, 0
  %v901 = vsel %vm749, %v724, 0
  %v904 = vsel %vm749, %v725, 0
  %v907 = vsel %vm749, %v726, 0
  %v910 = vsel %vm749, %v727, 0
  %v913 = vsel %vm749, %v728, 0
  %v916 = vsel %vm749, %v729, 0
  %v919 = vsel %vm749, %v730, 0
  %v922 = vsel %vm749, %v731, 0
  %v925 = vsel %vm749, %v732, 0
  %v928 = vsel %vm749, %v733, 0
  %v931 = vsel %vm749, %v734, 0
  %v934 = vsel %vm749, %v735, 0
  %v937 = vsel %vm749, %v736, 0
  %v940 = vsel %vm749, %v737, 0
  %942 = vmatprep.subr.mxu0 0.0
  %943 = vmatpush1.msra.mxu0 %v738
  %944 = vmatprep.subr.mxu0 0.0
  %945 = vmatpush1.msra.mxu0 %v739
  %946 = vmatprep.subr.mxu0 0.0
  %947 = vmatpush1.msra.mxu0 %v740
  %948 = vmatprep.subr.mxu0 0.0
  %949 = vmatpush1.msra.mxu0 %v741
  %950 = vmatprep.subr.mxu0 0.0
  %951 = vmatpush1.msra.mxu0 0.0
  %952 = vmatprep.subr.mxu0 0.0
  %953 = vmatpush1.msra.mxu0 0.0
  %954 = vmatprep.subr.mxu0 0.0
  %955 = vmatpush1.msra.mxu0 0.0
  %956 = vmatprep.subr.mxu0 0.0
  %957 = vmatpush1.msra.mxu0 0.0
  %958 = vmatprep.subr.mxu0 0.0
  %959 = vmatpush1.msra.mxu0 0.0
  %960 = vmatprep.subr.mxu0 0.0
  %961 = vmatpush1.msra.mxu0 0.0
  %962 = vmatprep.subr.mxu0 0.0
  %963 = vmatpush1.msra.mxu0 0.0
  %964 = vmatprep.subr.mxu0 0.0
  %965 = vmatpush1.msra.mxu0 0.0
  %966 = vmatprep.subr.mxu0 0.0
  %967 = vmatpush1.msra.mxu0 0.0
  %968 = vmatprep.subr.mxu0 0.0
  %969 = vmatpush1.msra.mxu0 0.0
  %970 = vmatprep.subr.mxu0 0.0
  %971 = vmatpush1.msra.mxu0 0.0
  %972 = vmatprep.subr.mxu0 0.0
  %973 = vmatpush1.msra.mxu0 0.0
  %974 = vmatprep.subr.mxu0 0.0
  %975 = vmatpush1.msra.mxu0 0.0
  %976 = vmatprep.subr.mxu0 0.0
  %977 = vmatpush1.msra.mxu0 0.0
  %978 = vmatprep.subr.mxu0 0.0
  %979 = vmatpush1.msra.mxu0 0.0
  %980 = vmatprep.subr.mxu0 0.0
  %981 = vmatpush1.msra.mxu0 0.0
  %982 = vmatprep.subr.mxu0 0.0
  %983 = vmatpush1.msra.mxu0 0.0
  %984 = vmatprep.subr.mxu0 0.0
  %985 = vmatpush1.msra.mxu0 0.0
  %986 = vmatprep.subr.mxu0 0.0
  %987 = vmatpush1.msra.mxu0 0.0
  %988 = vmatprep.subr.mxu0 0.0
  %989 = vmatpush1.msra.mxu0 0.0
  %990 = vmatprep.subr.mxu0 0.0
  %991 = vmatpush1.msra.mxu0 0.0
  %992 = vmatprep.subr.mxu0 0.0
  %993 = vmatpush1.msra.mxu0 0.0
  %994 = vmatprep.subr.mxu0 0.0
  %995 = vmatpush1.msra.mxu0 0.0
  %996 = vmatprep.subr.mxu0 0.0
  %997 = vmatpush1.msra.mxu0 0.0
  %998 = vmatprep.subr.mxu0 0.0
  %999 = vmatpush1.msra.mxu0 0.0
  %1000 = vmatprep.subr.mxu0 0.0
  %1001 = vmatpush1.msra.mxu0 0.0
  %1002 = vmatprep.subr.mxu0 0.0
  %1003 = vmatpush1.msra.mxu0 0.0
  %1004 = vmatprep.subr.mxu0 0.0
  %1005 = vmatpush1.msra.mxu0 0.0
  %1006 = vmatprep.mubr.f32.mxu0 0.0
  %1007 = vmatmul.mubr.f32.gmra.mrb[0].mxu0 %v751
  %v1008 = vpop.f32.mrb[0].mxu0
  %v1009 = vadd.f32 %v747, %v1008
  %v1010 = vpop.f32.mrb[0].mxu0
  %1011 = vmatprep.mubr.f32.mxu0 0.0
  %1012 = vmatmul.mubr.f32.gmra.mrb[0].mxu0 %v754
  %v1013 = vpop.f32.mrb[0].mxu0
  %v1014 = vadd.f32 %v747, %v1013
  %v1015 = vpop.f32.mrb[0].mxu0
  %1016 = vmatprep.mubr.f32.mxu0 0.0
  %1017 = vmatmul.mubr.f32.gmra.mrb[0].mxu0 %v757
  %v1018 = vpop.f32.mrb[0].mxu0
  %v1019 = vadd.f32 %v747, %v1018
  %v1020 = vpop.f32.mrb[0].mxu0
  %1021 = vmatprep.mubr.f32.mxu0 0.0
  %1022 = vmatmul.mubr.f32.gmra.mrb[0].mxu0 %v760
  %v1023 = vpop.f32.mrb[0].mxu0
  %v1024 = vadd.f32 %v747, %v1023
  %v1025 = vpop.f32.mrb[0].mxu0
  %1026 = vmatprep.mubr.f32.mxu0 0.0
  %1027 = vmatmul.mubr.f32.gmra.mrb[0].mxu0 %v763
  %v1028 = vpop.f32.mrb[0].mxu0
  %v1029 = vadd.f32 %v747, %v1028
  %v1030 = vpop.f32.mrb[0].mxu0
  %1031 = vmatprep.mubr.f32.mxu0 0.0
  %1032 = vmatmul.mubr.f32.gmra.mrb[0].mxu0 %v766
  %v1033 = vpop.f32.mrb[0].mxu0
  %v1034 = vadd.f32 %v747, %v1033
  %v1035 = vpop.f32.mrb[0].mxu0
  %1036 = vmatprep.mubr.f32.mxu0 0.0
  %1037 = vmatmul.mubr.f32.gmra.mrb[0].mxu0 %v769
  %v1038 = vpop.f32.mrb[0].mxu0
  %v1039 = vadd.f32 %v747, %v1038
  %v1040 = vpop.f32.mrb[0].mxu0
  %1041 = vmatprep.mubr.f32.mxu0 0.0
  %1042 = vmatmul.mubr.f32.gmra.mrb[0].mxu0 %v772
  %v1043 = vpop.f32.mrb[0].mxu0
  %v1044 = vadd.f32 %v747, %v1043
  %v1045 = vpop.f32.mrb[0].mxu0
  %1046 = vmatprep.mubr.f32.mxu0 0.0
  %1047 = vmatmul.mubr.f32.gmra.mrb[0].mxu0 %v775
  %v1048 = vpop.f32.mrb[0].mxu0
  %v1049 = vadd.f32 %v747, %v1048
  %v1050 = vpop.f32.mrb[0].mxu0
  %1051 = vmatprep.mubr.f32.mxu0 0.0
  %1052 = vmatmul.mubr.f32.gmra.mrb[0].mxu0 %v778
  %v1053 = vpop.f32.mrb[0].mxu0
  %v1054 = vadd.f32 %v747, %v1053
  %v1055 = vpop.f32.mrb[0].mxu0
  %1056 = vmatprep.mubr.f32.mxu0 0.0
  %1057 = vmatmul.mubr.f32.gmra.mrb[0].mxu0 %v781
  %v1058 = vpop.f32.mrb[0].mxu0
  %v1059 = vadd.f32 %v747, %v1058
  %v1060 = vpop.f32.mrb[0].mxu0
  %1061 = vmatprep.mubr.f32.mxu0 0.0
  %1062 = vmatmul.mubr.f32.gmra.mrb[0].mxu0 %v784
  %v1063 = vpop.f32.mrb[0].mxu0
  %v1064 = vadd.f32 %v747, %v1063
  %v1065 = vpop.f32.mrb[0].mxu0
  %1066 = vmatprep.mubr.f32.mxu0 0.0
  %1067 = vmatmul.mubr.f32.gmra.mrb[0].mxu0 %v787
  %v1068 = vpop.f32.mrb[0].mxu0
  %v1069 = vadd.f32 %v747, %v1068
  %v1070 = vpop.f32.mrb[0].mxu0
  %1071 = vmatprep.mubr.f32.mxu0 0.0
  %1072 = vmatmul.mubr.f32.gmra.mrb[0].mxu0 %v790
  %v1073 = vpop.f32.mrb[0].mxu0
  %v1074 = vadd.f32 %v747, %v1073
  %v1075 = vpop.f32.mrb[0].mxu0
  %1076 = vmatprep.mubr.f32.mxu0 0.0
  %1077 = vmatmul.mubr.f32.gmra.mrb[0].mxu0 %v793
  %v1078 = vpop.f32.mrb[0].mxu0
  %v1079 = vadd.f32 %v747, %v1078
  %v1080 = vpop.f32.mrb[0].mxu0
  %1081 = vmatprep.mubr.f32.mxu0 0.0
  %1082 = vmatmul.mubr.f32.gmra.mrb[0].mxu0 %v796
  %v1083 = vpop.f32.mrb[0].mxu0
  %v1084 = vadd.f32 %v747, %v1083
  %v1085 = vpop.f32.mrb[0].mxu0
  %1086 = vmatprep.mubr.f32.mxu0 0.0
  %1087 = vmatmul.mubr.f32.gmra.mrb[0].mxu0 %v799
  %v1088 = vpop.f32.mrb[0].mxu0
  %v1089 = vadd.f32 %v747, %v1088
  %v1090 = vpop.f32.mrb[0].mxu0
  %1091 = vmatprep.mubr.f32.mxu0 0.0
  %1092 = vmatmul.mubr.f32.gmra.mrb[0].mxu0 %v802
  %v1093 = vpop.f32.mrb[0].mxu0
  %v1094 = vadd.f32 %v747, %v1093
  %v1095 = vpop.f32.mrb[0].mxu0
  %1096 = vmatprep.mubr.f32.mxu0 0.0
  %1097 = vmatmul.mubr.f32.gmra.mrb[0].mxu0 %v805
  %v1098 = vpop.f32.mrb[0].mxu0
  %v1099 = vadd.f32 %v747, %v1098
  %v1100 = vpop.f32.mrb[0].mxu0
  %1101 = vmatprep.mubr.f32.mxu0 0.0
  %1102 = vmatmul.mubr.f32.gmra.mrb[0].mxu0 %v808
  %v1103 = vpop.f32.mrb[0].mxu0
  %v1104 = vadd.f32 %v747, %v1103
  %v1105 = vpop.f32.mrb[0].mxu0
  %1106 = vmatprep.mubr.f32.mxu0 0.0
  %1107 = vmatmul.mubr.f32.gmra.mrb[0].mxu0 %v811
  %v1108 = vpop.f32.mrb[0].mxu0
  %v1109 = vadd.f32 %v747, %v1108
  %v1110 = vpop.f32.mrb[0].mxu0
  %1111 = vmatprep.mubr.f32.mxu0 0.0
  %1112 = vmatmul.mubr.f32.gmra.mrb[0].mxu0 %v814
  %v1113 = vpop.f32.mrb[0].mxu0
  %v1114 = vadd.f32 %v747, %v1113
  %v1115 = vpop.f32.mrb[0].mxu0
  %1116 = vmatprep.mubr.f32.mxu0 0.0
  %1117 = vmatmul.mubr.f32.gmra.mrb[0].mxu0 %v817
  %v1118 = vpop.f32.mrb[0].mxu0
  %v1119 = vadd.f32 %v747, %v1118
  %v1120 = vpop.f32.mrb[0].mxu0
  %1121 = vmatprep.mubr.f32.mxu0 0.0
  %1122 = vmatmul.mubr.f32.gmra.mrb[0].mxu0 %v820
  %v1123 = vpop.f32.mrb[0].mxu0
  %v1124 = vadd.f32 %v747, %v1123
  %v1125 = vpop.f32.mrb[0].mxu0
  %1126 = vmatprep.mubr.f32.mxu0 0.0
  %1127 = vmatmul.mubr.f32.gmra.mrb[0].mxu0 %v823
  %v1128 = vpop.f32.mrb[0].mxu0
  %v1129 = vadd.f32 %v747, %v1128
  %v1130 = vpop.f32.mrb[0].mxu0
  %1131 = vmatprep.mubr.f32.mxu0 0.0
  %1132 = vmatmul.mubr.f32.gmra.mrb[0].mxu0 %v826
  %v1133 = vpop.f32.mrb[0].mxu0
  %v1134 = vadd.f32 %v747, %v1133
  %v1135 = vpop.f32.mrb[0].mxu0
  %1136 = vmatprep.mubr.f32.mxu0 0.0
  %1137 = vmatmul.mubr.f32.gmra.mrb[0].mxu0 %v829
  %v1138 = vpop.f32.mrb[0].mxu0
  %v1139 = vadd.f32 %v747, %v1138
  %v1140 = vpop.f32.mrb[0].mxu0
  %1141 = vmatprep.mubr.f32.mxu0 0.0
  %1142 = vmatmul.mubr.f32.gmra.mrb[0].mxu0 %v832
  %v1143 = vpop.f32.mrb[0].mxu0
  %v1144 = vadd.f32 %v747, %v1143
  %v1145 = vpop.f32.mrb[0].mxu0
  %1146 = vmatprep.mubr.f32.mxu0 0.0
  %1147 = vmatmul.mubr.f32.gmra.mrb[0].mxu0 %v835
  %v1148 = vpop.f32.mrb[0].mxu0
  %v1149 = vadd.f32 %v747, %v1148
  %v1150 = vpop.f32.mrb[0].mxu0
  %1151 = vmatprep.mubr.f32.mxu0 0.0
  %1152 = vmatmul.mubr.f32.gmra.mrb[0].mxu0 %v838
  %v1153 = vpop.f32.mrb[0].mxu0
  %v1154 = vadd.f32 %v747, %v1153
  %v1155 = vpop.f32.mrb[0].mxu0
  %1156 = vmatprep.mubr.f32.mxu0 0.0
  %1157 = vmatmul.mubr.f32.gmra.mrb[0].mxu0 %v841
  %v1158 = vpop.f32.mrb[0].mxu0
  %v1159 = vadd.f32 %v747, %v1158
  %v1160 = vpop.f32.mrb[0].mxu0
  %1161 = vmatprep.mubr.f32.mxu0 0.0
  %1162 = vmatmul.mubr.f32.gmra.mrb[0].mxu0 %v844
  %v1163 = vpop.f32.mrb[0].mxu0
  %v1164 = vadd.f32 %v747, %v1163
  %v1165 = vpop.f32.mrb[0].mxu0
  %1166 = vmatprep.mubr.f32.mxu0 0.0
  %1167 = vmatmul.mubr.f32.gmra.mrb[0].mxu0 %v847
  %v1168 = vpop.f32.mrb[0].mxu0
  %v1169 = vadd.f32 %v747, %v1168
  %v1170 = vpop.f32.mrb[0].mxu0
  %1171 = vmatprep.mubr.f32.mxu0 0.0
  %1172 = vmatmul.mubr.f32.gmra.mrb[0].mxu0 %v850
  %v1173 = vpop.f32.mrb[0].mxu0
  %v1174 = vadd.f32 %v747, %v1173
  %v1175 = vpop.f32.mrb[0].mxu0
  %1176 = vmatprep.mubr.f32.mxu0 0.0
  %1177 = vmatmul.mubr.f32.gmra.mrb[0].mxu0 %v853
  %v1178 = vpop.f32.mrb[0].mxu0
  %v1179 = vadd.f32 %v747, %v1178
  %v1180 = vpop.f32.mrb[0].mxu0
  %1181 = vmatprep.mubr.f32.mxu0 0.0
  %1182 = vmatmul.mubr.f32.gmra.mrb[0].mxu0 %v856
  %v1183 = vpop.f32.mrb[0].mxu0
  %v1184 = vadd.f32 %v747, %v1183
  %v1185 = vpop.f32.mrb[0].mxu0
  %1186 = vmatprep.mubr.f32.mxu0 0.0
  %1187 = vmatmul.mubr.f32.gmra.mrb[0].mxu0 %v859
  %v1188 = vpop.f32.mrb[0].mxu0
  %v1189 = vadd.f32 %v747, %v1188
  %v1190 = vpop.f32.mrb[0].mxu0
  %1191 = vmatprep.mubr.f32.mxu0 0.0
  %1192 = vmatmul.mubr.f32.gmra.mrb[0].mxu0 %v862
  %v1193 = vpop.f32.mrb[0].mxu0
  %v1194 = vadd.f32 %v747, %v1193
  %v1195 = vpop.f32.mrb[0].mxu0
  %1196 = vmatprep.mubr.f32.mxu0 0.0
  %1197 = vmatmul.mubr.f32.gmra.mrb[0].mxu0 %v865
  %v1198 = vpop.f32.mrb[0].mxu0
  %v1199 = vadd.f32 %v747, %v1198
  %v1200 = vpop.f32.mrb[0].mxu0
  %1201 = vmatprep.mubr.f32.mxu0 0.0
  %1202 = vmatmul.mubr.f32.gmra.mrb[0].mxu0 %v868
  %v1203 = vpop.f32.mrb[0].mxu0
  %v1204 = vadd.f32 %v747, %v1203
  %v1205 = vpop.f32.mrb[0].mxu0
  %1206 = vmatprep.mubr.f32.mxu0 0.0
  %1207 = vmatmul.mubr.f32.gmra.mrb[0].mxu0 %v871
  %v1208 = vpop.f32.mrb[0].mxu0
  %v1209 = vadd.f32 %v747, %v1208
  %v1210 = vpop.f32.mrb[0].mxu0
  %1211 = vmatprep.mubr.f32.mxu0 0.0
  %1212 = vmatmul.mubr.f32.gmra.mrb[0].mxu0 %v874
  %v1213 = vpop.f32.mrb[0].mxu0
  %v1214 = vadd.f32 %v747, %v1213
  %v1215 = vpop.f32.mrb[0].mxu0
  %1216 = vmatprep.mubr.f32.mxu0 0.0
  %1217 = vmatmul.mubr.f32.gmra.mrb[0].mxu0 %v877
  %v1218 = vpop.f32.mrb[0].mxu0
  %v1219 = vadd.f32 %v747, %v1218
  %v1220 = vpop.f32.mrb[0].mxu0
  %1221 = vmatprep.mubr.f32.mxu0 0.0
  %1222 = vmatmul.mubr.f32.gmra.mrb[0].mxu0 %v880
  %v1223 = vpop.f32.mrb[0].mxu0
  %v1224 = vadd.f32 %v747, %v1223
  %v1225 = vpop.f32.mrb[0].mxu0
  %1226 = vmatprep.mubr.f32.mxu0 0.0
  %1227 = vmatmul.mubr.f32.gmra.mrb[0].mxu0 %v883
  %v1228 = vpop.f32.mrb[0].mxu0
  %v1229 = vadd.f32 %v747, %v1228
  %v1230 = vpop.f32.mrb[0].mxu0
  %1231 = vmatprep.mubr.f32.mxu0 0.0
  %1232 = vmatmul.mubr.f32.gmra.mrb[0].mxu0 %v886
  %v1233 = vpop.f32.mrb[0].mxu0
  %v1234 = vadd.f32 %v747, %v1233
  %v1235 = vpop.f32.mrb[0].mxu0
  %1236 = vmatprep.mubr.f32.mxu0 0.0
  %1237 = vmatmul.mubr.f32.gmra.mrb[0].mxu0 %v889
  %v1238 = vpop.f32.mrb[0].mxu0
  %v1239 = vadd.f32 %v747, %v1238
  %v1240 = vpop.f32.mrb[0].mxu0
  %1241 = vmatprep.mubr.f32.mxu0 0.0
  %1242 = vmatmul.mubr.f32.gmra.mrb[0].mxu0 %v892
  %v1243 = vpop.f32.mrb[0].mxu0
  %v1244 = vadd.f32 %v747, %v1243
  %v1245 = vpop.f32.mrb[0].mxu0
  %1246 = vmatprep.mubr.f32.mxu0 0.0
  %1247 = vmatmul.mubr.f32.gmra.mrb[0].mxu0 %v895
  %v1248 = vpop.f32.mrb[0].mxu0
  %v1249 = vadd.f32 %v747, %v1248
  %v1250 = vpop.f32.mrb[0].mxu0
  %1251 = vmatprep.mubr.f32.mxu0 0.0
  %1252 = vmatmul.mubr.f32.gmra.mrb[0].mxu0 %v898
  %v1253 = vpop.f32.mrb[0].mxu0
  %v1254 = vadd.f32 %v747, %v1253
  %v1255 = vpop.f32.mrb[0].mxu0
  %1256 = vmatprep.mubr.f32.mxu0 0.0
  %1257 = vmatmul.mubr.f32.gmra.mrb[0].mxu0 %v901
  %v1258 = vpop.f32.mrb[0].mxu0
  %v1259 = vadd.f32 %v747, %v1258
  %v1260 = vpop.f32.mrb[0].mxu0
  %1261 = vmatprep.mubr.f32.mxu0 0.0
  %1262 = vmatmul.mubr.f32.gmra.mrb[0].mxu0 %v904
  %v1263 = vpop.f32.mrb[0].mxu0
  %v1264 = vadd.f32 %v747, %v1263
  %v1265 = vpop.f32.mrb[0].mxu0
  %1266 = vmatprep.mubr.f32.mxu0 0.0
  %1267 = vmatmul.mubr.f32.gmra.mrb[0].mxu0 %v907
  %v1268 = vpop.f32.mrb[0].mxu0
  %v1269 = vadd.f32 %v747, %v1268
  %v1270 = vpop.f32.mrb[0].mxu0
  %1271 = vmatprep.mubr.f32.mxu0 0.0
  %1272 = vmatmul.mubr.f32.gmra.mrb[0].mxu0 %v910
  %v1273 = vpop.f32.mrb[0].mxu0
  %v1274 = vadd.f32 %v747, %v1273
  %v1275 = vpop.f32.mrb[0].mxu0
  %1276 = vmatprep.mubr.f32.mxu0 0.0
  %1277 = vmatmul.mubr.f32.gmra.mrb[0].mxu0 %v913
  %v1278 = vpop.f32.mrb[0].mxu0
  %v1279 = vadd.f32 %v747, %v1278
  %v1280 = vpop.f32.mrb[0].mxu0
  %1281 = vmatprep.mubr.f32.mxu0 0.0
  %1282 = vmatmul.mubr.f32.gmra.mrb[0].mxu0 %v916
  %v1283 = vpop.f32.mrb[0].mxu0
  %v1284 = vadd.f32 %v747, %v1283
  %v1285 = vpop.f32.mrb[0].mxu0
  %1286 = vmatprep.mubr.f32.mxu0 0.0
  %1287 = vmatmul.mubr.f32.gmra.mrb[0].mxu0 %v919
  %v1288 = vpop.f32.mrb[0].mxu0
  %v1289 = vadd.f32 %v747, %v1288
  %v1290 = vpop.f32.mrb[0].mxu0
  %1291 = vmatprep.mubr.f32.mxu0 0.0
  %1292 = vmatmul.mubr.f32.gmra.mrb[0].mxu0 %v922
  %v1293 = vpop.f32.mrb[0].mxu0
  %v1294 = vadd.f32 %v747, %v1293
  %v1295 = vpop.f32.mrb[0].mxu0
  %1296 = vmatprep.mubr.f32.mxu0 0.0
  %1297 = vmatmul.mubr.f32.gmra.mrb[0].mxu0 %v925
  %v1298 = vpop.f32.mrb[0].mxu0
  %v1299 = vadd.f32 %v747, %v1298
  %v1300 = vpop.f32.mrb[0].mxu0
  %1301 = vmatprep.mubr.f32.mxu0 0.0
  %1302 = vmatmul.mubr.f32.gmra.mrb[0].mxu0 %v928
  %v1303 = vpop.f32.mrb[0].mxu0
  %v1304 = vadd.f32 %v747, %v1303
  %v1305 = vpop.f32.mrb[0].mxu0
  %1306 = vmatprep.mubr.f32.mxu0 0.0
  %1307 = vmatmul.mubr.f32.gmra.mrb[0].mxu0 %v931
  %v1308 = vpop.f32.mrb[0].mxu0
  %v1309 = vadd.f32 %v747, %v1308
  %v1310 = vpop.f32.mrb[0].mxu0
  %1311 = vmatprep.mubr.f32.mxu0 0.0
  %1312 = vmatmul.mubr.f32.gmra.mrb[0].mxu0 %v934
  %v1313 = vpop.f32.mrb[0].mxu0
  %v1314 = vadd.f32 %v747, %v1313
  %v1315 = vpop.f32.mrb[0].mxu0
  %1316 = vmatprep.mubr.f32.mxu0 0.0
  %1317 = vmatmul.mubr.f32.gmra.mrb[0].mxu0 %v937
  %v1318 = vpop.f32.mrb[0].mxu0
  %v1319 = vadd.f32 %v747, %v1318
  %v1320 = vpop.f32.mrb[0].mxu0
  %1321 = vmatprep.mubr.f32.mxu0 0.0
  %1322 = vmatmul.mubr.f32.gmra.mrb[0].mxu0 %v940
  %v1323 = vpop.f32.mrb[0].mxu0
  %v1324 = vadd.f32 %v747, %v1323
  %v1325 = vpop.f32.mrb[0].mxu0
  %1326 = vdwg.mxu0
  %1327 = vmax.xlane.f32.xlu0 %v1009
  %v1328 = vpop.xlane.xlu0 %1327
  %1329 = vmax.xlane.f32.xlu0 %v1014
  %v1330 = vpop.xlane.xlu0 %1329
  %1331 = vmax.xlane.f32.xlu0 %v1019
  %v1332 = vpop.xlane.xlu0 %1331
  %1333 = vmax.xlane.f32.xlu0 %v1024
  %v1334 = vpop.xlane.xlu0 %1333
  %1335 = vmax.xlane.f32.xlu0 %v1029
  %v1336 = vpop.xlane.xlu0 %1335
  %1337 = vmax.xlane.f32.xlu0 %v1034
  %v1338 = vpop.xlane.xlu0 %1337
  %1339 = vmax.xlane.f32.xlu0 %v1039
  %v1340 = vpop.xlane.xlu0 %1339
  %1341 = vmax.xlane.f32.xlu0 %v1044
  %v1342 = vpop.xlane.xlu0 %1341
  %1343 = vmax.xlane.f32.xlu0 %v1049
  %v1344 = vpop.xlane.xlu0 %1343
  %1345 = vmax.xlane.f32.xlu0 %v1054
  %v1346 = vpop.xlane.xlu0 %1345
  %1347 = vmax.xlane.f32.xlu0 %v1059
  %v1348 = vpop.xlane.xlu0 %1347
  %1349 = vmax.xlane.f32.xlu0 %v1064
  %v1350 = vpop.xlane.xlu0 %1349
  %1351 = vmax.xlane.f32.xlu0 %v1069
  %v1352 = vpop.xlane.xlu0 %1351
  %1353 = vmax.xlane.f32.xlu0 %v1074
  %v1354 = vpop.xlane.xlu0 %1353
  %1355 = vmax.xlane.f32.xlu0 %v1079
  %v1356 = vpop.xlane.xlu0 %1355
  %1357 = vmax.xlane.f32.xlu0 %v1084
  %v1358 = vpop.xlane.xlu0 %1357
  %1359 = vmax.xlane.f32.xlu0 %v1089
  %v1360 = vpop.xlane.xlu0 %1359
  %1361 = vmax.xlane.f32.xlu0 %v1094
  %v1362 = vpop.xlane.xlu0 %1361
  %1363 = vmax.xlane.f32.xlu0 %v1099
  %v1364 = vpop.xlane.xlu0 %1363
  %1365 = vmax.xlane.f32.xlu0 %v1104
  %v1366 = vpop.xlane.xlu0 %1365
  %1367 = vmax.xlane.f32.xlu0 %v1109
  %v1368 = vpop.xlane.xlu0 %1367
  %1369 = vmax.xlane.f32.xlu0 %v1114
  %v1370 = vpop.xlane.xlu0 %1369
  %1371 = vmax.xlane.f32.xlu0 %v1119
  %v1372 = vpop.xlane.xlu0 %1371
  %1373 = vmax.xlane.f32.xlu0 %v1124
  %v1374 = vpop.xlane.xlu0 %1373
  %1375 = vmax.xlane.f32.xlu0 %v1129
  %v1376 = vpop.xlane.xlu0 %1375
  %1377 = vmax.xlane.f32.xlu0 %v1134
  %v1378 = vpop.xlane.xlu0 %1377
  %1379 = vmax.xlane.f32.xlu0 %v1139
  %v1380 = vpop.xlane.xlu0 %1379
  %1381 = vmax.xlane.f32.xlu0 %v1144
  %v1382 = vpop.xlane.xlu0 %1381
  %1383 = vmax.xlane.f32.xlu0 %v1149
  %v1384 = vpop.xlane.xlu0 %1383
  %1385 = vmax.xlane.f32.xlu0 %v1154
  %v1386 = vpop.xlane.xlu0 %1385
  %1387 = vmax.xlane.f32.xlu0 %v1159
  %v1388 = vpop.xlane.xlu0 %1387
  %1389 = vmax.xlane.f32.xlu0 %v1164
  %v1390 = vpop.xlane.xlu0 %1389
  %1391 = vmax.xlane.f32.xlu0 %v1169
  %v1392 = vpop.xlane.xlu0 %1391
  %1393 = vmax.xlane.f32.xlu0 %v1174
  %v1394 = vpop.xlane.xlu0 %1393
  %1395 = vmax.xlane.f32.xlu0 %v1179
  %v1396 = vpop.xlane.xlu0 %1395
  %1397 = vmax.xlane.f32.xlu0 %v1184
  %v1398 = vpop.xlane.xlu0 %1397
  %1399 = vmax.xlane.f32.xlu0 %v1189
  %v1400 = vpop.xlane.xlu0 %1399
  %1401 = vmax.xlane.f32.xlu0 %v1194
  %v1402 = vpop.xlane.xlu0 %1401
  %1403 = vmax.xlane.f32.xlu0 %v1199
  %v1404 = vpop.xlane.xlu0 %1403
  %1405 = vmax.xlane.f32.xlu0 %v1204
  %v1406 = vpop.xlane.xlu0 %1405
  %1407 = vmax.xlane.f32.xlu0 %v1209
  %v1408 = vpop.xlane.xlu0 %1407
  %1409 = vmax.xlane.f32.xlu0 %v1214
  %v1410 = vpop.xlane.xlu0 %1409
  %1411 = vmax.xlane.f32.xlu0 %v1219
  %v1412 = vpop.xlane.xlu0 %1411
  %1413 = vmax.xlane.f32.xlu0 %v1224
  %v1414 = vpop.xlane.xlu0 %1413
  %1415 = vmax.xlane.f32.xlu0 %v1229
  %v1416 = vpop.xlane.xlu0 %1415
  %1417 = vmax.xlane.f32.xlu0 %v1234
  %v1418 = vpop.xlane.xlu0 %1417
  %1419 = vmax.xlane.f32.xlu0 %v1239
  %v1420 = vpop.xlane.xlu0 %1419
  %1421 = vmax.xlane.f32.xlu0 %v1244
  %v1422 = vpop.xlane.xlu0 %1421
  %1423 = vmax.xlane.f32.xlu0 %v1249
  %v1424 = vpop.xlane.xlu0 %1423
  %1425 = vmax.xlane.f32.xlu0 %v1254
  %v1426 = vpop.xlane.xlu0 %1425
  %1427 = vmax.xlane.f32.xlu0 %v1259
  %v1428 = vpop.xlane.xlu0 %1427
  %1429 = vmax.xlane.f32.xlu0 %v1264
  %v1430 = vpop.xlane.xlu0 %1429
  %1431 = vmax.xlane.f32.xlu0 %v1269
  %v1432 = vpop.xlane.xlu0 %1431
  %1433 = vmax.xlane.f32.xlu0 %v1274
  %v1434 = vpop.xlane.xlu0 %1433
  %1435 = vmax.xlane.f32.xlu0 %v1279
  %v1436 = vpop.xlane.xlu0 %1435
  %1437 = vmax.xlane.f32.xlu0 %v1284
  %v1438 = vpop.xlane.xlu0 %1437
  %1439 = vmax.xlane.f32.xlu0 %v1289
  %v1440 = vpop.xlane.xlu0 %1439
  %1441 = vmax.xlane.f32.xlu0 %v1294
  %v1442 = vpop.xlane.xlu0 %1441
  %1443 = vmax.xlane.f32.xlu0 %v1299
  %v1444 = vpop.xlane.xlu0 %1443
  %1445 = vmax.xlane.f32.xlu0 %v1304
  %v1446 = vpop.xlane.xlu0 %1445
  %1447 = vmax.xlane.f32.xlu0 %v1309
  %v1448 = vpop.xlane.xlu0 %1447
  %1449 = vmax.xlane.f32.xlu0 %v1314
  %v1450 = vpop.xlane.xlu0 %1449
  %1451 = vmax.xlane.f32.xlu0 %v1319
  %v1452 = vpop.xlane.xlu0 %1451
  %1453 = vmax.xlane.f32.xlu0 %v1324
  %v1454 = vpop.xlane.xlu0 %1453
  %v1455 = vsub.f32 %v1009, %v1328
  %v1456 = vsub.f32 %v1014, %v1330
  %v1457 = vsub.f32 %v1019, %v1332
  %v1458 = vsub.f32 %v1024, %v1334
  %v1459 = vsub.f32 %v1029, %v1336
  %v1460 = vsub.f32 %v1034, %v1338
  %v1461 = vsub.f32 %v1039, %v1340
  %v1462 = vsub.f32 %v1044, %v1342
  %v1463 = vsub.f32 %v1049, %v1344
  %v1464 = vsub.f32 %v1054, %v1346
  %v1465 = vsub.f32 %v1059, %v1348
  %v1466 = vsub.f32 %v1064, %v1350
  %v1467 = vsub.f32 %v1069, %v1352
  %v1468 = vsub.f32 %v1074, %v1354
  %v1469 = vsub.f32 %v1079, %v1356
  %v1470 = vsub.f32 %v1084, %v1358
  %v1471 = vsub.f32 %v1089, %v1360
  %v1472 = vsub.f32 %v1094, %v1362
  %v1473 = vsub.f32 %v1099, %v1364
  %v1474 = vsub.f32 %v1104, %v1366
  %v1475 = vsub.f32 %v1109, %v1368
  %v1476 = vsub.f32 %v1114, %v1370
  %v1477 = vsub.f32 %v1119, %v1372
  %v1478 = vsub.f32 %v1124, %v1374
  %v1479 = vsub.f32 %v1129, %v1376
  %v1480 = vsub.f32 %v1134, %v1378
  %v1481 = vsub.f32 %v1139, %v1380
  %v1482 = vsub.f32 %v1144, %v1382
  %v1483 = vsub.f32 %v1149, %v1384
  %v1484 = vsub.f32 %v1154, %v1386
  %v1485 = vsub.f32 %v1159, %v1388
  %v1486 = vsub.f32 %v1164, %v1390
  %v1487 = vsub.f32 %v1169, %v1392
  %v1488 = vsub.f32 %v1174, %v1394
  %v1489 = vsub.f32 %v1179, %v1396
  %v1490 = vsub.f32 %v1184, %v1398
  %v1491 = vsub.f32 %v1189, %v1400
  %v1492 = vsub.f32 %v1194, %v1402
  %v1493 = vsub.f32 %v1199, %v1404
  %v1494 = vsub.f32 %v1204, %v1406
  %v1495 = vsub.f32 %v1209, %v1408
  %v1496 = vsub.f32 %v1214, %v1410
  %v1497 = vsub.f32 %v1219, %v1412
  %v1498 = vsub.f32 %v1224, %v1414
  %v1499 = vsub.f32 %v1229, %v1416
  %v1500 = vsub.f32 %v1234, %v1418
  %v1501 = vsub.f32 %v1239, %v1420
  %v1502 = vsub.f32 %v1244, %v1422
  %v1503 = vsub.f32 %v1249, %v1424
  %v1504 = vsub.f32 %v1254, %v1426
  %v1505 = vsub.f32 %v1259, %v1428
  %v1506 = vsub.f32 %v1264, %v1430
  %v1507 = vsub.f32 %v1269, %v1432
  %v1508 = vsub.f32 %v1274, %v1434
  %v1509 = vsub.f32 %v1279, %v1436
  %v1510 = vsub.f32 %v1284, %v1438
  %v1511 = vsub.f32 %v1289, %v1440
  %v1512 = vsub.f32 %v1294, %v1442
  %v1513 = vsub.f32 %v1299, %v1444
  %v1514 = vsub.f32 %v1304, %v1446
  %v1515 = vsub.f32 %v1309, %v1448
  %v1516 = vsub.f32 %v1314, %v1450
  %v1517 = vsub.f32 %v1319, %v1452
  %v1518 = vsub.f32 %v1324, %v1454
  %v1519 = vmul.f32 %v1455, 1.442695
  %v1520 = vpow.pop %v1519
  %v1521 = vmul.f32 %v1456, 1.442695
  %v1522 = vpow.pop %v1521
  %v1523 = vmul.f32 %v1457, 1.442695
  %v1524 = vpow.pop %v1523
  %v1525 = vmul.f32 %v1458, 1.442695
  %v1526 = vpow.pop %v1525
  %v1527 = vmul.f32 %v1459, 1.442695
  %v1528 = vpow.pop %v1527
  %v1529 = vmul.f32 %v1460, 1.442695
  %v1530 = vpow.pop %v1529
  %v1531 = vmul.f32 %v1461, 1.442695
  %v1532 = vpow.pop %v1531
  %v1533 = vmul.f32 %v1462, 1.442695
  %v1534 = vpow.pop %v1533
  %v1535 = vmul.f32 %v1463, 1.442695
  %v1536 = vpow.pop %v1535
  %v1537 = vmul.f32 %v1464, 1.442695
  %v1538 = vpow.pop %v1537
  %v1539 = vmul.f32 %v1465, 1.442695
  %v1540 = vpow.pop %v1539
  %v1541 = vmul.f32 %v1466, 1.442695
  %v1542 = vpow.pop %v1541
  %v1543 = vmul.f32 %v1467, 1.442695
  %v1544 = vpow.pop %v1543
  %v1545 = vmul.f32 %v1468, 1.442695
  %v1546 = vpow.pop %v1545
  %v1547 = vmul.f32 %v1469, 1.442695
  %v1548 = vpow.pop %v1547
  %v1549 = vmul.f32 %v1470, 1.442695
  %v1550 = vpow.pop %v1549
  %v1551 = vmul.f32 %v1471, 1.442695
  %v1552 = vpow.pop %v1551
  %v1553 = vmul.f32 %v1472, 1.442695
  %v1554 = vpow.pop %v1553
  %v1555 = vmul.f32 %v1473, 1.442695
  %v1556 = vpow.pop %v1555
  %v1557 = vmul.f32 %v1474, 1.442695
  %v1558 = vpow.pop %v1557
  %v1559 = vmul.f32 %v1475, 1.442695
  %v1560 = vpow.pop %v1559
  %v1561 = vmul.f32 %v1476, 1.442695
  %v1562 = vpow.pop %v1561
  %v1563 = vmul.f32 %v1477, 1.442695
  %v1564 = vpow.pop %v1563
  %v1565 = vmul.f32 %v1478, 1.442695
  %v1566 = vpow.pop %v1565
  %v1567 = vmul.f32 %v1479, 1.442695
  %v1568 = vpow.pop %v1567
  %v1569 = vmul.f32 %v1480, 1.442695
  %v1570 = vpow.pop %v1569
  %v1571 = vmul.f32 %v1481, 1.442695
  %v1572 = vpow.pop %v1571
  %v1573 = vmul.f32 %v1482, 1.442695
  %v1574 = vpow.pop %v1573
  %v1575 = vmul.f32 %v1483, 1.442695
  %v1576 = vpow.pop %v1575
  %v1577 = vmul.f32 %v1484, 1.442695
  %v1578 = vpow.pop %v1577
  %v1579 = vmul.f32 %v1485, 1.442695
  %v1580 = vpow.pop %v1579
  %v1581 = vmul.f32 %v1486, 1.442695
  %v1582 = vpow.pop %v1581
  %v1583 = vmul.f32 %v1487, 1.442695
  %v1584 = vpow.pop %v1583
  %v1585 = vmul.f32 %v1488, 1.442695
  %v1586 = vpow.pop %v1585
  %v1587 = vmul.f32 %v1489, 1.442695
  %v1588 = vpow.pop %v1587
  %v1589 = vmul.f32 %v1490, 1.442695
  %v1590 = vpow.pop %v1589
  %v1591 = vmul.f32 %v1491, 1.442695
  %v1592 = vpow.pop %v1591
  %v1593 = vmul.f32 %v1492, 1.442695
  %v1594 = vpow.pop %v1593
  %v1595 = vmul.f32 %v1493, 1.442695
  %v1596 = vpow.pop %v1595
  %v1597 = vmul.f32 %v1494, 1.442695
  %v1598 = vpow.pop %v1597
  %v1599 = vmul.f32 %v1495, 1.442695
  %v1600 = vpow.pop %v1599
  %v1601 = vmul.f32 %v1496, 1.442695
  %v1602 = vpow.pop %v1601
  %v1603 = vmul.f32 %v1497, 1.442695
  %v1604 = vpow.pop %v1603
  %v1605 = vmul.f32 %v1498, 1.442695
  %v1606 = vpow.pop %v1605
  %v1607 = vmul.f32 %v1499, 1.442695
  %v1608 = vpow.pop %v1607
  %v1609 = vmul.f32 %v1500, 1.442695
  %v1610 = vpow.pop %v1609
  %v1611 = vmul.f32 %v1501, 1.442695
  %v1612 = vpow.pop %v1611
  %v1613 = vmul.f32 %v1502, 1.442695
  %v1614 = vpow.pop %v1613
  %v1615 = vmul.f32 %v1503, 1.442695
  %v1616 = vpow.pop %v1615
  %v1617 = vmul.f32 %v1504, 1.442695
  %v1618 = vpow.pop %v1617
  %v1619 = vmul.f32 %v1505, 1.442695
  %v1620 = vpow.pop %v1619
  %v1621 = vmul.f32 %v1506, 1.442695
  %v1622 = vpow.pop %v1621
  %v1623 = vmul.f32 %v1507, 1.442695
  %v1624 = vpow.pop %v1623
  %v1625 = vmul.f32 %v1508, 1.442695
  %v1626 = vpow.pop %v1625
  %v1627 = vmul.f32 %v1509, 1.442695
  %v1628 = vpow.pop %v1627
  %v1629 = vmul.f32 %v1510, 1.442695
  %v1630 = vpow.pop %v1629
  %v1631 = vmul.f32 %v1511, 1.442695
  %v1632 = vpow.pop %v1631
  %v1633 = vmul.f32 %v1512, 1.442695
  %v1634 = vpow.pop %v1633
  %v1635 = vmul.f32 %v1513, 1.442695
  %v1636 = vpow.pop %v1635
  %v1637 = vmul.f32 %v1514, 1.442695
  %v1638 = vpow.pop %v1637
  %v1639 = vmul.f32 %v1515, 1.442695
  %v1640 = vpow.pop %v1639
  %v1641 = vmul.f32 %v1516, 1.442695
  %v1642 = vpow.pop %v1641
  %v1643 = vmul.f32 %v1517, 1.442695
  %v1644 = vpow.pop %v1643
  %v1645 = vmul.f32 %v1518, 1.442695
  %v1646 = vpow.pop %v1645
  %1647 = vadd.xlane.f32.xlu0 %v1520
  %v1648 = vpop.xlane.xlu0 %1647
  %1649 = vadd.xlane.f32.xlu0 %v1522
  %v1650 = vpop.xlane.xlu0 %1649
  %1651 = vadd.xlane.f32.xlu0 %v1524
  %v1652 = vpop.xlane.xlu0 %1651
  %1653 = vadd.xlane.f32.xlu0 %v1526
  %v1654 = vpop.xlane.xlu0 %1653
  %1655 = vadd.xlane.f32.xlu0 %v1528
  %v1656 = vpop.xlane.xlu0 %1655
  %1657 = vadd.xlane.f32.xlu0 %v1530
  %v1658 = vpop.xlane.xlu0 %1657
  %1659 = vadd.xlane.f32.xlu0 %v1532
  %v1660 = vpop.xlane.xlu0 %1659
  %1661 = vadd.xlane.f32.xlu0 %v1534
  %v1662 = vpop.xlane.xlu0 %1661
  %1663 = vadd.xlane.f32.xlu0 %v1536
  %v1664 = vpop.xlane.xlu0 %1663
  %1665 = vadd.xlane.f32.xlu0 %v1538
  %v1666 = vpop.xlane.xlu0 %1665
  %1667 = vadd.xlane.f32.xlu0 %v1540
  %v1668 = vpop.xlane.xlu0 %1667
  %1669 = vadd.xlane.f32.xlu0 %v1542
  %v1670 = vpop.xlane.xlu0 %1669
  %1671 = vadd.xlane.f32.xlu0 %v1544
  %v1672 = vpop.xlane.xlu0 %1671
  %1673 = vadd.xlane.f32.xlu0 %v1546
  %v1674 = vpop.xlane.xlu0 %1673
  %1675 = vadd.xlane.f32.xlu0 %v1548
  %v1676 = vpop.xlane.xlu0 %1675
  %1677 = vadd.xlane.f32.xlu0 %v1550
  %v1678 = vpop.xlane.xlu0 %1677
  %1679 = vadd.xlane.f32.xlu0 %v1552
  %v1680 = vpop.xlane.xlu0 %1679
  %1681 = vadd.xlane.f32.xlu0 %v1554
  %v1682 = vpop.xlane.xlu0 %1681
  %1683 = vadd.xlane.f32.xlu0 %v1556
  %v1684 = vpop.xlane.xlu0 %1683
  %1685 = vadd.xlane.f32.xlu0 %v1558
  %v1686 = vpop.xlane.xlu0 %1685
  %1687 = vadd.xlane.f32.xlu0 %v1560
  %v1688 = vpop.xlane.xlu0 %1687
  %1689 = vadd.xlane.f32.xlu0 %v1562
  %v1690 = vpop.xlane.xlu0 %1689
  %1691 = vadd.xlane.f32.xlu0 %v1564
  %v1692 = vpop.xlane.xlu0 %1691
  %1693 = vadd.xlane.f32.xlu0 %v1566
  %v1694 = vpop.xlane.xlu0 %1693
  %1695 = vadd.xlane.f32.xlu0 %v1568
  %v1696 = vpop.xlane.xlu0 %1695
  %1697 = vadd.xlane.f32.xlu0 %v1570
  %v1698 = vpop.xlane.xlu0 %1697
  %1699 = vadd.xlane.f32.xlu0 %v1572
  %v1700 = vpop.xlane.xlu0 %1699
  %1701 = vadd.xlane.f32.xlu0 %v1574
  %v1702 = vpop.xlane.xlu0 %1701
  %1703 = vadd.xlane.f32.xlu0 %v1576
  %v1704 = vpop.xlane.xlu0 %1703
  %1705 = vadd.xlane.f32.xlu0 %v1578
  %v1706 = vpop.xlane.xlu0 %1705
  %1707 = vadd.xlane.f32.xlu0 %v1580
  %v1708 = vpop.xlane.xlu0 %1707
  %1709 = vadd.xlane.f32.xlu0 %v1582
  %v1710 = vpop.xlane.xlu0 %1709
  %1711 = vadd.xlane.f32.xlu0 %v1584
  %v1712 = vpop.xlane.xlu0 %1711
  %1713 = vadd.xlane.f32.xlu0 %v1586
  %v1714 = vpop.xlane.xlu0 %1713
  %1715 = vadd.xlane.f32.xlu0 %v1588
  %v1716 = vpop.xlane.xlu0 %1715
  %1717 = vadd.xlane.f32.xlu0 %v1590
  %v1718 = vpop.xlane.xlu0 %1717
  %1719 = vadd.xlane.f32.xlu0 %v1592
  %v1720 = vpop.xlane.xlu0 %1719
  %1721 = vadd.xlane.f32.xlu0 %v1594
  %v1722 = vpop.xlane.xlu0 %1721
  %1723 = vadd.xlane.f32.xlu0 %v1596
  %v1724 = vpop.xlane.xlu0 %1723
  %1725 = vadd.xlane.f32.xlu0 %v1598
  %v1726 = vpop.xlane.xlu0 %1725
  %1727 = vadd.xlane.f32.xlu0 %v1600
  %v1728 = vpop.xlane.xlu0 %1727
  %1729 = vadd.xlane.f32.xlu0 %v1602
  %v1730 = vpop.xlane.xlu0 %1729
  %1731 = vadd.xlane.f32.xlu0 %v1604
  %v1732 = vpop.xlane.xlu0 %1731
  %1733 = vadd.xlane.f32.xlu0 %v1606
  %v1734 = vpop.xlane.xlu0 %1733
  %1735 = vadd.xlane.f32.xlu0 %v1608
  %v1736 = vpop.xlane.xlu0 %1735
  %1737 = vadd.xlane.f32.xlu0 %v1610
  %v1738 = vpop.xlane.xlu0 %1737
  %1739 = vadd.xlane.f32.xlu0 %v1612
  %v1740 = vpop.xlane.xlu0 %1739
  %1741 = vadd.xlane.f32.xlu0 %v1614
  %v1742 = vpop.xlane.xlu0 %1741
  %1743 = vadd.xlane.f32.xlu0 %v1616
  %v1744 = vpop.xlane.xlu0 %1743
  %1745 = vadd.xlane.f32.xlu0 %v1618
  %v1746 = vpop.xlane.xlu0 %1745
  %1747 = vadd.xlane.f32.xlu0 %v1620
  %v1748 = vpop.xlane.xlu0 %1747
  %1749 = vadd.xlane.f32.xlu0 %v1622
  %v1750 = vpop.xlane.xlu0 %1749
  %1751 = vadd.xlane.f32.xlu0 %v1624
  %v1752 = vpop.xlane.xlu0 %1751
  %1753 = vadd.xlane.f32.xlu0 %v1626
  %v1754 = vpop.xlane.xlu0 %1753
  %1755 = vadd.xlane.f32.xlu0 %v1628
  %v1756 = vpop.xlane.xlu0 %1755
  %1757 = vadd.xlane.f32.xlu0 %v1630
  %v1758 = vpop.xlane.xlu0 %1757
  %1759 = vadd.xlane.f32.xlu0 %v1632
  %v1760 = vpop.xlane.xlu0 %1759
  %1761 = vadd.xlane.f32.xlu0 %v1634
  %v1762 = vpop.xlane.xlu0 %1761
  %1763 = vadd.xlane.f32.xlu0 %v1636
  %v1764 = vpop.xlane.xlu0 %1763
  %1765 = vadd.xlane.f32.xlu0 %v1638
  %v1766 = vpop.xlane.xlu0 %1765
  %1767 = vadd.xlane.f32.xlu0 %v1640
  %v1768 = vpop.xlane.xlu0 %1767
  %1769 = vadd.xlane.f32.xlu0 %v1642
  %v1770 = vpop.xlane.xlu0 %1769
  %1771 = vadd.xlane.f32.xlu0 %v1644
  %v1772 = vpop.xlane.xlu0 %1771
  %1773 = vadd.xlane.f32.xlu0 %v1646
  %v1774 = vpop.xlane.xlu0 %1773
  %v1775 = vrcp.pop %v1648
  %v1776 = vrcp.pop %v1650
  %v1777 = vrcp.pop %v1652
  %v1778 = vrcp.pop %v1654
  %v1779 = vrcp.pop %v1656
  %v1780 = vrcp.pop %v1658
  %v1781 = vrcp.pop %v1660
  %v1782 = vrcp.pop %v1662
  %v1783 = vrcp.pop %v1664
  %v1784 = vrcp.pop %v1666
  %v1785 = vrcp.pop %v1668
  %v1786 = vrcp.pop %v1670
  %v1787 = vrcp.pop %v1672
  %v1788 = vrcp.pop %v1674
  %v1789 = vrcp.pop %v1676
  %v1790 = vrcp.pop %v1678
  %v1791 = vrcp.pop %v1680
  %v1792 = vrcp.pop %v1682
  %v1793 = vrcp.pop %v1684
  %v1794 = vrcp.pop %v1686
  %v1795 = vrcp.pop %v1688
  %v1796 = vrcp.pop %v1690
  %v1797 = vrcp.pop %v1692
  %v1798 = vrcp.pop %v1694
  %v1799 = vrcp.pop %v1696
  %v1800 = vrcp.pop %v1698
  %v1801 = vrcp.pop %v1700
  %v1802 = vrcp.pop %v1702
  %v1803 = vrcp.pop %v1704
  %v1804 = vrcp.pop %v1706
  %v1805 = vrcp.pop %v1708
  %v1806 = vrcp.pop %v1710
  %v1807 = vrcp.pop %v1712
  %v1808 = vrcp.pop %v1714
  %v1809 = vrcp.pop %v1716
  %v1810 = vrcp.pop %v1718
  %v1811 = vrcp.pop %v1720
  %v1812 = vrcp.pop %v1722
  %v1813 = vrcp.pop %v1724
  %v1814 = vrcp.pop %v1726
  %v1815 = vrcp.pop %v1728
  %v1816 = vrcp.pop %v1730
  %v1817 = vrcp.pop %v1732
  %v1818 = vrcp.pop %v1734
  %v1819 = vrcp.pop %v1736
  %v1820 = vrcp.pop %v1738
  %v1821 = vrcp.pop %v1740
  %v1822 = vrcp.pop %v1742
  %v1823 = vrcp.pop %v1744
  %v1824 = vrcp.pop %v1746
  %v1825 = vrcp.pop %v1748
  %v1826 = vrcp.pop %v1750
  %v1827 = vrcp.pop %v1752
  %v1828 = vrcp.pop %v1754
  %v1829 = vrcp.pop %v1756
  %v1830 = vrcp.pop %v1758
  %v1831 = vrcp.pop %v1760
  %v1832 = vrcp.pop %v1762
  %v1833 = vrcp.pop %v1764
  %v1834 = vrcp.pop %v1766
  %v1835 = vrcp.pop %v1768
  %v1836 = vrcp.pop %v1770
  %v1837 = vrcp.pop %v1772
  %v1838 = vrcp.pop %v1774
  %v1839 = vmul.f32 %v1520, %v1775
  %v1840 = vmul.f32 %v1522, %v1776
  %v1841 = vmul.f32 %v1524, %v1777
  %v1842 = vmul.f32 %v1526, %v1778
  %v1843 = vmul.f32 %v1528, %v1779
  %v1844 = vmul.f32 %v1530, %v1780
  %v1845 = vmul.f32 %v1532, %v1781
  %v1846 = vmul.f32 %v1534, %v1782
  %v1847 = vmul.f32 %v1536, %v1783
  %v1848 = vmul.f32 %v1538, %v1784
  %v1849 = vmul.f32 %v1540, %v1785
  %v1850 = vmul.f32 %v1542, %v1786
  %v1851 = vmul.f32 %v1544, %v1787
  %v1852 = vmul.f32 %v1546, %v1788
  %v1853 = vmul.f32 %v1548, %v1789
  %v1854 = vmul.f32 %v1550, %v1790
  %v1855 = vmul.f32 %v1552, %v1791
  %v1856 = vmul.f32 %v1554, %v1792
  %v1857 = vmul.f32 %v1556, %v1793
  %v1858 = vmul.f32 %v1558, %v1794
  %v1859 = vmul.f32 %v1560, %v1795
  %v1860 = vmul.f32 %v1562, %v1796
  %v1861 = vmul.f32 %v1564, %v1797
  %v1862 = vmul.f32 %v1566, %v1798
  %v1863 = vmul.f32 %v1568, %v1799
  %v1864 = vmul.f32 %v1570, %v1800
  %v1865 = vmul.f32 %v1572, %v1801
  %v1866 = vmul.f32 %v1574, %v1802
  %v1867 = vmul.f32 %v1576, %v1803
  %v1868 = vmul.f32 %v1578, %v1804
  %v1869 = vmul.f32 %v1580, %v1805
  %v1870 = vmul.f32 %v1582, %v1806
  %v1871 = vmul.f32 %v1584, %v1807
  %v1872 = vmul.f32 %v1586, %v1808
  %v1873 = vmul.f32 %v1588, %v1809
  %v1874 = vmul.f32 %v1590, %v1810
  %v1875 = vmul.f32 %v1592, %v1811
  %v1876 = vmul.f32 %v1594, %v1812
  %v1877 = vmul.f32 %v1596, %v1813
  %v1878 = vmul.f32 %v1598, %v1814
  %v1879 = vmul.f32 %v1600, %v1815
  %v1880 = vmul.f32 %v1602, %v1816
  %v1881 = vmul.f32 %v1604, %v1817
  %v1882 = vmul.f32 %v1606, %v1818
  %v1883 = vmul.f32 %v1608, %v1819
  %v1884 = vmul.f32 %v1610, %v1820
  %v1885 = vmul.f32 %v1612, %v1821
  %v1886 = vmul.f32 %v1614, %v1822
  %v1887 = vmul.f32 %v1616, %v1823
  %v1888 = vmul.f32 %v1618, %v1824
  %v1889 = vmul.f32 %v1620, %v1825
  %v1890 = vmul.f32 %v1622, %v1826
  %v1891 = vmul.f32 %v1624, %v1827
  %v1892 = vmul.f32 %v1626, %v1828
  %v1893 = vmul.f32 %v1628, %v1829
  %v1894 = vmul.f32 %v1630, %v1830
  %v1895 = vmul.f32 %v1632, %v1831
  %v1896 = vmul.f32 %v1634, %v1832
  %v1897 = vmul.f32 %v1636, %v1833
  %v1898 = vmul.f32 %v1638, %v1834
  %v1899 = vmul.f32 %v1640, %v1835
  %v1900 = vmul.f32 %v1642, %v1836
  %v1901 = vmul.f32 %v1644, %v1837
  %v1902 = vmul.f32 %v1646, %v1838
  %v1903 = vld [vmem:[%s0] sm:$0xff]
  %v1904 = vld [vmem:[%s0 + $0x8] sm:$0xff]
  %v1905 = vld [vmem:[%s0 + $0x10] sm:$0xff]
  %v1906 = vld [vmem:[%s0 + $0x18] sm:$0xff]
  %v1907 = vld [vmem:[%s0 + $0x20] sm:$0xff]
  %v1908 = vld [vmem:[%s0 + $0x28] sm:$0xff]
  %v1909 = vld [vmem:[%s0 + $0x30] sm:$0xff]
  %v1910 = vld [vmem:[%s0 + $0x38] sm:$0xff]
  %v1911 = vld [vmem:[%s0 + $0x40] sm:$0xff]
  %v1912 = vld [vmem:[%s0 + $0x48] sm:$0xff]
  %v1913 = vld [vmem:[%s0 + $0x50] sm:$0xff]
  %v1914 = vld [vmem:[%s0 + $0x58] sm:$0xff]
  %v1915 = vld [vmem:[%s0 + $0x60] sm:$0xff]
  %v1916 = vld [vmem:[%s0 + $0x68] sm:$0xff]
  %v1917 = vld [vmem:[%s0 + $0x70] sm:$0xff]
  %v1918 = vld [vmem:[%s0 + $0x78] sm:$0xff]
  %v1919 = vld [vmem:[%s0 + $0x80] sm:$0xff]
  %v1920 = vld [vmem:[%s0 + $0x88] sm:$0xff]
  %v1921 = vld [vmem:[%s0 + $0x90] sm:$0xff]
  %v1922 = vld [vmem:[%s0 + $0x98] sm:$0xff]
  %v1923 = vld [vmem:[%s0 + $0xa0] sm:$0xff]
  %v1924 = vld [vmem:[%s0 + $0xa8] sm:$0xff]
  %v1925 = vld [vmem:[%s0 + $0xb0] sm:$0xff]
  %v1926 = vld [vmem:[%s0 + $0xb8] sm:$0xff]
  %v1927 = vld [vmem:[%s0 + $0xc0] sm:$0xff]
  %v1928 = vld [vmem:[%s0 + $0xc8] sm:$0xff]
  %v1929 = vld [vmem:[%s0 + $0xd0] sm:$0xff]
  %v1930 = vld [vmem:[%s0 + $0xd8] sm:$0xff]
  %v1931 = vld [vmem:[%s0 + $0xe0] sm:$0xff]
  %v1932 = vld [vmem:[%s0 + $0xe8] sm:$0xff]
  %v1933 = vld [vmem:[%s0 + $0xf0] sm:$0xff]
  %v1934 = vld [vmem:[%s0 + $0xf8] sm:$0xff]
  %v1935 = vld [vmem:[%s0 + $0x100] sm:$0xff]
  %v1936 = vld [vmem:[%s0 + $0x108] sm:$0xff]
  %v1937 = vld [vmem:[%s0 + $0x110] sm:$0xff]
  %v1938 = vld [vmem:[%s0 + $0x118] sm:$0xff]
  %v1939 = vld [vmem:[%s0 + $0x120] sm:$0xff]
  %v1940 = vld [vmem:[%s0 + $0x128] sm:$0xff]
  %v1941 = vld [vmem:[%s0 + $0x130] sm:$0xff]
  %v1942 = vld [vmem:[%s0 + $0x138] sm:$0xff]
  %v1943 = vld [vmem:[%s0 + $0x140] sm:$0xff]
  %v1944 = vld [vmem:[%s0 + $0x148] sm:$0xff]
  %v1945 = vld [vmem:[%s0 + $0x150] sm:$0xff]
  %v1946 = vld [vmem:[%s0 + $0x158] sm:$0xff]
  %v1947 = vld [vmem:[%s0 + $0x160] sm:$0xff]
  %v1948 = vld [vmem:[%s0 + $0x168] sm:$0xff]
  %v1949 = vld [vmem:[%s0 + $0x170] sm:$0xff]
  %v1950 = vld [vmem:[%s0 + $0x178] sm:$0xff]
  %v1951 = vld [vmem:[%s0 + $0x180] sm:$0xff]
  %v1952 = vld [vmem:[%s0 + $0x188] sm:$0xff]
  %v1953 = vld [vmem:[%s0 + $0x190] sm:$0xff]
  %v1954 = vld [vmem:[%s0 + $0x198] sm:$0xff]
  %v1955 = vld [vmem:[%s0 + $0x1a0] sm:$0xff]
  %v1956 = vld [vmem:[%s0 + $0x1a8] sm:$0xff]
  %v1957 = vld [vmem:[%s0 + $0x1b0] sm:$0xff]
  %v1958 = vld [vmem:[%s0 + $0x1b8] sm:$0xff]
  %v1959 = vld [vmem:[%s0 + $0x1c0] sm:$0xff]
  %v1960 = vld [vmem:[%s0 + $0x1c8] sm:$0xff]
  %v1961 = vld [vmem:[%s0 + $0x1d0] sm:$0xff]
  %v1962 = vld [vmem:[%s0 + $0x1d8] sm:$0xff]
  %v1963 = vld [vmem:[%s0 + $0x1e0] sm:$0xff]
  %v1964 = vld [vmem:[%s0 + $0x1e8] sm:$0xff]
  %v1965 = vld [vmem:[%s0 + $0x1f0] sm:$0xff]
  %v1966 = vld [vmem:[%s0 + $0x1f8] sm:$0xff]
  %v1967 = vld [vmem:[%s0 + $0x200] sm:$0xff]
  %v1968 = vld [vmem:[%s0 + $0x208] sm:$0xff]
  %v1969 = vld [vmem:[%s0 + $0x210] sm:$0xff]
  %v1970 = vld [vmem:[%s0 + $0x218] sm:$0xff]
  %v1971 = vld [vmem:[%s0 + $0x220] sm:$0xff]
  %v1972 = vld [vmem:[%s0 + $0x228] sm:$0xff]
  %v1973 = vld [vmem:[%s0 + $0x230] sm:$0xff]
  %v1974 = vld [vmem:[%s0 + $0x238] sm:$0xff]
  %v1975 = vld [vmem:[%s0 + $0x240] sm:$0xff]
  %v1976 = vld [vmem:[%s0 + $0x248] sm:$0xff]
  %v1977 = vld [vmem:[%s0 + $0x250] sm:$0xff]
  %v1978 = vld [vmem:[%s0 + $0x258] sm:$0xff]
  %v1979 = vld [vmem:[%s0 + $0x260] sm:$0xff]
  %v1980 = vld [vmem:[%s0 + $0x268] sm:$0xff]
  %v1981 = vld [vmem:[%s0 + $0x270] sm:$0xff]
  %v1982 = vld [vmem:[%s0 + $0x278] sm:$0xff]
  %v1983 = vld [vmem:[%s0 + $0x280] sm:$0xff]
  %v1984 = vld [vmem:[%s0 + $0x288] sm:$0xff]
  %v1985 = vld [vmem:[%s0 + $0x290] sm:$0xff]
  %v1986 = vld [vmem:[%s0 + $0x298] sm:$0xff]
  %v1987 = vld [vmem:[%s0 + $0x2a0] sm:$0xff]
  %v1988 = vld [vmem:[%s0 + $0x2a8] sm:$0xff]
  %v1989 = vld [vmem:[%s0 + $0x2b0] sm:$0xff]
  %v1990 = vld [vmem:[%s0 + $0x2b8] sm:$0xff]
  %v1991 = vld [vmem:[%s0 + $0x2c0] sm:$0xff]
  %v1992 = vld [vmem:[%s0 + $0x2c8] sm:$0xff]
  %v1993 = vld [vmem:[%s0 + $0x2d0] sm:$0xff]
  %v1994 = vld [vmem:[%s0 + $0x2d8] sm:$0xff]
  %v1995 = vld [vmem:[%s0 + $0x2e0] sm:$0xff]
  %v1996 = vld [vmem:[%s0 + $0x2e8] sm:$0xff]
  %v1997 = vld [vmem:[%s0 + $0x2f0] sm:$0xff]
  %v1998 = vld [vmem:[%s0 + $0x2f8] sm:$0xff]
  %v1999 = vld [vmem:[%s0 + $0x300] sm:$0xff]
  %v2000 = vld [vmem:[%s0 + $0x308] sm:$0xff]
  %v2001 = vld [vmem:[%s0 + $0x310] sm:$0xff]
  %v2002 = vld [vmem:[%s0 + $0x318] sm:$0xff]
  %v2003 = vld [vmem:[%s0 + $0x320] sm:$0xff]
  %v2004 = vld [vmem:[%s0 + $0x328] sm:$0xff]
  %v2005 = vld [vmem:[%s0 + $0x330] sm:$0xff]
  %v2006 = vld [vmem:[%s0 + $0x338] sm:$0xff]
  %v2007 = vld [vmem:[%s0 + $0x340] sm:$0xff]
  %v2008 = vld [vmem:[%s0 + $0x348] sm:$0xff]
  %v2009 = vld [vmem:[%s0 + $0x350] sm:$0xff]
  %v2010 = vld [vmem:[%s0 + $0x358] sm:$0xff]
  %v2011 = vld [vmem:[%s0 + $0x360] sm:$0xff]
  %v2012 = vld [vmem:[%s0 + $0x368] sm:$0xff]
  %v2013 = vld [vmem:[%s0 + $0x370] sm:$0xff]
  %v2014 = vld [vmem:[%s0 + $0x378] sm:$0xff]
  %v2015 = vld [vmem:[%s0 + $0x380] sm:$0xff]
  %v2016 = vld [vmem:[%s0 + $0x388] sm:$0xff]
  %v2017 = vld [vmem:[%s0 + $0x390] sm:$0xff]
  %v2018 = vld [vmem:[%s0 + $0x398] sm:$0xff]
  %v2019 = vld [vmem:[%s0 + $0x3a0] sm:$0xff]
  %v2020 = vld [vmem:[%s0 + $0x3a8] sm:$0xff]
  %v2021 = vld [vmem:[%s0 + $0x3b0] sm:$0xff]
  %v2022 = vld [vmem:[%s0 + $0x3b8] sm:$0xff]
  %v2023 = vld [vmem:[%s0 + $0x3c0] sm:$0xff]
  %v2024 = vld [vmem:[%s0 + $0x3c8] sm:$0xff]
  %v2025 = vld [vmem:[%s0 + $0x3d0] sm:$0xff]
  %v2026 = vld [vmem:[%s0 + $0x3d8] sm:$0xff]
  %v2027 = vld [vmem:[%s0 + $0x3e0] sm:$0xff]
  %v2028 = vld [vmem:[%s0 + $0x3e8] sm:$0xff]
  %v2029 = vld [vmem:[%s0 + $0x3f0] sm:$0xff]
  %v2030 = vld [vmem:[%s0 + $0x3f8] sm:$0xff]
  %v2031 = vld [vmem:[%s0 + $0x400] sm:$0xff]
  %v2032 = vld [vmem:[%s0 + $0x408] sm:$0xff]
  %v2033 = vld [vmem:[%s0 + $0x410] sm:$0xff]
  %v2034 = vld [vmem:[%s0 + $0x418] sm:$0xff]
  %v2035 = vld [vmem:[%s0 + $0x420] sm:$0xff]
  %v2036 = vld [vmem:[%s0 + $0x428] sm:$0xff]
  %v2037 = vld [vmem:[%s0 + $0x430] sm:$0xff]
  %v2038 = vld [vmem:[%s0 + $0x438] sm:$0xff]
  %v2039 = vld [vmem:[%s0 + $0x440] sm:$0xff]
  %v2040 = vld [vmem:[%s0 + $0x448] sm:$0xff]
  %v2041 = vld [vmem:[%s0 + $0x450] sm:$0xff]
  %v2042 = vld [vmem:[%s0 + $0x458] sm:$0xff]
  %v2043 = vld [vmem:[%s0 + $0x460] sm:$0xff]
  %v2044 = vld [vmem:[%s0 + $0x468] sm:$0xff]
  %v2045 = vld [vmem:[%s0 + $0x470] sm:$0xff]
  %v2046 = vld [vmem:[%s0 + $0x478] sm:$0xff]
  %v2047 = vld [vmem:[%s0 + $0x480] sm:$0xff]
  %v2048 = vld [vmem:[%s0 + $0x488] sm:$0xff]
  %v2049 = vld [vmem:[%s0 + $0x490] sm:$0xff]
  %v2050 = vld [vmem:[%s0 + $0x498] sm:$0xff]
  %v2051 = vld [vmem:[%s0 + $0x4a0] sm:$0xff]
  %v2052 = vld [vmem:[%s0 + $0x4a8] sm:$0xff]
  %v2053 = vld [vmem:[%s0 + $0x4b0] sm:$0xff]
  %v2054 = vld [vmem:[%s0 + $0x4b8] sm:$0xff]
  %v2055 = vld [vmem:[%s0 + $0x4c0] sm:$0xff]
  %v2056 = vld [vmem:[%s0 + $0x4c8] sm:$0xff]
  %v2057 = vld [vmem:[%s0 + $0x4d0] sm:$0xff]
  %v2058 = vld [vmem:[%s0 + $0x4d8] sm:$0xff]
  %v2059 = vld [vmem:[%s0 + $0x4e0] sm:$0xff]
  %v2060 = vld [vmem:[%s0 + $0x4e8] sm:$0xff]
  %v2061 = vld [vmem:[%s0 + $0x4f0] sm:$0xff]
  %v2062 = vld [vmem:[%s0 + $0x4f8] sm:$0xff]
  %v2063 = vld [vmem:[%s0 + $0x500] sm:$0xff]
  %v2064 = vld [vmem:[%s0 + $0x508] sm:$0xff]
  %v2065 = vld [vmem:[%s0 + $0x510] sm:$0xff]
  %v2066 = vld [vmem:[%s0 + $0x518] sm:$0xff]
  %v2067 = vld [vmem:[%s0 + $0x520] sm:$0xff]
  %v2068 = vld [vmem:[%s0 + $0x528] sm:$0xff]
  %v2069 = vld [vmem:[%s0 + $0x530] sm:$0xff]
  %v2070 = vld [vmem:[%s0 + $0x538] sm:$0xff]
  %v2071 = vld [vmem:[%s0 + $0x540] sm:$0xff]
  %v2072 = vld [vmem:[%s0 + $0x548] sm:$0xff]
  %v2073 = vld [vmem:[%s0 + $0x550] sm:$0xff]
  %v2074 = vld [vmem:[%s0 + $0x558] sm:$0xff]
  %v2075 = vld [vmem:[%s0 + $0x560] sm:$0xff]
  %v2076 = vld [vmem:[%s0 + $0x568] sm:$0xff]
  %v2077 = vld [vmem:[%s0 + $0x570] sm:$0xff]
  %v2078 = vld [vmem:[%s0 + $0x578] sm:$0xff]
  %v2079 = vld [vmem:[%s0 + $0x580] sm:$0xff]
  %v2080 = vld [vmem:[%s0 + $0x588] sm:$0xff]
  %v2081 = vld [vmem:[%s0 + $0x590] sm:$0xff]
  %v2082 = vld [vmem:[%s0 + $0x598] sm:$0xff]
  %v2083 = vld [vmem:[%s0 + $0x5a0] sm:$0xff]
  %v2084 = vld [vmem:[%s0 + $0x5a8] sm:$0xff]
  %v2085 = vld [vmem:[%s0 + $0x5b0] sm:$0xff]
  %v2086 = vld [vmem:[%s0 + $0x5b8] sm:$0xff]
  %v2087 = vld [vmem:[%s0 + $0x5c0] sm:$0xff]
  %v2088 = vld [vmem:[%s0 + $0x5c8] sm:$0xff]
  %v2089 = vld [vmem:[%s0 + $0x5d0] sm:$0xff]
  %v2090 = vld [vmem:[%s0 + $0x5d8] sm:$0xff]
  %v2091 = vld [vmem:[%s0 + $0x5e0] sm:$0xff]
  %v2092 = vld [vmem:[%s0 + $0x5e8] sm:$0xff]
  %v2093 = vld [vmem:[%s0 + $0x5f0] sm:$0xff]
  %v2094 = vld [vmem:[%s0 + $0x5f8] sm:$0xff]
  %v2095 = vld [vmem:[%s0 + $0x600] sm:$0xff]
  %v2096 = vld [vmem:[%s0 + $0x608] sm:$0xff]
  %v2097 = vld [vmem:[%s0 + $0x610] sm:$0xff]
  %v2098 = vld [vmem:[%s0 + $0x618] sm:$0xff]
  %v2099 = vld [vmem:[%s0 + $0x620] sm:$0xff]
  %v2100 = vld [vmem:[%s0 + $0x628] sm:$0xff]
  %v2101 = vld [vmem:[%s0 + $0x630] sm:$0xff]
  %v2102 = vld [vmem:[%s0 + $0x638] sm:$0xff]
  %v2103 = vld [vmem:[%s0 + $0x640] sm:$0xff]
  %v2104 = vld [vmem:[%s0 + $0x648] sm:$0xff]
  %v2105 = vld [vmem:[%s0 + $0x650] sm:$0xff]
  %v2106 = vld [vmem:[%s0 + $0x658] sm:$0xff]
  %v2107 = vld [vmem:[%s0 + $0x660] sm:$0xff]
  %v2108 = vld [vmem:[%s0 + $0x668] sm:$0xff]
  %v2109 = vld [vmem:[%s0 + $0x670] sm:$0xff]
  %v2110 = vld [vmem:[%s0 + $0x678] sm:$0xff]
  %v2111 = vld [vmem:[%s0 + $0x680] sm:$0xff]
  %v2112 = vld [vmem:[%s0 + $0x688] sm:$0xff]
  %v2113 = vld [vmem:[%s0 + $0x690] sm:$0xff]
  %v2114 = vld [vmem:[%s0 + $0x698] sm:$0xff]
  %v2115 = vld [vmem:[%s0 + $0x6a0] sm:$0xff]
  %v2116 = vld [vmem:[%s0 + $0x6a8] sm:$0xff]
  %v2117 = vld [vmem:[%s0 + $0x6b0] sm:$0xff]
  %v2118 = vld [vmem:[%s0 + $0x6b8] sm:$0xff]
  %v2119 = vld [vmem:[%s0 + $0x6c0] sm:$0xff]
  %v2120 = vld [vmem:[%s0 + $0x6c8] sm:$0xff]
  %v2121 = vld [vmem:[%s0 + $0x6d0] sm:$0xff]
  %v2122 = vld [vmem:[%s0 + $0x6d8] sm:$0xff]
  %v2123 = vld [vmem:[%s0 + $0x6e0] sm:$0xff]
  %v2124 = vld [vmem:[%s0 + $0x6e8] sm:$0xff]
  %v2125 = vld [vmem:[%s0 + $0x6f0] sm:$0xff]
  %v2126 = vld [vmem:[%s0 + $0x6f8] sm:$0xff]
  %v2127 = vld [vmem:[%s0 + $0x700] sm:$0xff]
  %v2128 = vld [vmem:[%s0 + $0x708] sm:$0xff]
  %v2129 = vld [vmem:[%s0 + $0x710] sm:$0xff]
  %v2130 = vld [vmem:[%s0 + $0x718] sm:$0xff]
  %v2131 = vld [vmem:[%s0 + $0x720] sm:$0xff]
  %v2132 = vld [vmem:[%s0 + $0x728] sm:$0xff]
  %v2133 = vld [vmem:[%s0 + $0x730] sm:$0xff]
  %v2134 = vld [vmem:[%s0 + $0x738] sm:$0xff]
  %v2135 = vld [vmem:[%s0 + $0x740] sm:$0xff]
  %v2136 = vld [vmem:[%s0 + $0x748] sm:$0xff]
  %v2137 = vld [vmem:[%s0 + $0x750] sm:$0xff]
  %v2138 = vld [vmem:[%s0 + $0x758] sm:$0xff]
  %v2139 = vld [vmem:[%s0 + $0x760] sm:$0xff]
  %v2140 = vld [vmem:[%s0 + $0x768] sm:$0xff]
  %v2141 = vld [vmem:[%s0 + $0x770] sm:$0xff]
  %v2142 = vld [vmem:[%s0 + $0x778] sm:$0xff]
  %v2143 = vld [vmem:[%s0 + $0x780] sm:$0xff]
  %v2144 = vld [vmem:[%s0 + $0x788] sm:$0xff]
  %v2145 = vld [vmem:[%s0 + $0x790] sm:$0xff]
  %v2146 = vld [vmem:[%s0 + $0x798] sm:$0xff]
  %v2147 = vld [vmem:[%s0 + $0x7a0] sm:$0xff]
  %v2148 = vld [vmem:[%s0 + $0x7a8] sm:$0xff]
  %v2149 = vld [vmem:[%s0 + $0x7b0] sm:$0xff]
  %v2150 = vld [vmem:[%s0 + $0x7b8] sm:$0xff]
  %v2151 = vld [vmem:[%s0 + $0x7c0] sm:$0xff]
  %v2152 = vld [vmem:[%s0 + $0x7c8] sm:$0xff]
  %v2153 = vld [vmem:[%s0 + $0x7d0] sm:$0xff]
  %v2154 = vld [vmem:[%s0 + $0x7d8] sm:$0xff]
  %v2155 = vld [vmem:[%s0 + $0x7e0] sm:$0xff]
  %v2156 = vld [vmem:[%s0 + $0x7e8] sm:$0xff]
  %v2157 = vld [vmem:[%s0 + $0x7f0] sm:$0xff]
  %v2158 = vld [vmem:[%s0 + $0x7f8] sm:$0xff]
  %2159 = vmatprep.subr.mxu0 0.0
  %2160 = vmatpush1.msra.mxu0 %v1839
  %2161 = vmatprep.subr.mxu0 0.0
  %2162 = vmatpush1.msra.mxu0 %v1840
  %2163 = vmatprep.subr.mxu0 0.0
  %2164 = vmatpush1.msra.mxu0 %v1841
  %2165 = vmatprep.subr.mxu0 0.0
  %2166 = vmatpush1.msra.mxu0 %v1842
  %2167 = vmatprep.subr.mxu0 0.0
  %2168 = vmatpush1.msra.mxu0 %v1843
  %2169 = vmatprep.subr.mxu0 0.0
  %2170 = vmatpush1.msra.mxu0 %v1844
  %2171 = vmatprep.subr.mxu0 0.0
  %2172 = vmatpush1.msra.mxu0 %v1845
  %2173 = vmatprep.subr.mxu0 0.0
  %2174 = vmatpush1.msra.mxu0 %v1846
  %2175 = vmatprep.subr.mxu0 0.0
  %2176 = vmatpush1.msra.mxu0 %v1847
  %2177 = vmatprep.subr.mxu0 0.0
  %2178 = vmatpush1.msra.mxu0 %v1848
  %2179 = vmatprep.subr.mxu0 0.0
  %2180 = vmatpush1.msra.mxu0 %v1849
  %2181 = vmatprep.subr.mxu0 0.0
  %2182 = vmatpush1.msra.mxu0 %v1850
  %2183 = vmatprep.subr.mxu0 0.0
  %2184 = vmatpush1.msra.mxu0 %v1851
  %2185 = vmatprep.subr.mxu0 0.0
  %2186 = vmatpush1.msra.mxu0 %v1852
  %2187 = vmatprep.subr.mxu0 0.0
  %2188 = vmatpush1.msra.mxu0 %v1853
  %2189 = vmatprep.subr.mxu0 0.0
  %2190 = vmatpush1.msra.mxu0 %v1854
  %2191 = vmatprep.subr.mxu0 0.0
  %2192 = vmatpush1.msra.mxu0 %v1855
  %2193 = vmatprep.subr.mxu0 0.0
  %2194 = vmatpush1.msra.mxu0 %v1856
  %2195 = vmatprep.subr.mxu0 0.0
  %2196 = vmatpush1.msra.mxu0 %v1857
  %2197 = vmatprep.subr.mxu0 0.0
  %2198 = vmatpush1.msra.mxu0 %v1858
  %2199 = vmatprep.subr.mxu0 0.0
  %2200 = vmatpush1.msra.mxu0 %v1859
  %2201 = vmatprep.subr.mxu0 0.0
  %2202 = vmatpush1.msra.mxu0 %v1860
  %2203 = vmatprep.subr.mxu0 0.0
  %2204 = vmatpush1.msra.mxu0 %v1861
  %2205 = vmatprep.subr.mxu0 0.0
  %2206 = vmatpush1.msra.mxu0 %v1862
  %2207 = vmatprep.subr.mxu0 0.0
  %2208 = vmatpush1.msra.mxu0 %v1863
  %2209 = vmatprep.subr.mxu0 0.0
  %2210 = vmatpush1.msra.mxu0 %v1864
  %2211 = vmatprep.subr.mxu0 0.0
  %2212 = vmatpush1.msra.mxu0 %v1865
  %2213 = vmatprep.subr.mxu0 0.0
  %2214 = vmatpush1.msra.mxu0 %v1866
  %2215 = vmatprep.subr.mxu0 0.0
  %2216 = vmatpush1.msra.mxu0 %v1867
  %2217 = vmatprep.subr.mxu0 0.0
  %2218 = vmatpush1.msra.mxu0 %v1868
  %2219 = vmatprep.subr.mxu0 0.0
  %2220 = vmatpush1.msra.mxu0 %v1869
  %2221 = vmatprep.subr.mxu0 0.0
  %2222 = vmatpush1.msra.mxu0 %v1870
  %2223 = vmatprep.mubr.f32.mxu0 %v1904
  %2224 = vmatmul.mubr.f32.gmra.mrb[0].mxu0 %v1903
  %v2225 = vpop.f32.mrb[0].mxu0
  %v2226 = vadd.f32 0.0, %v2225
  %v2227 = vpop.f32.mrb[0].mxu0
  %2228 = vmatprep.mubr.f32.mxu0 %v1908
  %2229 = vmatmul.mubr.f32.gmra.mrb[0].mxu0 %v1907
  %v2230 = vpop.f32.mrb[0].mxu0
  %v2231 = vadd.f32 0.0, %v2230
  %v2232 = vpop.f32.mrb[0].mxu0
  %2233 = vmatprep.mubr.f32.mxu0 %v1912
  %2234 = vmatmul.mubr.f32.gmra.mrb[0].mxu0 %v1911
  %v2235 = vpop.f32.mrb[0].mxu0
  %v2236 = vadd.f32 0.0, %v2235
  %v2237 = vpop.f32.mrb[0].mxu0
  %2238 = vmatprep.mubr.f32.mxu0 %v1916
  %2239 = vmatmul.mubr.f32.gmra.mrb[0].mxu0 %v1915
  %v2240 = vpop.f32.mrb[0].mxu0
  %v2241 = vadd.f32 0.0, %v2240
  %v2242 = vpop.f32.mrb[0].mxu0
  %2243 = vmatprep.mubr.f32.mxu0 %v1920
  %2244 = vmatmul.mubr.f32.gmra.mrb[0].mxu0 %v1919
  %v2245 = vpop.f32.mrb[0].mxu0
  %v2246 = vadd.f32 0.0, %v2245
  %v2247 = vpop.f32.mrb[0].mxu0
  %2248 = vmatprep.mubr.f32.mxu0 %v1924
  %2249 = vmatmul.mubr.f32.gmra.mrb[0].mxu0 %v1923
  %v2250 = vpop.f32.mrb[0].mxu0
  %v2251 = vadd.f32 0.0, %v2250
  %v2252 = vpop.f32.mrb[0].mxu0
  %2253 = vmatprep.mubr.f32.mxu0 %v1928
  %2254 = vmatmul.mubr.f32.gmra.mrb[0].mxu0 %v1927
  %v2255 = vpop.f32.mrb[0].mxu0
  %v2256 = vadd.f32 0.0, %v2255
  %v2257 = vpop.f32.mrb[0].mxu0
  %2258 = vmatprep.mubr.f32.mxu0 %v1932
  %2259 = vmatmul.mubr.f32.gmra.mrb[0].mxu0 %v1931
  %v2260 = vpop.f32.mrb[0].mxu0
  %v2261 = vadd.f32 0.0, %v2260
  %v2262 = vpop.f32.mrb[0].mxu0
  %2263 = vmatprep.mubr.f32.mxu0 %v1936
  %2264 = vmatmul.mubr.f32.gmra.mrb[0].mxu0 %v1935
  %v2265 = vpop.f32.mrb[0].mxu0
  %v2266 = vadd.f32 0.0, %v2265
  %v2267 = vpop.f32.mrb[0].mxu0
  %2268 = vmatprep.mubr.f32.mxu0 %v1940
  %2269 = vmatmul.mubr.f32.gmra.mrb[0].mxu0 %v1939
  %v2270 = vpop.f32.mrb[0].mxu0
  %v2271 = vadd.f32 0.0, %v2270
  %v2272 = vpop.f32.mrb[0].mxu0
  %2273 = vmatprep.mubr.f32.mxu0 %v1944
  %2274 = vmatmul.mubr.f32.gmra.mrb[0].mxu0 %v1943
  %v2275 = vpop.f32.mrb[0].mxu0
  %v2276 = vadd.f32 0.0, %v2275
  %v2277 = vpop.f32.mrb[0].mxu0
  %2278 = vmatprep.mubr.f32.mxu0 %v1948
  %2279 = vmatmul.mubr.f32.gmra.mrb[0].mxu0 %v1947
  %v2280 = vpop.f32.mrb[0].mxu0
  %v2281 = vadd.f32 0.0, %v2280
  %v2282 = vpop.f32.mrb[0].mxu0
  %2283 = vmatprep.mubr.f32.mxu0 %v1952
  %2284 = vmatmul.mubr.f32.gmra.mrb[0].mxu0 %v1951
  %v2285 = vpop.f32.mrb[0].mxu0
  %v2286 = vadd.f32 0.0, %v2285
  %v2287 = vpop.f32.mrb[0].mxu0
  %2288 = vmatprep.mubr.f32.mxu0 %v1956
  %2289 = vmatmul.mubr.f32.gmra.mrb[0].mxu0 %v1955
  %v2290 = vpop.f32.mrb[0].mxu0
  %v2291 = vadd.f32 0.0, %v2290
  %v2292 = vpop.f32.mrb[0].mxu0
  %2293 = vmatprep.mubr.f32.mxu0 %v1960
  %2294 = vmatmul.mubr.f32.gmra.mrb[0].mxu0 %v1959
  %v2295 = vpop.f32.mrb[0].mxu0
  %v2296 = vadd.f32 0.0, %v2295
  %v2297 = vpop.f32.mrb[0].mxu0
  %2298 = vmatprep.mubr.f32.mxu0 %v1964
  %2299 = vmatmul.mubr.f32.gmra.mrb[0].mxu0 %v1963
  %v2300 = vpop.f32.mrb[0].mxu0
  %v2301 = vadd.f32 0.0, %v2300
  %v2302 = vpop.f32.mrb[0].mxu0
  %2303 = vmatprep.mubr.f32.mxu0 %v1968
  %2304 = vmatmul.mubr.f32.gmra.mrb[0].mxu0 %v1967
  %v2305 = vpop.f32.mrb[0].mxu0
  %v2306 = vadd.f32 0.0, %v2305
  %v2307 = vpop.f32.mrb[0].mxu0
  %2308 = vmatprep.mubr.f32.mxu0 %v1972
  %2309 = vmatmul.mubr.f32.gmra.mrb[0].mxu0 %v1971
  %v2310 = vpop.f32.mrb[0].mxu0
  %v2311 = vadd.f32 0.0, %v2310
  %v2312 = vpop.f32.mrb[0].mxu0
  %2313 = vmatprep.mubr.f32.mxu0 %v1976
  %2314 = vmatmul.mubr.f32.gmra.mrb[0].mxu0 %v1975
  %v2315 = vpop.f32.mrb[0].mxu0
  %v2316 = vadd.f32 0.0, %v2315
  %v2317 = vpop.f32.mrb[0].mxu0
  %2318 = vmatprep.mubr.f32.mxu0 %v1980
  %2319 = vmatmul.mubr.f32.gmra.mrb[0].mxu0 %v1979
  %v2320 = vpop.f32.mrb[0].mxu0
  %v2321 = vadd.f32 0.0, %v2320
  %v2322 = vpop.f32.mrb[0].mxu0
  %2323 = vmatprep.mubr.f32.mxu0 %v1984
  %2324 = vmatmul.mubr.f32.gmra.mrb[0].mxu0 %v1983
  %v2325 = vpop.f32.mrb[0].mxu0
  %v2326 = vadd.f32 0.0, %v2325
  %v2327 = vpop.f32.mrb[0].mxu0
  %2328 = vmatprep.mubr.f32.mxu0 %v1988
  %2329 = vmatmul.mubr.f32.gmra.mrb[0].mxu0 %v1987
  %v2330 = vpop.f32.mrb[0].mxu0
  %v2331 = vadd.f32 0.0, %v2330
  %v2332 = vpop.f32.mrb[0].mxu0
  %2333 = vmatprep.mubr.f32.mxu0 %v1992
  %2334 = vmatmul.mubr.f32.gmra.mrb[0].mxu0 %v1991
  %v2335 = vpop.f32.mrb[0].mxu0
  %v2336 = vadd.f32 0.0, %v2335
  %v2337 = vpop.f32.mrb[0].mxu0
  %2338 = vmatprep.mubr.f32.mxu0 %v1996
  %2339 = vmatmul.mubr.f32.gmra.mrb[0].mxu0 %v1995
  %v2340 = vpop.f32.mrb[0].mxu0
  %v2341 = vadd.f32 0.0, %v2340
  %v2342 = vpop.f32.mrb[0].mxu0
  %2343 = vmatprep.mubr.f32.mxu0 %v2000
  %2344 = vmatmul.mubr.f32.gmra.mrb[0].mxu0 %v1999
  %v2345 = vpop.f32.mrb[0].mxu0
  %v2346 = vadd.f32 0.0, %v2345
  %v2347 = vpop.f32.mrb[0].mxu0
  %2348 = vmatprep.mubr.f32.mxu0 %v2004
  %2349 = vmatmul.mubr.f32.gmra.mrb[0].mxu0 %v2003
  %v2350 = vpop.f32.mrb[0].mxu0
  %v2351 = vadd.f32 0.0, %v2350
  %v2352 = vpop.f32.mrb[0].mxu0
  %2353 = vmatprep.mubr.f32.mxu0 %v2008
  %2354 = vmatmul.mubr.f32.gmra.mrb[0].mxu0 %v2007
  %v2355 = vpop.f32.mrb[0].mxu0
  %v2356 = vadd.f32 0.0, %v2355
  %v2357 = vpop.f32.mrb[0].mxu0
  %2358 = vmatprep.mubr.f32.mxu0 %v2012
  %2359 = vmatmul.mubr.f32.gmra.mrb[0].mxu0 %v2011
  %v2360 = vpop.f32.mrb[0].mxu0
  %v2361 = vadd.f32 0.0, %v2360
  %v2362 = vpop.f32.mrb[0].mxu0
  %2363 = vmatprep.mubr.f32.mxu0 %v2016
  %2364 = vmatmul.mubr.f32.gmra.mrb[0].mxu0 %v2015
  %v2365 = vpop.f32.mrb[0].mxu0
  %v2366 = vadd.f32 0.0, %v2365
  %v2367 = vpop.f32.mrb[0].mxu0
  %2368 = vmatprep.mubr.f32.mxu0 %v2020
  %2369 = vmatmul.mubr.f32.gmra.mrb[0].mxu0 %v2019
  %v2370 = vpop.f32.mrb[0].mxu0
  %v2371 = vadd.f32 0.0, %v2370
  %v2372 = vpop.f32.mrb[0].mxu0
  %2373 = vmatprep.mubr.f32.mxu0 %v2024
  %2374 = vmatmul.mubr.f32.gmra.mrb[0].mxu0 %v2023
  %v2375 = vpop.f32.mrb[0].mxu0
  %v2376 = vadd.f32 0.0, %v2375
  %v2377 = vpop.f32.mrb[0].mxu0
  %2378 = vmatprep.mubr.f32.mxu0 %v2028
  %2379 = vmatmul.mubr.f32.gmra.mrb[0].mxu0 %v2027
  %v2380 = vpop.f32.mrb[0].mxu0
  %v2381 = vadd.f32 0.0, %v2380
  %v2382 = vpop.f32.mrb[0].mxu0
  %2383 = vmatprep.mubr.f32.mxu0 %v2032
  %2384 = vmatmul.mubr.f32.gmra.mrb[0].mxu0 %v2031
  %v2385 = vpop.f32.mrb[0].mxu0
  %v2386 = vadd.f32 0.0, %v2385
  %v2387 = vpop.f32.mrb[0].mxu0
  %2388 = vmatprep.mubr.f32.mxu0 %v2036
  %2389 = vmatmul.mubr.f32.gmra.mrb[0].mxu0 %v2035
  %v2390 = vpop.f32.mrb[0].mxu0
  %v2391 = vadd.f32 0.0, %v2390
  %v2392 = vpop.f32.mrb[0].mxu0
  %2393 = vmatprep.mubr.f32.mxu0 %v2040
  %2394 = vmatmul.mubr.f32.gmra.mrb[0].mxu0 %v2039
  %v2395 = vpop.f32.mrb[0].mxu0
  %v2396 = vadd.f32 0.0, %v2395
  %v2397 = vpop.f32.mrb[0].mxu0
  %2398 = vmatprep.mubr.f32.mxu0 %v2044
  %2399 = vmatmul.mubr.f32.gmra.mrb[0].mxu0 %v2043
  %v2400 = vpop.f32.mrb[0].mxu0
  %v2401 = vadd.f32 0.0, %v2400
  %v2402 = vpop.f32.mrb[0].mxu0
  %2403 = vmatprep.mubr.f32.mxu0 %v2048
  %2404 = vmatmul.mubr.f32.gmra.mrb[0].mxu0 %v2047
  %v2405 = vpop.f32.mrb[0].mxu0
  %v2406 = vadd.f32 0.0, %v2405
  %v2407 = vpop.f32.mrb[0].mxu0
  %2408 = vmatprep.mubr.f32.mxu0 %v2052
  %2409 = vmatmul.mubr.f32.gmra.mrb[0].mxu0 %v2051
  %v2410 = vpop.f32.mrb[0].mxu0
  %v2411 = vadd.f32 0.0, %v2410
  %v2412 = vpop.f32.mrb[0].mxu0
  %2413 = vmatprep.mubr.f32.mxu0 %v2056
  %2414 = vmatmul.mubr.f32.gmra.mrb[0].mxu0 %v2055
  %v2415 = vpop.f32.mrb[0].mxu0
  %v2416 = vadd.f32 0.0, %v2415
  %v2417 = vpop.f32.mrb[0].mxu0
  %2418 = vmatprep.mubr.f32.mxu0 %v2060
  %2419 = vmatmul.mubr.f32.gmra.mrb[0].mxu0 %v2059
  %v2420 = vpop.f32.mrb[0].mxu0
  %v2421 = vadd.f32 0.0, %v2420
  %v2422 = vpop.f32.mrb[0].mxu0
  %2423 = vmatprep.mubr.f32.mxu0 %v2064
  %2424 = vmatmul.mubr.f32.gmra.mrb[0].mxu0 %v2063
  %v2425 = vpop.f32.mrb[0].mxu0
  %v2426 = vadd.f32 0.0, %v2425
  %v2427 = vpop.f32.mrb[0].mxu0
  %2428 = vmatprep.mubr.f32.mxu0 %v2068
  %2429 = vmatmul.mubr.f32.gmra.mrb[0].mxu0 %v2067
  %v2430 = vpop.f32.mrb[0].mxu0
  %v2431 = vadd.f32 0.0, %v2430
  %v2432 = vpop.f32.mrb[0].mxu0
  %2433 = vmatprep.mubr.f32.mxu0 %v2072
  %2434 = vmatmul.mubr.f32.gmra.mrb[0].mxu0 %v2071
  %v2435 = vpop.f32.mrb[0].mxu0
  %v2436 = vadd.f32 0.0, %v2435
  %v2437 = vpop.f32.mrb[0].mxu0
  %2438 = vmatprep.mubr.f32.mxu0 %v2076
  %2439 = vmatmul.mubr.f32.gmra.mrb[0].mxu0 %v2075
  %v2440 = vpop.f32.mrb[0].mxu0
  %v2441 = vadd.f32 0.0, %v2440
  %v2442 = vpop.f32.mrb[0].mxu0
  %2443 = vmatprep.mubr.f32.mxu0 %v2080
  %2444 = vmatmul.mubr.f32.gmra.mrb[0].mxu0 %v2079
  %v2445 = vpop.f32.mrb[0].mxu0
  %v2446 = vadd.f32 0.0, %v2445
  %v2447 = vpop.f32.mrb[0].mxu0
  %2448 = vmatprep.mubr.f32.mxu0 %v2084
  %2449 = vmatmul.mubr.f32.gmra.mrb[0].mxu0 %v2083
  %v2450 = vpop.f32.mrb[0].mxu0
  %v2451 = vadd.f32 0.0, %v2450
  %v2452 = vpop.f32.mrb[0].mxu0
  %2453 = vmatprep.mubr.f32.mxu0 %v2088
  %2454 = vmatmul.mubr.f32.gmra.mrb[0].mxu0 %v2087
  %v2455 = vpop.f32.mrb[0].mxu0
  %v2456 = vadd.f32 0.0, %v2455
  %v2457 = vpop.f32.mrb[0].mxu0
  %2458 = vmatprep.mubr.f32.mxu0 %v2092
  %2459 = vmatmul.mubr.f32.gmra.mrb[0].mxu0 %v2091
  %v2460 = vpop.f32.mrb[0].mxu0
  %v2461 = vadd.f32 0.0, %v2460
  %v2462 = vpop.f32.mrb[0].mxu0
  %2463 = vmatprep.mubr.f32.mxu0 %v2096
  %2464 = vmatmul.mubr.f32.gmra.mrb[0].mxu0 %v2095
  %v2465 = vpop.f32.mrb[0].mxu0
  %v2466 = vadd.f32 0.0, %v2465
  %v2467 = vpop.f32.mrb[0].mxu0
  %2468 = vmatprep.mubr.f32.mxu0 %v2100
  %2469 = vmatmul.mubr.f32.gmra.mrb[0].mxu0 %v2099
  %v2470 = vpop.f32.mrb[0].mxu0
  %v2471 = vadd.f32 0.0, %v2470
  %v2472 = vpop.f32.mrb[0].mxu0
  %2473 = vmatprep.mubr.f32.mxu0 %v2104
  %2474 = vmatmul.mubr.f32.gmra.mrb[0].mxu0 %v2103
  %v2475 = vpop.f32.mrb[0].mxu0
  %v2476 = vadd.f32 0.0, %v2475
  %v2477 = vpop.f32.mrb[0].mxu0
  %2478 = vmatprep.mubr.f32.mxu0 %v2108
  %2479 = vmatmul.mubr.f32.gmra.mrb[0].mxu0 %v2107
  %v2480 = vpop.f32.mrb[0].mxu0
  %v2481 = vadd.f32 0.0, %v2480
  %v2482 = vpop.f32.mrb[0].mxu0
  %2483 = vmatprep.mubr.f32.mxu0 %v2112
  %2484 = vmatmul.mubr.f32.gmra.mrb[0].mxu0 %v2111
  %v2485 = vpop.f32.mrb[0].mxu0
  %v2486 = vadd.f32 0.0, %v2485
  %v2487 = vpop.f32.mrb[0].mxu0
  %2488 = vmatprep.mubr.f32.mxu0 %v2116
  %2489 = vmatmul.mubr.f32.gmra.mrb[0].mxu0 %v2115
  %v2490 = vpop.f32.mrb[0].mxu0
  %v2491 = vadd.f32 0.0, %v2490
  %v2492 = vpop.f32.mrb[0].mxu0
  %2493 = vmatprep.mubr.f32.mxu0 %v2120
  %2494 = vmatmul.mubr.f32.gmra.mrb[0].mxu0 %v2119
  %v2495 = vpop.f32.mrb[0].mxu0
  %v2496 = vadd.f32 0.0, %v2495
  %v2497 = vpop.f32.mrb[0].mxu0
  %2498 = vmatprep.mubr.f32.mxu0 %v2124
  %2499 = vmatmul.mubr.f32.gmra.mrb[0].mxu0 %v2123
  %v2500 = vpop.f32.mrb[0].mxu0
  %v2501 = vadd.f32 0.0, %v2500
  %v2502 = vpop.f32.mrb[0].mxu0
  %2503 = vmatprep.mubr.f32.mxu0 %v2128
  %2504 = vmatmul.mubr.f32.gmra.mrb[0].mxu0 %v2127
  %v2505 = vpop.f32.mrb[0].mxu0
  %v2506 = vadd.f32 0.0, %v2505
  %v2507 = vpop.f32.mrb[0].mxu0
  %2508 = vmatprep.mubr.f32.mxu0 %v2132
  %2509 = vmatmul.mubr.f32.gmra.mrb[0].mxu0 %v2131
  %v2510 = vpop.f32.mrb[0].mxu0
  %v2511 = vadd.f32 0.0, %v2510
  %v2512 = vpop.f32.mrb[0].mxu0
  %2513 = vmatprep.mubr.f32.mxu0 %v2136
  %2514 = vmatmul.mubr.f32.gmra.mrb[0].mxu0 %v2135
  %v2515 = vpop.f32.mrb[0].mxu0
  %v2516 = vadd.f32 0.0, %v2515
  %v2517 = vpop.f32.mrb[0].mxu0
  %2518 = vmatprep.mubr.f32.mxu0 %v2140
  %2519 = vmatmul.mubr.f32.gmra.mrb[0].mxu0 %v2139
  %v2520 = vpop.f32.mrb[0].mxu0
  %v2521 = vadd.f32 0.0, %v2520
  %v2522 = vpop.f32.mrb[0].mxu0
  %2523 = vmatprep.mubr.f32.mxu0 %v2144
  %2524 = vmatmul.mubr.f32.gmra.mrb[0].mxu0 %v2143
  %v2525 = vpop.f32.mrb[0].mxu0
  %v2526 = vadd.f32 0.0, %v2525
  %v2527 = vpop.f32.mrb[0].mxu0
  %2528 = vmatprep.mubr.f32.mxu0 %v2148
  %2529 = vmatmul.mubr.f32.gmra.mrb[0].mxu0 %v2147
  %v2530 = vpop.f32.mrb[0].mxu0
  %v2531 = vadd.f32 0.0, %v2530
  %v2532 = vpop.f32.mrb[0].mxu0
  %2533 = vmatprep.mubr.f32.mxu0 %v2152
  %2534 = vmatmul.mubr.f32.gmra.mrb[0].mxu0 %v2151
  %v2535 = vpop.f32.mrb[0].mxu0
  %v2536 = vadd.f32 0.0, %v2535
  %v2537 = vpop.f32.mrb[0].mxu0
  %2538 = vmatprep.mubr.f32.mxu0 %v2156
  %2539 = vmatmul.mubr.f32.gmra.mrb[0].mxu0 %v2155
  %v2540 = vpop.f32.mrb[0].mxu0
  %v2541 = vadd.f32 0.0, %v2540
  %v2542 = vpop.f32.mrb[0].mxu0
  %2543 = vdwg.mxu0
  %2544 = vmatprep.subr.mxu0 0.0
  %2545 = vmatpush1.msra.mxu0 %v1871
  %2546 = vmatprep.subr.mxu0 0.0
  %2547 = vmatpush1.msra.mxu0 %v1872
  %2548 = vmatprep.subr.mxu0 0.0
  %2549 = vmatpush1.msra.mxu0 %v1873
  %2550 = vmatprep.subr.mxu0 0.0
  %2551 = vmatpush1.msra.mxu0 %v1874
  %2552 = vmatprep.subr.mxu0 0.0
  %2553 = vmatpush1.msra.mxu0 %v1875
  %2554 = vmatprep.subr.mxu0 0.0
  %2555 = vmatpush1.msra.mxu0 %v1876
  %2556 = vmatprep.subr.mxu0 0.0
  %2557 = vmatpush1.msra.mxu0 %v1877
  %2558 = vmatprep.subr.mxu0 0.0
  %2559 = vmatpush1.msra.mxu0 %v1878
  %2560 = vmatprep.subr.mxu0 0.0
  %2561 = vmatpush1.msra.mxu0 %v1879
  %2562 = vmatprep.subr.mxu0 0.0
  %2563 = vmatpush1.msra.mxu0 %v1880
  %2564 = vmatprep.subr.mxu0 0.0
  %2565 = vmatpush1.msra.mxu0 %v1881
  %2566 = vmatprep.subr.mxu0 0.0
  %2567 = vmatpush1.msra.mxu0 %v1882
  %2568 = vmatprep.subr.mxu0 0.0
  %2569 = vmatpush1.msra.mxu0 %v1883
  %2570 = vmatprep.subr.mxu0 0.0
  %2571 = vmatpush1.msra.mxu0 %v1884
  %2572 = vmatprep.subr.mxu0 0.0
  %2573 = vmatpush1.msra.mxu0 %v1885
  %2574 = vmatprep.subr.mxu0 0.0
  %2575 = vmatpush1.msra.mxu0 %v1886
  %2576 = vmatprep.subr.mxu0 0.0
  %2577 = vmatpush1.msra.mxu0 %v1887
  %2578 = vmatprep.subr.mxu0 0.0
  %2579 = vmatpush1.msra.mxu0 %v1888
  %2580 = vmatprep.subr.mxu0 0.0
  %2581 = vmatpush1.msra.mxu0 %v1889
  %2582 = vmatprep.subr.mxu0 0.0
  %2583 = vmatpush1.msra.mxu0 %v1890
  %2584 = vmatprep.subr.mxu0 0.0
  %2585 = vmatpush1.msra.mxu0 %v1891
  %2586 = vmatprep.subr.mxu0 0.0
  %2587 = vmatpush1.msra.mxu0 %v1892
  %2588 = vmatprep.subr.mxu0 0.0
  %2589 = vmatpush1.msra.mxu0 %v1893
  %2590 = vmatprep.subr.mxu0 0.0
  %2591 = vmatpush1.msra.mxu0 %v1894
  %2592 = vmatprep.subr.mxu0 0.0
  %2593 = vmatpush1.msra.mxu0 %v1895
  %2594 = vmatprep.subr.mxu0 0.0
  %2595 = vmatpush1.msra.mxu0 %v1896
  %2596 = vmatprep.subr.mxu0 0.0
  %2597 = vmatpush1.msra.mxu0 %v1897
  %2598 = vmatprep.subr.mxu0 0.0
  %2599 = vmatpush1.msra.mxu0 %v1898
  %2600 = vmatprep.subr.mxu0 0.0
  %2601 = vmatpush1.msra.mxu0 %v1899
  %2602 = vmatprep.subr.mxu0 0.0
  %2603 = vmatpush1.msra.mxu0 %v1900
  %2604 = vmatprep.subr.mxu0 0.0
  %2605 = vmatpush1.msra.mxu0 %v1901
  %2606 = vmatprep.subr.mxu0 0.0
  %2607 = vmatpush1.msra.mxu0 %v1902
  %2608 = vmatprep.mubr.f32.mxu0 %v1906
  %2609 = vmatmul.mubr.f32.gmra.mrb[0].mxu0 %v1905
  %v2610 = vpop.f32.mrb[0].mxu0
  %v2611 = vadd.f32 %v2226, %v2610
  %v2612 = vpop.f32.mrb[0].mxu0
  %2613 = vmatprep.mubr.f32.mxu0 %v1910
  %2614 = vmatmul.mubr.f32.gmra.mrb[0].mxu0 %v1909
  %v2615 = vpop.f32.mrb[0].mxu0
  %v2616 = vadd.f32 %v2231, %v2615
  %v2617 = vpop.f32.mrb[0].mxu0
  %2618 = vmatprep.mubr.f32.mxu0 %v1914
  %2619 = vmatmul.mubr.f32.gmra.mrb[0].mxu0 %v1913
  %v2620 = vpop.f32.mrb[0].mxu0
  %v2621 = vadd.f32 %v2236, %v2620
  %v2622 = vpop.f32.mrb[0].mxu0
  %2623 = vmatprep.mubr.f32.mxu0 %v1918
  %2624 = vmatmul.mubr.f32.gmra.mrb[0].mxu0 %v1917
  %v2625 = vpop.f32.mrb[0].mxu0
  %v2626 = vadd.f32 %v2241, %v2625
  %v2627 = vpop.f32.mrb[0].mxu0
  %2628 = vmatprep.mubr.f32.mxu0 %v1922
  %2629 = vmatmul.mubr.f32.gmra.mrb[0].mxu0 %v1921
  %v2630 = vpop.f32.mrb[0].mxu0
  %v2631 = vadd.f32 %v2246, %v2630
  %v2632 = vpop.f32.mrb[0].mxu0
  %2633 = vmatprep.mubr.f32.mxu0 %v1926
  %2634 = vmatmul.mubr.f32.gmra.mrb[0].mxu0 %v1925
  %v2635 = vpop.f32.mrb[0].mxu0
  %v2636 = vadd.f32 %v2251, %v2635
  %v2637 = vpop.f32.mrb[0].mxu0
  %2638 = vmatprep.mubr.f32.mxu0 %v1930
  %2639 = vmatmul.mubr.f32.gmra.mrb[0].mxu0 %v1929
  %v2640 = vpop.f32.mrb[0].mxu0
  %v2641 = vadd.f32 %v2256, %v2640
  %v2642 = vpop.f32.mrb[0].mxu0
  %2643 = vmatprep.mubr.f32.mxu0 %v1934
  %2644 = vmatmul.mubr.f32.gmra.mrb[0].mxu0 %v1933
  %v2645 = vpop.f32.mrb[0].mxu0
  %v2646 = vadd.f32 %v2261, %v2645
  %v2647 = vpop.f32.mrb[0].mxu0
  %2648 = vmatprep.mubr.f32.mxu0 %v1938
  %2649 = vmatmul.mubr.f32.gmra.mrb[0].mxu0 %v1937
  %v2650 = vpop.f32.mrb[0].mxu0
  %v2651 = vadd.f32 %v2266, %v2650
  %v2652 = vpop.f32.mrb[0].mxu0
  %2653 = vmatprep.mubr.f32.mxu0 %v1942
  %2654 = vmatmul.mubr.f32.gmra.mrb[0].mxu0 %v1941
  %v2655 = vpop.f32.mrb[0].mxu0
  %v2656 = vadd.f32 %v2271, %v2655
  %v2657 = vpop.f32.mrb[0].mxu0
  %2658 = vmatprep.mubr.f32.mxu0 %v1946
  %2659 = vmatmul.mubr.f32.gmra.mrb[0].mxu0 %v1945
  %v2660 = vpop.f32.mrb[0].mxu0
  %v2661 = vadd.f32 %v2276, %v2660
  %v2662 = vpop.f32.mrb[0].mxu0
  %2663 = vmatprep.mubr.f32.mxu0 %v1950
  %2664 = vmatmul.mubr.f32.gmra.mrb[0].mxu0 %v1949
  %v2665 = vpop.f32.mrb[0].mxu0
  %v2666 = vadd.f32 %v2281, %v2665
  %v2667 = vpop.f32.mrb[0].mxu0
  %2668 = vmatprep.mubr.f32.mxu0 %v1954
  %2669 = vmatmul.mubr.f32.gmra.mrb[0].mxu0 %v1953
  %v2670 = vpop.f32.mrb[0].mxu0
  %v2671 = vadd.f32 %v2286, %v2670
  %v2672 = vpop.f32.mrb[0].mxu0
  %2673 = vmatprep.mubr.f32.mxu0 %v1958
  %2674 = vmatmul.mubr.f32.gmra.mrb[0].mxu0 %v1957
  %v2675 = vpop.f32.mrb[0].mxu0
  %v2676 = vadd.f32 %v2291, %v2675
  %v2677 = vpop.f32.mrb[0].mxu0
  %2678 = vmatprep.mubr.f32.mxu0 %v1962
  %2679 = vmatmul.mubr.f32.gmra.mrb[0].mxu0 %v1961
  %v2680 = vpop.f32.mrb[0].mxu0
  %v2681 = vadd.f32 %v2296, %v2680
  %v2682 = vpop.f32.mrb[0].mxu0
  %2683 = vmatprep.mubr.f32.mxu0 %v1966
  %2684 = vmatmul.mubr.f32.gmra.mrb[0].mxu0 %v1965
  %v2685 = vpop.f32.mrb[0].mxu0
  %v2686 = vadd.f32 %v2301, %v2685
  %v2687 = vpop.f32.mrb[0].mxu0
  %2688 = vmatprep.mubr.f32.mxu0 %v1970
  %2689 = vmatmul.mubr.f32.gmra.mrb[0].mxu0 %v1969
  %v2690 = vpop.f32.mrb[0].mxu0
  %v2691 = vadd.f32 %v2306, %v2690
  %v2692 = vpop.f32.mrb[0].mxu0
  %2693 = vmatprep.mubr.f32.mxu0 %v1974
  %2694 = vmatmul.mubr.f32.gmra.mrb[0].mxu0 %v1973
  %v2695 = vpop.f32.mrb[0].mxu0
  %v2696 = vadd.f32 %v2311, %v2695
  %v2697 = vpop.f32.mrb[0].mxu0
  %2698 = vmatprep.mubr.f32.mxu0 %v1978
  %2699 = vmatmul.mubr.f32.gmra.mrb[0].mxu0 %v1977
  %v2700 = vpop.f32.mrb[0].mxu0
  %v2701 = vadd.f32 %v2316, %v2700
  %v2702 = vpop.f32.mrb[0].mxu0
  %2703 = vmatprep.mubr.f32.mxu0 %v1982
  %2704 = vmatmul.mubr.f32.gmra.mrb[0].mxu0 %v1981
  %v2705 = vpop.f32.mrb[0].mxu0
  %v2706 = vadd.f32 %v2321, %v2705
  %v2707 = vpop.f32.mrb[0].mxu0
  %2708 = vmatprep.mubr.f32.mxu0 %v1986
  %2709 = vmatmul.mubr.f32.gmra.mrb[0].mxu0 %v1985
  %v2710 = vpop.f32.mrb[0].mxu0
  %v2711 = vadd.f32 %v2326, %v2710
  %v2712 = vpop.f32.mrb[0].mxu0
  %2713 = vmatprep.mubr.f32.mxu0 %v1990
  %2714 = vmatmul.mubr.f32.gmra.mrb[0].mxu0 %v1989
  %v2715 = vpop.f32.mrb[0].mxu0
  %v2716 = vadd.f32 %v2331, %v2715
  %v2717 = vpop.f32.mrb[0].mxu0
  %2718 = vmatprep.mubr.f32.mxu0 %v1994
  %2719 = vmatmul.mubr.f32.gmra.mrb[0].mxu0 %v1993
  %v2720 = vpop.f32.mrb[0].mxu0
  %v2721 = vadd.f32 %v2336, %v2720
  %v2722 = vpop.f32.mrb[0].mxu0
  %2723 = vmatprep.mubr.f32.mxu0 %v1998
  %2724 = vmatmul.mubr.f32.gmra.mrb[0].mxu0 %v1997
  %v2725 = vpop.f32.mrb[0].mxu0
  %v2726 = vadd.f32 %v2341, %v2725
  %v2727 = vpop.f32.mrb[0].mxu0
  %2728 = vmatprep.mubr.f32.mxu0 %v2002
  %2729 = vmatmul.mubr.f32.gmra.mrb[0].mxu0 %v2001
  %v2730 = vpop.f32.mrb[0].mxu0
  %v2731 = vadd.f32 %v2346, %v2730
  %v2732 = vpop.f32.mrb[0].mxu0
  %2733 = vmatprep.mubr.f32.mxu0 %v2006
  %2734 = vmatmul.mubr.f32.gmra.mrb[0].mxu0 %v2005
  %v2735 = vpop.f32.mrb[0].mxu0
  %v2736 = vadd.f32 %v2351, %v2735
  %v2737 = vpop.f32.mrb[0].mxu0
  %2738 = vmatprep.mubr.f32.mxu0 %v2010
  %2739 = vmatmul.mubr.f32.gmra.mrb[0].mxu0 %v2009
  %v2740 = vpop.f32.mrb[0].mxu0
  %v2741 = vadd.f32 %v2356, %v2740
  %v2742 = vpop.f32.mrb[0].mxu0
  %2743 = vmatprep.mubr.f32.mxu0 %v2014
  %2744 = vmatmul.mubr.f32.gmra.mrb[0].mxu0 %v2013
  %v2745 = vpop.f32.mrb[0].mxu0
  %v2746 = vadd.f32 %v2361, %v2745
  %v2747 = vpop.f32.mrb[0].mxu0
  %2748 = vmatprep.mubr.f32.mxu0 %v2018
  %2749 = vmatmul.mubr.f32.gmra.mrb[0].mxu0 %v2017
  %v2750 = vpop.f32.mrb[0].mxu0
  %v2751 = vadd.f32 %v2366, %v2750
  %v2752 = vpop.f32.mrb[0].mxu0
  %2753 = vmatprep.mubr.f32.mxu0 %v2022
  %2754 = vmatmul.mubr.f32.gmra.mrb[0].mxu0 %v2021
  %v2755 = vpop.f32.mrb[0].mxu0
  %v2756 = vadd.f32 %v2371, %v2755
  %v2757 = vpop.f32.mrb[0].mxu0
  %2758 = vmatprep.mubr.f32.mxu0 %v2026
  %2759 = vmatmul.mubr.f32.gmra.mrb[0].mxu0 %v2025
  %v2760 = vpop.f32.mrb[0].mxu0
  %v2761 = vadd.f32 %v2376, %v2760
  %v2762 = vpop.f32.mrb[0].mxu0
  %2763 = vmatprep.mubr.f32.mxu0 %v2030
  %2764 = vmatmul.mubr.f32.gmra.mrb[0].mxu0 %v2029
  %v2765 = vpop.f32.mrb[0].mxu0
  %v2766 = vadd.f32 %v2381, %v2765
  %v2767 = vpop.f32.mrb[0].mxu0
  %2768 = vmatprep.mubr.f32.mxu0 %v2034
  %2769 = vmatmul.mubr.f32.gmra.mrb[0].mxu0 %v2033
  %v2770 = vpop.f32.mrb[0].mxu0
  %v2771 = vadd.f32 %v2386, %v2770
  %v2772 = vpop.f32.mrb[0].mxu0
  %2773 = vmatprep.mubr.f32.mxu0 %v2038
  %2774 = vmatmul.mubr.f32.gmra.mrb[0].mxu0 %v2037
  %v2775 = vpop.f32.mrb[0].mxu0
  %v2776 = vadd.f32 %v2391, %v2775
  %v2777 = vpop.f32.mrb[0].mxu0
  %2778 = vmatprep.mubr.f32.mxu0 %v2042
  %2779 = vmatmul.mubr.f32.gmra.mrb[0].mxu0 %v2041
  %v2780 = vpop.f32.mrb[0].mxu0
  %v2781 = vadd.f32 %v2396, %v2780
  %v2782 = vpop.f32.mrb[0].mxu0
  %2783 = vmatprep.mubr.f32.mxu0 %v2046
  %2784 = vmatmul.mubr.f32.gmra.mrb[0].mxu0 %v2045
  %v2785 = vpop.f32.mrb[0].mxu0
  %v2786 = vadd.f32 %v2401, %v2785
  %v2787 = vpop.f32.mrb[0].mxu0
  %2788 = vmatprep.mubr.f32.mxu0 %v2050
  %2789 = vmatmul.mubr.f32.gmra.mrb[0].mxu0 %v2049
  %v2790 = vpop.f32.mrb[0].mxu0
  %v2791 = vadd.f32 %v2406, %v2790
  %v2792 = vpop.f32.mrb[0].mxu0
  %2793 = vmatprep.mubr.f32.mxu0 %v2054
  %2794 = vmatmul.mubr.f32.gmra.mrb[0].mxu0 %v2053
  %v2795 = vpop.f32.mrb[0].mxu0
  %v2796 = vadd.f32 %v2411, %v2795
  %v2797 = vpop.f32.mrb[0].mxu0
  %2798 = vmatprep.mubr.f32.mxu0 %v2058
  %2799 = vmatmul.mubr.f32.gmra.mrb[0].mxu0 %v2057
  %v2800 = vpop.f32.mrb[0].mxu0
  %v2801 = vadd.f32 %v2416, %v2800
  %v2802 = vpop.f32.mrb[0].mxu0
  %2803 = vmatprep.mubr.f32.mxu0 %v2062
  %2804 = vmatmul.mubr.f32.gmra.mrb[0].mxu0 %v2061
  %v2805 = vpop.f32.mrb[0].mxu0
  %v2806 = vadd.f32 %v2421, %v2805
  %v2807 = vpop.f32.mrb[0].mxu0
  %2808 = vmatprep.mubr.f32.mxu0 %v2066
  %2809 = vmatmul.mubr.f32.gmra.mrb[0].mxu0 %v2065
  %v2810 = vpop.f32.mrb[0].mxu0
  %v2811 = vadd.f32 %v2426, %v2810
  %v2812 = vpop.f32.mrb[0].mxu0
  %2813 = vmatprep.mubr.f32.mxu0 %v2070
  %2814 = vmatmul.mubr.f32.gmra.mrb[0].mxu0 %v2069
  %v2815 = vpop.f32.mrb[0].mxu0
  %v2816 = vadd.f32 %v2431, %v2815
  %v2817 = vpop.f32.mrb[0].mxu0
  %2818 = vmatprep.mubr.f32.mxu0 %v2074
  %2819 = vmatmul.mubr.f32.gmra.mrb[0].mxu0 %v2073
  %v2820 = vpop.f32.mrb[0].mxu0
  %v2821 = vadd.f32 %v2436, %v2820
  %v2822 = vpop.f32.mrb[0].mxu0
  %2823 = vmatprep.mubr.f32.mxu0 %v2078
  %2824 = vmatmul.mubr.f32.gmra.mrb[0].mxu0 %v2077
  %v2825 = vpop.f32.mrb[0].mxu0
  %v2826 = vadd.f32 %v2441, %v2825
  %v2827 = vpop.f32.mrb[0].mxu0
  %2828 = vmatprep.mubr.f32.mxu0 %v2082
  %2829 = vmatmul.mubr.f32.gmra.mrb[0].mxu0 %v2081
  %v2830 = vpop.f32.mrb[0].mxu0
  %v2831 = vadd.f32 %v2446, %v2830
  %v2832 = vpop.f32.mrb[0].mxu0
  %2833 = vmatprep.mubr.f32.mxu0 %v2086
  %2834 = vmatmul.mubr.f32.gmra.mrb[0].mxu0 %v2085
  %v2835 = vpop.f32.mrb[0].mxu0
  %v2836 = vadd.f32 %v2451, %v2835
  %v2837 = vpop.f32.mrb[0].mxu0
  %2838 = vmatprep.mubr.f32.mxu0 %v2090
  %2839 = vmatmul.mubr.f32.gmra.mrb[0].mxu0 %v2089
  %v2840 = vpop.f32.mrb[0].mxu0
  %v2841 = vadd.f32 %v2456, %v2840
  %v2842 = vpop.f32.mrb[0].mxu0
  %2843 = vmatprep.mubr.f32.mxu0 %v2094
  %2844 = vmatmul.mubr.f32.gmra.mrb[0].mxu0 %v2093
  %v2845 = vpop.f32.mrb[0].mxu0
  %v2846 = vadd.f32 %v2461, %v2845
  %v2847 = vpop.f32.mrb[0].mxu0
  %2848 = vmatprep.mubr.f32.mxu0 %v2098
  %2849 = vmatmul.mubr.f32.gmra.mrb[0].mxu0 %v2097
  %v2850 = vpop.f32.mrb[0].mxu0
  %v2851 = vadd.f32 %v2466, %v2850
  %v2852 = vpop.f32.mrb[0].mxu0
  %2853 = vmatprep.mubr.f32.mxu0 %v2102
  %2854 = vmatmul.mubr.f32.gmra.mrb[0].mxu0 %v2101
  %v2855 = vpop.f32.mrb[0].mxu0
  %v2856 = vadd.f32 %v2471, %v2855
  %v2857 = vpop.f32.mrb[0].mxu0
  %2858 = vmatprep.mubr.f32.mxu0 %v2106
  %2859 = vmatmul.mubr.f32.gmra.mrb[0].mxu0 %v2105
  %v2860 = vpop.f32.mrb[0].mxu0
  %v2861 = vadd.f32 %v2476, %v2860
  %v2862 = vpop.f32.mrb[0].mxu0
  %2863 = vmatprep.mubr.f32.mxu0 %v2110
  %2864 = vmatmul.mubr.f32.gmra.mrb[0].mxu0 %v2109
  %v2865 = vpop.f32.mrb[0].mxu0
  %v2866 = vadd.f32 %v2481, %v2865
  %v2867 = vpop.f32.mrb[0].mxu0
  %2868 = vmatprep.mubr.f32.mxu0 %v2114
  %2869 = vmatmul.mubr.f32.gmra.mrb[0].mxu0 %v2113
  %v2870 = vpop.f32.mrb[0].mxu0
  %v2871 = vadd.f32 %v2486, %v2870
  %v2872 = vpop.f32.mrb[0].mxu0
  %2873 = vmatprep.mubr.f32.mxu0 %v2118
  %2874 = vmatmul.mubr.f32.gmra.mrb[0].mxu0 %v2117
  %v2875 = vpop.f32.mrb[0].mxu0
  %v2876 = vadd.f32 %v2491, %v2875
  %v2877 = vpop.f32.mrb[0].mxu0
  %2878 = vmatprep.mubr.f32.mxu0 %v2122
  %2879 = vmatmul.mubr.f32.gmra.mrb[0].mxu0 %v2121
  %v2880 = vpop.f32.mrb[0].mxu0
  %v2881 = vadd.f32 %v2496, %v2880
  %v2882 = vpop.f32.mrb[0].mxu0
  %2883 = vmatprep.mubr.f32.mxu0 %v2126
  %2884 = vmatmul.mubr.f32.gmra.mrb[0].mxu0 %v2125
  %v2885 = vpop.f32.mrb[0].mxu0
  %v2886 = vadd.f32 %v2501, %v2885
  %v2887 = vpop.f32.mrb[0].mxu0
  %2888 = vmatprep.mubr.f32.mxu0 %v2130
  %2889 = vmatmul.mubr.f32.gmra.mrb[0].mxu0 %v2129
  %v2890 = vpop.f32.mrb[0].mxu0
  %v2891 = vadd.f32 %v2506, %v2890
  %v2892 = vpop.f32.mrb[0].mxu0
  %2893 = vmatprep.mubr.f32.mxu0 %v2134
  %2894 = vmatmul.mubr.f32.gmra.mrb[0].mxu0 %v2133
  %v2895 = vpop.f32.mrb[0].mxu0
  %v2896 = vadd.f32 %v2511, %v2895
  %v2897 = vpop.f32.mrb[0].mxu0
  %2898 = vmatprep.mubr.f32.mxu0 %v2138
  %2899 = vmatmul.mubr.f32.gmra.mrb[0].mxu0 %v2137
  %v2900 = vpop.f32.mrb[0].mxu0
  %v2901 = vadd.f32 %v2516, %v2900
  %v2902 = vpop.f32.mrb[0].mxu0
  %2903 = vmatprep.mubr.f32.mxu0 %v2142
  %2904 = vmatmul.mubr.f32.gmra.mrb[0].mxu0 %v2141
  %v2905 = vpop.f32.mrb[0].mxu0
  %v2906 = vadd.f32 %v2521, %v2905
  %v2907 = vpop.f32.mrb[0].mxu0
  %2908 = vmatprep.mubr.f32.mxu0 %v2146
  %2909 = vmatmul.mubr.f32.gmra.mrb[0].mxu0 %v2145
  %v2910 = vpop.f32.mrb[0].mxu0
  %v2911 = vadd.f32 %v2526, %v2910
  %v2912 = vpop.f32.mrb[0].mxu0
  %2913 = vmatprep.mubr.f32.mxu0 %v2150
  %2914 = vmatmul.mubr.f32.gmra.mrb[0].mxu0 %v2149
  %v2915 = vpop.f32.mrb[0].mxu0
  %v2916 = vadd.f32 %v2531, %v2915
  %v2917 = vpop.f32.mrb[0].mxu0
  %2918 = vmatprep.mubr.f32.mxu0 %v2154
  %2919 = vmatmul.mubr.f32.gmra.mrb[0].mxu0 %v2153
  %v2920 = vpop.f32.mrb[0].mxu0
  %v2921 = vadd.f32 %v2536, %v2920
  %v2922 = vpop.f32.mrb[0].mxu0
  %2923 = vmatprep.mubr.f32.mxu0 %v2158
  %2924 = vmatmul.mubr.f32.gmra.mrb[0].mxu0 %v2157
  %v2925 = vpop.f32.mrb[0].mxu0
  %v2926 = vadd.f32 %v2541, %v2925
  %v2927 = vpop.f32.mrb[0].mxu0
  %2928 = vdwg.mxu0
  %v2929 = vmul.f32 %v2611, 0.9
  %v2930 = vmul.f32 %v2616, 0.9
  %v2931 = vmul.f32 %v2621, 0.9
  %v2932 = vmul.f32 %v2626, 0.9
  %v2933 = vmul.f32 %v2631, 0.9
  %v2934 = vmul.f32 %v2636, 0.9
  %v2935 = vmul.f32 %v2641, 0.9
  %v2936 = vmul.f32 %v2646, 0.9
  %v2937 = vmul.f32 %v2651, 0.9
  %v2938 = vmul.f32 %v2656, 0.9
  %v2939 = vmul.f32 %v2661, 0.9
  %v2940 = vmul.f32 %v2666, 0.9
  %v2941 = vmul.f32 %v2671, 0.9
  %v2942 = vmul.f32 %v2676, 0.9
  %v2943 = vmul.f32 %v2681, 0.9
  %v2944 = vmul.f32 %v2686, 0.9
  %v2945 = vmul.f32 %v2691, 0.9
  %v2946 = vmul.f32 %v2696, 0.9
  %v2947 = vmul.f32 %v2701, 0.9
  %v2948 = vmul.f32 %v2706, 0.9
  %v2949 = vmul.f32 %v2711, 0.9
  %v2950 = vmul.f32 %v2716, 0.9
  %v2951 = vmul.f32 %v2721, 0.9
  %v2952 = vmul.f32 %v2726, 0.9
  %v2953 = vmul.f32 %v2731, 0.9
  %v2954 = vmul.f32 %v2736, 0.9
  %v2955 = vmul.f32 %v2741, 0.9
  %v2956 = vmul.f32 %v2746, 0.9
  %v2957 = vmul.f32 %v2751, 0.9
  %v2958 = vmul.f32 %v2756, 0.9
  %v2959 = vmul.f32 %v2761, 0.9
  %v2960 = vmul.f32 %v2766, 0.9
  %v2961 = vmul.f32 %v2771, 0.9
  %v2962 = vmul.f32 %v2776, 0.9
  %v2963 = vmul.f32 %v2781, 0.9
  %v2964 = vmul.f32 %v2786, 0.9
  %v2965 = vmul.f32 %v2791, 0.9
  %v2966 = vmul.f32 %v2796, 0.9
  %v2967 = vmul.f32 %v2801, 0.9
  %v2968 = vmul.f32 %v2806, 0.9
  %v2969 = vmul.f32 %v2811, 0.9
  %v2970 = vmul.f32 %v2816, 0.9
  %v2971 = vmul.f32 %v2821, 0.9
  %v2972 = vmul.f32 %v2826, 0.9
  %v2973 = vmul.f32 %v2831, 0.9
  %v2974 = vmul.f32 %v2836, 0.9
  %v2975 = vmul.f32 %v2841, 0.9
  %v2976 = vmul.f32 %v2846, 0.9
  %v2977 = vmul.f32 %v2851, 0.9
  %v2978 = vmul.f32 %v2856, 0.9
  %v2979 = vmul.f32 %v2861, 0.9
  %v2980 = vmul.f32 %v2866, 0.9
  %v2981 = vmul.f32 %v2871, 0.9
  %v2982 = vmul.f32 %v2876, 0.9
  %v2983 = vmul.f32 %v2881, 0.9
  %v2984 = vmul.f32 %v2886, 0.9
  %v2985 = vmul.f32 %v2891, 0.9
  %v2986 = vmul.f32 %v2896, 0.9
  %v2987 = vmul.f32 %v2901, 0.9
  %v2988 = vmul.f32 %v2906, 0.9
  %v2989 = vmul.f32 %v2911, 0.9
  %v2990 = vmul.f32 %v2916, 0.9
  %v2991 = vmul.f32 %v2921, 0.9
  %v2992 = vmul.f32 %v2926, 0.9
  %v2993 = vtanh.pop %v2929
  %v2994 = vtanh.pop %v2930
  %v2995 = vtanh.pop %v2931
  %v2996 = vtanh.pop %v2932
  %v2997 = vtanh.pop %v2933
  %v2998 = vtanh.pop %v2934
  %v2999 = vtanh.pop %v2935
  %v3000 = vtanh.pop %v2936
  %v3001 = vtanh.pop %v2937
  %v3002 = vtanh.pop %v2938
  %v3003 = vtanh.pop %v2939
  %v3004 = vtanh.pop %v2940
  %v3005 = vtanh.pop %v2941
  %v3006 = vtanh.pop %v2942
  %v3007 = vtanh.pop %v2943
  %v3008 = vtanh.pop %v2944
  %v3009 = vtanh.pop %v2945
  %v3010 = vtanh.pop %v2946
  %v3011 = vtanh.pop %v2947
  %v3012 = vtanh.pop %v2948
  %v3013 = vtanh.pop %v2949
  %v3014 = vtanh.pop %v2950
  %v3015 = vtanh.pop %v2951
  %v3016 = vtanh.pop %v2952
  %v3017 = vtanh.pop %v2953
  %v3018 = vtanh.pop %v2954
  %v3019 = vtanh.pop %v2955
  %v3020 = vtanh.pop %v2956
  %v3021 = vtanh.pop %v2957
  %v3022 = vtanh.pop %v2958
  %v3023 = vtanh.pop %v2959
  %v3024 = vtanh.pop %v2960
  %v3025 = vtanh.pop %v2961
  %v3026 = vtanh.pop %v2962
  %v3027 = vtanh.pop %v2963
  %v3028 = vtanh.pop %v2964
  %v3029 = vtanh.pop %v2965
  %v3030 = vtanh.pop %v2966
  %v3031 = vtanh.pop %v2967
  %v3032 = vtanh.pop %v2968
  %v3033 = vtanh.pop %v2969
  %v3034 = vtanh.pop %v2970
  %v3035 = vtanh.pop %v2971
  %v3036 = vtanh.pop %v2972
  %v3037 = vtanh.pop %v2973
  %v3038 = vtanh.pop %v2974
  %v3039 = vtanh.pop %v2975
  %v3040 = vtanh.pop %v2976
  %v3041 = vtanh.pop %v2977
  %v3042 = vtanh.pop %v2978
  %v3043 = vtanh.pop %v2979
  %v3044 = vtanh.pop %v2980
  %v3045 = vtanh.pop %v2981
  %v3046 = vtanh.pop %v2982
  %v3047 = vtanh.pop %v2983
  %v3048 = vtanh.pop %v2984
  %v3049 = vtanh.pop %v2985
  %v3050 = vtanh.pop %v2986
  %v3051 = vtanh.pop %v2987
  %v3052 = vtanh.pop %v2988
  %v3053 = vtanh.pop %v2989
  %v3054 = vtanh.pop %v2990
  %v3055 = vtanh.pop %v2991
  %v3056 = vtanh.pop %v2992
  %3057 = vmatprep.subr.mxu0 0.0
  %3058 = vmatpush1.msra.mxu0 %v2993
  %3059 = vmatprep.subr.mxu0 0.0
  %3060 = vmatpush1.msra.mxu0 %v2994
  %3061 = vmatprep.subr.mxu0 0.0
  %3062 = vmatpush1.msra.mxu0 %v2995
  %3063 = vmatprep.subr.mxu0 0.0
  %3064 = vmatpush1.msra.mxu0 %v2996
  %3065 = vmatprep.subr.mxu0 0.0
  %3066 = vmatpush1.msra.mxu0 %v2997
  %3067 = vmatprep.subr.mxu0 0.0
  %3068 = vmatpush1.msra.mxu0 %v2998
  %3069 = vmatprep.subr.mxu0 0.0
  %3070 = vmatpush1.msra.mxu0 %v2999
  %3071 = vmatprep.subr.mxu0 0.0
  %3072 = vmatpush1.msra.mxu0 %v3000
  %3073 = vmatprep.subr.mxu0 0.0
  %3074 = vmatpush1.msra.mxu0 %v3001
  %3075 = vmatprep.subr.mxu0 0.0
  %3076 = vmatpush1.msra.mxu0 %v3002
  %3077 = vmatprep.subr.mxu0 0.0
  %3078 = vmatpush1.msra.mxu0 %v3003
  %3079 = vmatprep.subr.mxu0 0.0
  %3080 = vmatpush1.msra.mxu0 %v3004
  %3081 = vmatprep.subr.mxu0 0.0
  %3082 = vmatpush1.msra.mxu0 %v3005
  %3083 = vmatprep.subr.mxu0 0.0
  %3084 = vmatpush1.msra.mxu0 %v3006
  %3085 = vmatprep.subr.mxu0 0.0
  %3086 = vmatpush1.msra.mxu0 %v3007
  %3087 = vmatprep.subr.mxu0 0.0
  %3088 = vmatpush1.msra.mxu0 %v3008
  %3089 = vmatprep.subr.mxu0 0.0
  %3090 = vmatpush1.msra.mxu0 %v3009
  %3091 = vmatprep.subr.mxu0 0.0
  %3092 = vmatpush1.msra.mxu0 %v3010
  %3093 = vmatprep.subr.mxu0 0.0
  %3094 = vmatpush1.msra.mxu0 %v3011
  %3095 = vmatprep.subr.mxu0 0.0
  %3096 = vmatpush1.msra.mxu0 %v3012
  %3097 = vmatprep.subr.mxu0 0.0
  %3098 = vmatpush1.msra.mxu0 %v3013
  %3099 = vmatprep.subr.mxu0 0.0
  %3100 = vmatpush1.msra.mxu0 %v3014
  %3101 = vmatprep.subr.mxu0 0.0
  %3102 = vmatpush1.msra.mxu0 %v3015
  %3103 = vmatprep.subr.mxu0 0.0
  %3104 = vmatpush1.msra.mxu0 %v3016
  %3105 = vmatprep.subr.mxu0 0.0
  %3106 = vmatpush1.msra.mxu0 %v3017
  %3107 = vmatprep.subr.mxu0 0.0
  %3108 = vmatpush1.msra.mxu0 %v3018
  %3109 = vmatprep.subr.mxu0 0.0
  %3110 = vmatpush1.msra.mxu0 %v3019
  %3111 = vmatprep.subr.mxu0 0.0
  %3112 = vmatpush1.msra.mxu0 %v3020
  %3113 = vmatprep.subr.mxu0 0.0
  %3114 = vmatpush1.msra.mxu0 %v3021
  %3115 = vmatprep.subr.mxu0 0.0
  %3116 = vmatpush1.msra.mxu0 %v3022
  %3117 = vmatprep.subr.mxu0 0.0
  %3118 = vmatpush1.msra.mxu0 %v3023
  %3119 = vmatprep.subr.mxu0 0.0
  %3120 = vmatpush1.msra.mxu0 %v3024
  %3121 = vmatprep.mubr.f32.mxu0 %v1904
  %3122 = vmatmul.mubr.f32.gmra.mrb[0].mxu0 %v1903
  %v3123 = vpop.f32.mrb[0].mxu0
  %v3124 = vadd.f32 0.0, %v3123
  %v3125 = vpop.f32.mrb[0].mxu0
  %3126 = vmatprep.mubr.f32.mxu0 %v1908
  %3127 = vmatmul.mubr.f32.gmra.mrb[0].mxu0 %v1907
  %v3128 = vpop.f32.mrb[0].mxu0
  %v3129 = vadd.f32 0.0, %v3128
  %v3130 = vpop.f32.mrb[0].mxu0
  %3131 = vmatprep.mubr.f32.mxu0 %v1912
  %3132 = vmatmul.mubr.f32.gmra.mrb[0].mxu0 %v1911
  %v3133 = vpop.f32.mrb[0].mxu0
  %v3134 = vadd.f32 0.0, %v3133
  %v3135 = vpop.f32.mrb[0].mxu0
  %3136 = vmatprep.mubr.f32.mxu0 %v1916
  %3137 = vmatmul.mubr.f32.gmra.mrb[0].mxu0 %v1915
  %v3138 = vpop.f32.mrb[0].mxu0
  %v3139 = vadd.f32 0.0, %v3138
  %v3140 = vpop.f32.mrb[0].mxu0
  %3141 = vmatprep.mubr.f32.mxu0 %v1920
  %3142 = vmatmul.mubr.f32.gmra.mrb[0].mxu0 %v1919
  %v3143 = vpop.f32.mrb[0].mxu0
  %v3144 = vadd.f32 0.0, %v3143
  %v3145 = vpop.f32.mrb[0].mxu0
  %3146 = vmatprep.mubr.f32.mxu0 %v1924
  %3147 = vmatmul.mubr.f32.gmra.mrb[0].mxu0 %v1923
  %v3148 = vpop.f32.mrb[0].mxu0
  %v3149 = vadd.f32 0.0, %v3148
  %v3150 = vpop.f32.mrb[0].mxu0
  %3151 = vmatprep.mubr.f32.mxu0 %v1928
  %3152 = vmatmul.mubr.f32.gmra.mrb[0].mxu0 %v1927
  %v3153 = vpop.f32.mrb[0].mxu0
  %v3154 = vadd.f32 0.0, %v3153
  %v3155 = vpop.f32.mrb[0].mxu0
  %3156 = vmatprep.mubr.f32.mxu0 %v1932
  %3157 = vmatmul.mubr.f32.gmra.mrb[0].mxu0 %v1931
  %v3158 = vpop.f32.mrb[0].mxu0
  %v3159 = vadd.f32 0.0, %v3158
  %v3160 = vpop.f32.mrb[0].mxu0
  %3161 = vmatprep.mubr.f32.mxu0 %v1936
  %3162 = vmatmul.mubr.f32.gmra.mrb[0].mxu0 %v1935
  %v3163 = vpop.f32.mrb[0].mxu0
  %v3164 = vadd.f32 0.0, %v3163
  %v3165 = vpop.f32.mrb[0].mxu0
  %3166 = vmatprep.mubr.f32.mxu0 %v1940
  %3167 = vmatmul.mubr.f32.gmra.mrb[0].mxu0 %v1939
  %v3168 = vpop.f32.mrb[0].mxu0
  %v3169 = vadd.f32 0.0, %v3168
  %v3170 = vpop.f32.mrb[0].mxu0
  %3171 = vmatprep.mubr.f32.mxu0 %v1944
  %3172 = vmatmul.mubr.f32.gmra.mrb[0].mxu0 %v1943
  %v3173 = vpop.f32.mrb[0].mxu0
  %v3174 = vadd.f32 0.0, %v3173
  %v3175 = vpop.f32.mrb[0].mxu0
  %3176 = vmatprep.mubr.f32.mxu0 %v1948
  %3177 = vmatmul.mubr.f32.gmra.mrb[0].mxu0 %v1947
  %v3178 = vpop.f32.mrb[0].mxu0
  %v3179 = vadd.f32 0.0, %v3178
  %v3180 = vpop.f32.mrb[0].mxu0
  %3181 = vmatprep.mubr.f32.mxu0 %v1952
  %3182 = vmatmul.mubr.f32.gmra.mrb[0].mxu0 %v1951
  %v3183 = vpop.f32.mrb[0].mxu0
  %v3184 = vadd.f32 0.0, %v3183
  %v3185 = vpop.f32.mrb[0].mxu0
  %3186 = vmatprep.mubr.f32.mxu0 %v1956
  %3187 = vmatmul.mubr.f32.gmra.mrb[0].mxu0 %v1955
  %v3188 = vpop.f32.mrb[0].mxu0
  %v3189 = vadd.f32 0.0, %v3188
  %v3190 = vpop.f32.mrb[0].mxu0
  %3191 = vmatprep.mubr.f32.mxu0 %v1960
  %3192 = vmatmul.mubr.f32.gmra.mrb[0].mxu0 %v1959
  %v3193 = vpop.f32.mrb[0].mxu0
  %v3194 = vadd.f32 0.0, %v3193
  %v3195 = vpop.f32.mrb[0].mxu0
  %3196 = vmatprep.mubr.f32.mxu0 %v1964
  %3197 = vmatmul.mubr.f32.gmra.mrb[0].mxu0 %v1963
  %v3198 = vpop.f32.mrb[0].mxu0
  %v3199 = vadd.f32 0.0, %v3198
  %v3200 = vpop.f32.mrb[0].mxu0
  %3201 = vmatprep.mubr.f32.mxu0 %v1968
  %3202 = vmatmul.mubr.f32.gmra.mrb[0].mxu0 %v1967
  %v3203 = vpop.f32.mrb[0].mxu0
  %v3204 = vadd.f32 0.0, %v3203
  %v3205 = vpop.f32.mrb[0].mxu0
  %3206 = vmatprep.mubr.f32.mxu0 %v1972
  %3207 = vmatmul.mubr.f32.gmra.mrb[0].mxu0 %v1971
  %v3208 = vpop.f32.mrb[0].mxu0
  %v3209 = vadd.f32 0.0, %v3208
  %v3210 = vpop.f32.mrb[0].mxu0
  %3211 = vmatprep.mubr.f32.mxu0 %v1976
  %3212 = vmatmul.mubr.f32.gmra.mrb[0].mxu0 %v1975
  %v3213 = vpop.f32.mrb[0].mxu0
  %v3214 = vadd.f32 0.0, %v3213
  %v3215 = vpop.f32.mrb[0].mxu0
  %3216 = vmatprep.mubr.f32.mxu0 %v1980
  %3217 = vmatmul.mubr.f32.gmra.mrb[0].mxu0 %v1979
  %v3218 = vpop.f32.mrb[0].mxu0
  %v3219 = vadd.f32 0.0, %v3218
  %v3220 = vpop.f32.mrb[0].mxu0
  %3221 = vmatprep.mubr.f32.mxu0 %v1984
  %3222 = vmatmul.mubr.f32.gmra.mrb[0].mxu0 %v1983
  %v3223 = vpop.f32.mrb[0].mxu0
  %v3224 = vadd.f32 0.0, %v3223
  %v3225 = vpop.f32.mrb[0].mxu0
  %3226 = vmatprep.mubr.f32.mxu0 %v1988
  %3227 = vmatmul.mubr.f32.gmra.mrb[0].mxu0 %v1987
  %v3228 = vpop.f32.mrb[0].mxu0
  %v3229 = vadd.f32 0.0, %v3228
  %v3230 = vpop.f32.mrb[0].mxu0
  %3231 = vmatprep.mubr.f32.mxu0 %v1992
  %3232 = vmatmul.mubr.f32.gmra.mrb[0].mxu0 %v1991
  %v3233 = vpop.f32.mrb[0].mxu0
  %v3234 = vadd.f32 0.0, %v3233
  %v3235 = vpop.f32.mrb[0].mxu0
  %3236 = vmatprep.mubr.f32.mxu0 %v1996
  %3237 = vmatmul.mubr.f32.gmra.mrb[0].mxu0 %v1995
  %v3238 = vpop.f32.mrb[0].mxu0
  %v3239 = vadd.f32 0.0, %v3238
  %v3240 = vpop.f32.mrb[0].mxu0
  %3241 = vmatprep.mubr.f32.mxu0 %v2000
  %3242 = vmatmul.mubr.f32.gmra.mrb[0].mxu0 %v1999
  %v3243 = vpop.f32.mrb[0].mxu0
  %v3244 = vadd.f32 0.0, %v3243
  %v3245 = vpop.f32.mrb[0].mxu0
  %3246 = vmatprep.mubr.f32.mxu0 %v2004
  %3247 = vmatmul.mubr.f32.gmra.mrb[0].mxu0 %v2003
  %v3248 = vpop.f32.mrb[0].mxu0
  %v3249 = vadd.f32 0.0, %v3248
  %v3250 = vpop.f32.mrb[0].mxu0
  %3251 = vmatprep.mubr.f32.mxu0 %v2008
  %3252 = vmatmul.mubr.f32.gmra.mrb[0].mxu0 %v2007
  %v3253 = vpop.f32.mrb[0].mxu0
  %v3254 = vadd.f32 0.0, %v3253
  %v3255 = vpop.f32.mrb[0].mxu0
  %3256 = vmatprep.mubr.f32.mxu0 %v2012
  %3257 = vmatmul.mubr.f32.gmra.mrb[0].mxu0 %v2011
  %v3258 = vpop.f32.mrb[0].mxu0
  %v3259 = vadd.f32 0.0, %v3258
  %v3260 = vpop.f32.mrb[0].mxu0
  %3261 = vmatprep.mubr.f32.mxu0 %v2016
  %3262 = vmatmul.mubr.f32.gmra.mrb[0].mxu0 %v2015
  %v3263 = vpop.f32.mrb[0].mxu0
  %v3264 = vadd.f32 0.0, %v3263
  %v3265 = vpop.f32.mrb[0].mxu0
  %3266 = vmatprep.mubr.f32.mxu0 %v2020
  %3267 = vmatmul.mubr.f32.gmra.mrb[0].mxu0 %v2019
  %v3268 = vpop.f32.mrb[0].mxu0
  %v3269 = vadd.f32 0.0, %v3268
  %v3270 = vpop.f32.mrb[0].mxu0
  %3271 = vmatprep.mubr.f32.mxu0 %v2024
  %3272 = vmatmul.mubr.f32.gmra.mrb[0].mxu0 %v2023
  %v3273 = vpop.f32.mrb[0].mxu0
  %v3274 = vadd.f32 0.0, %v3273
  %v3275 = vpop.f32.mrb[0].mxu0
  %3276 = vmatprep.mubr.f32.mxu0 %v2028
  %3277 = vmatmul.mubr.f32.gmra.mrb[0].mxu0 %v2027
  %v3278 = vpop.f32.mrb[0].mxu0
  %v3279 = vadd.f32 0.0, %v3278
  %v3280 = vpop.f32.mrb[0].mxu0
  %3281 = vmatprep.mubr.f32.mxu0 %v2032
  %3282 = vmatmul.mubr.f32.gmra.mrb[0].mxu0 %v2031
  %v3283 = vpop.f32.mrb[0].mxu0
  %v3284 = vadd.f32 0.0, %v3283
  %v3285 = vpop.f32.mrb[0].mxu0
  %3286 = vmatprep.mubr.f32.mxu0 %v2036
  %3287 = vmatmul.mubr.f32.gmra.mrb[0].mxu0 %v2035
  %v3288 = vpop.f32.mrb[0].mxu0
  %v3289 = vadd.f32 0.0, %v3288
  %v3290 = vpop.f32.mrb[0].mxu0
  %3291 = vmatprep.mubr.f32.mxu0 %v2040
  %3292 = vmatmul.mubr.f32.gmra.mrb[0].mxu0 %v2039
  %v3293 = vpop.f32.mrb[0].mxu0
  %v3294 = vadd.f32 0.0, %v3293
  %v3295 = vpop.f32.mrb[0].mxu0
  %3296 = vmatprep.mubr.f32.mxu0 %v2044
  %3297 = vmatmul.mubr.f32.gmra.mrb[0].mxu0 %v2043
  %v3298 = vpop.f32.mrb[0].mxu0
  %v3299 = vadd.f32 0.0, %v3298
  %v3300 = vpop.f32.mrb[0].mxu0
  %3301 = vmatprep.mubr.f32.mxu0 %v2048
  %3302 = vmatmul.mubr.f32.gmra.mrb[0].mxu0 %v2047
  %v3303 = vpop.f32.mrb[0].mxu0
  %v3304 = vadd.f32 0.0, %v3303
  %v3305 = vpop.f32.mrb[0].mxu0
  %3306 = vmatprep.mubr.f32.mxu0 %v2052
  %3307 = vmatmul.mubr.f32.gmra.mrb[0].mxu0 %v2051
  %v3308 = vpop.f32.mrb[0].mxu0
  %v3309 = vadd.f32 0.0, %v3308
  %v3310 = vpop.f32.mrb[0].mxu0
  %3311 = vmatprep.mubr.f32.mxu0 %v2056
  %3312 = vmatmul.mubr.f32.gmra.mrb[0].mxu0 %v2055
  %v3313 = vpop.f32.mrb[0].mxu0
  %v3314 = vadd.f32 0.0, %v3313
  %v3315 = vpop.f32.mrb[0].mxu0
  %3316 = vmatprep.mubr.f32.mxu0 %v2060
  %3317 = vmatmul.mubr.f32.gmra.mrb[0].mxu0 %v2059
  %v3318 = vpop.f32.mrb[0].mxu0
  %v3319 = vadd.f32 0.0, %v3318
  %v3320 = vpop.f32.mrb[0].mxu0
  %3321 = vmatprep.mubr.f32.mxu0 %v2064
  %3322 = vmatmul.mubr.f32.gmra.mrb[0].mxu0 %v2063
  %v3323 = vpop.f32.mrb[0].mxu0
  %v3324 = vadd.f32 0.0, %v3323
  %v3325 = vpop.f32.mrb[0].mxu0
  %3326 = vmatprep.mubr.f32.mxu0 %v2068
  %3327 = vmatmul.mubr.f32.gmra.mrb[0].mxu0 %v2067
  %v3328 = vpop.f32.mrb[0].mxu0
  %v3329 = vadd.f32 0.0, %v3328
  %v3330 = vpop.f32.mrb[0].mxu0
  %3331 = vmatprep.mubr.f32.mxu0 %v2072
  %3332 = vmatmul.mubr.f32.gmra.mrb[0].mxu0 %v2071
  %v3333 = vpop.f32.mrb[0].mxu0
  %v3334 = vadd.f32 0.0, %v3333
  %v3335 = vpop.f32.mrb[0].mxu0
  %3336 = vmatprep.mubr.f32.mxu0 %v2076
  %3337 = vmatmul.mubr.f32.gmra.mrb[0].mxu0 %v2075
  %v3338 = vpop.f32.mrb[0].mxu0
  %v3339 = vadd.f32 0.0, %v3338
  %v3340 = vpop.f32.mrb[0].mxu0
  %3341 = vmatprep.mubr.f32.mxu0 %v2080
  %3342 = vmatmul.mubr.f32.gmra.mrb[0].mxu0 %v2079
  %v3343 = vpop.f32.mrb[0].mxu0
  %v3344 = vadd.f32 0.0, %v3343
  %v3345 = vpop.f32.mrb[0].mxu0
  %3346 = vmatprep.mubr.f32.mxu0 %v2084
  %3347 = vmatmul.mubr.f32.gmra.mrb[0].mxu0 %v2083
  %v3348 = vpop.f32.mrb[0].mxu0
  %v3349 = vadd.f32 0.0, %v3348
  %v3350 = vpop.f32.mrb[0].mxu0
  %3351 = vmatprep.mubr.f32.mxu0 %v2088
  %3352 = vmatmul.mubr.f32.gmra.mrb[0].mxu0 %v2087
  %v3353 = vpop.f32.mrb[0].mxu0
  %v3354 = vadd.f32 0.0, %v3353
  %v3355 = vpop.f32.mrb[0].mxu0
  %3356 = vmatprep.mubr.f32.mxu0 %v2092
  %3357 = vmatmul.mubr.f32.gmra.mrb[0].mxu0 %v2091
  %v3358 = vpop.f32.mrb[0].mxu0
  %v3359 = vadd.f32 0.0, %v3358
  %v3360 = vpop.f32.mrb[0].mxu0
  %3361 = vmatprep.mubr.f32.mxu0 %v2096
  %3362 = vmatmul.mubr.f32.gmra.mrb[0].mxu0 %v2095
  %v3363 = vpop.f32.mrb[0].mxu0
  %v3364 = vadd.f32 0.0, %v3363
  %v3365 = vpop.f32.mrb[0].mxu0
  %3366 = vmatprep.mubr.f32.mxu0 %v2100
  %3367 = vmatmul.mubr.f32.gmra.mrb[0].mxu0 %v2099
  %v3368 = vpop.f32.mrb[0].mxu0
  %v3369 = vadd.f32 0.0, %v3368
  %v3370 = vpop.f32.mrb[0].mxu0
  %3371 = vmatprep.mubr.f32.mxu0 %v2104
  %3372 = vmatmul.mubr.f32.gmra.mrb[0].mxu0 %v2103
  %v3373 = vpop.f32.mrb[0].mxu0
  %v3374 = vadd.f32 0.0, %v3373
  %v3375 = vpop.f32.mrb[0].mxu0
  %3376 = vmatprep.mubr.f32.mxu0 %v2108
  %3377 = vmatmul.mubr.f32.gmra.mrb[0].mxu0 %v2107
  %v3378 = vpop.f32.mrb[0].mxu0
  %v3379 = vadd.f32 0.0, %v3378
  %v3380 = vpop.f32.mrb[0].mxu0
  %3381 = vmatprep.mubr.f32.mxu0 %v2112
  %3382 = vmatmul.mubr.f32.gmra.mrb[0].mxu0 %v2111
  %v3383 = vpop.f32.mrb[0].mxu0
  %v3384 = vadd.f32 0.0, %v3383
  %v3385 = vpop.f32.mrb[0].mxu0
  %3386 = vmatprep.mubr.f32.mxu0 %v2116
  %3387 = vmatmul.mubr.f32.gmra.mrb[0].mxu0 %v2115
  %v3388 = vpop.f32.mrb[0].mxu0
  %v3389 = vadd.f32 0.0, %v3388
  %v3390 = vpop.f32.mrb[0].mxu0
  %3391 = vmatprep.mubr.f32.mxu0 %v2120
  %3392 = vmatmul.mubr.f32.gmra.mrb[0].mxu0 %v2119
  %v3393 = vpop.f32.mrb[0].mxu0
  %v3394 = vadd.f32 0.0, %v3393
  %v3395 = vpop.f32.mrb[0].mxu0
  %3396 = vmatprep.mubr.f32.mxu0 %v2124
  %3397 = vmatmul.mubr.f32.gmra.mrb[0].mxu0 %v2123
  %v3398 = vpop.f32.mrb[0].mxu0
  %v3399 = vadd.f32 0.0, %v3398
  %v3400 = vpop.f32.mrb[0].mxu0
  %3401 = vmatprep.mubr.f32.mxu0 %v2128
  %3402 = vmatmul.mubr.f32.gmra.mrb[0].mxu0 %v2127
  %v3403 = vpop.f32.mrb[0].mxu0
  %v3404 = vadd.f32 0.0, %v3403
  %v3405 = vpop.f32.mrb[0].mxu0
  %3406 = vmatprep.mubr.f32.mxu0 %v2132
  %3407 = vmatmul.mubr.f32.gmra.mrb[0].mxu0 %v2131
  %v3408 = vpop.f32.mrb[0].mxu0
  %v3409 = vadd.f32 0.0, %v3408
  %v3410 = vpop.f32.mrb[0].mxu0
  %3411 = vmatprep.mubr.f32.mxu0 %v2136
  %3412 = vmatmul.mubr.f32.gmra.mrb[0].mxu0 %v2135
  %v3413 = vpop.f32.mrb[0].mxu0
  %v3414 = vadd.f32 0.0, %v3413
  %v3415 = vpop.f32.mrb[0].mxu0
  %3416 = vmatprep.mubr.f32.mxu0 %v2140
  %3417 = vmatmul.mubr.f32.gmra.mrb[0].mxu0 %v2139
  %v3418 = vpop.f32.mrb[0].mxu0
  %v3419 = vadd.f32 0.0, %v3418
  %v3420 = vpop.f32.mrb[0].mxu0
  %3421 = vmatprep.mubr.f32.mxu0 %v2144
  %3422 = vmatmul.mubr.f32.gmra.mrb[0].mxu0 %v2143
  %v3423 = vpop.f32.mrb[0].mxu0
  %v3424 = vadd.f32 0.0, %v3423
  %v3425 = vpop.f32.mrb[0].mxu0
  %3426 = vmatprep.mubr.f32.mxu0 %v2148
  %3427 = vmatmul.mubr.f32.gmra.mrb[0].mxu0 %v2147
  %v3428 = vpop.f32.mrb[0].mxu0
  %v3429 = vadd.f32 0.0, %v3428
  %v3430 = vpop.f32.mrb[0].mxu0
  %3431 = vmatprep.mubr.f32.mxu0 %v2152
  %3432 = vmatmul.mubr.f32.gmra.mrb[0].mxu0 %v2151
  %v3433 = vpop.f32.mrb[0].mxu0
  %v3434 = vadd.f32 0.0, %v3433
  %v3435 = vpop.f32.mrb[0].mxu0
  %3436 = vmatprep.mubr.f32.mxu0 %v2156
  %3437 = vmatmul.mubr.f32.gmra.mrb[0].mxu0 %v2155
  %v3438 = vpop.f32.mrb[0].mxu0
  %v3439 = vadd.f32 0.0, %v3438
  %v3440 = vpop.f32.mrb[0].mxu0
  %3441 = vdwg.mxu0
  %3442 = vmatprep.subr.mxu0 0.0
  %3443 = vmatpush1.msra.mxu0 %v3025
  %3444 = vmatprep.subr.mxu0 0.0
  %3445 = vmatpush1.msra.mxu0 %v3026
  %3446 = vmatprep.subr.mxu0 0.0
  %3447 = vmatpush1.msra.mxu0 %v3027
  %3448 = vmatprep.subr.mxu0 0.0
  %3449 = vmatpush1.msra.mxu0 %v3028
  %3450 = vmatprep.subr.mxu0 0.0
  %3451 = vmatpush1.msra.mxu0 %v3029
  %3452 = vmatprep.subr.mxu0 0.0
  %3453 = vmatpush1.msra.mxu0 %v3030
  %3454 = vmatprep.subr.mxu0 0.0
  %3455 = vmatpush1.msra.mxu0 %v3031
  %3456 = vmatprep.subr.mxu0 0.0
  %3457 = vmatpush1.msra.mxu0 %v3032
  %3458 = vmatprep.subr.mxu0 0.0
  %3459 = vmatpush1.msra.mxu0 %v3033
  %3460 = vmatprep.subr.mxu0 0.0
  %3461 = vmatpush1.msra.mxu0 %v3034
  %3462 = vmatprep.subr.mxu0 0.0
  %3463 = vmatpush1.msra.mxu0 %v3035
  %3464 = vmatprep.subr.mxu0 0.0
  %3465 = vmatpush1.msra.mxu0 %v3036
  %3466 = vmatprep.subr.mxu0 0.0
  %3467 = vmatpush1.msra.mxu0 %v3037
  %3468 = vmatprep.subr.mxu0 0.0
  %3469 = vmatpush1.msra.mxu0 %v3038
  %3470 = vmatprep.subr.mxu0 0.0
  %3471 = vmatpush1.msra.mxu0 %v3039
  %3472 = vmatprep.subr.mxu0 0.0
  %3473 = vmatpush1.msra.mxu0 %v3040
  %3474 = vmatprep.subr.mxu0 0.0
  %3475 = vmatpush1.msra.mxu0 %v3041
  %3476 = vmatprep.subr.mxu0 0.0
  %3477 = vmatpush1.msra.mxu0 %v3042
  %3478 = vmatprep.subr.mxu0 0.0
  %3479 = vmatpush1.msra.mxu0 %v3043
  %3480 = vmatprep.subr.mxu0 0.0
  %3481 = vmatpush1.msra.mxu0 %v3044
  %3482 = vmatprep.subr.mxu0 0.0
  %3483 = vmatpush1.msra.mxu0 %v3045
  %3484 = vmatprep.subr.mxu0 0.0
  %3485 = vmatpush1.msra.mxu0 %v3046
  %3486 = vmatprep.subr.mxu0 0.0
  %3487 = vmatpush1.msra.mxu0 %v3047
  %3488 = vmatprep.subr.mxu0 0.0
  %3489 = vmatpush1.msra.mxu0 %v3048
  %3490 = vmatprep.subr.mxu0 0.0
  %3491 = vmatpush1.msra.mxu0 %v3049
  %3492 = vmatprep.subr.mxu0 0.0
  %3493 = vmatpush1.msra.mxu0 %v3050
  %3494 = vmatprep.subr.mxu0 0.0
  %3495 = vmatpush1.msra.mxu0 %v3051
  %3496 = vmatprep.subr.mxu0 0.0
  %3497 = vmatpush1.msra.mxu0 %v3052
  %3498 = vmatprep.subr.mxu0 0.0
  %3499 = vmatpush1.msra.mxu0 %v3053
  %3500 = vmatprep.subr.mxu0 0.0
  %3501 = vmatpush1.msra.mxu0 %v3054
  %3502 = vmatprep.subr.mxu0 0.0
  %3503 = vmatpush1.msra.mxu0 %v3055
  %3504 = vmatprep.subr.mxu0 0.0
  %3505 = vmatpush1.msra.mxu0 %v3056
  %3506 = vmatprep.mubr.f32.mxu0 %v1906
  %3507 = vmatmul.mubr.f32.gmra.mrb[0].mxu0 %v1905
  %v3508 = vpop.f32.mrb[0].mxu0
  %v3509 = vadd.f32 %v3124, %v3508
  %v3510 = vpop.f32.mrb[0].mxu0
  %3511 = vmatprep.mubr.f32.mxu0 %v1910
  %3512 = vmatmul.mubr.f32.gmra.mrb[0].mxu0 %v1909
  %v3513 = vpop.f32.mrb[0].mxu0
  %v3514 = vadd.f32 %v3129, %v3513
  %v3515 = vpop.f32.mrb[0].mxu0
  %3516 = vmatprep.mubr.f32.mxu0 %v1914
  %3517 = vmatmul.mubr.f32.gmra.mrb[0].mxu0 %v1913
  %v3518 = vpop.f32.mrb[0].mxu0
  %v3519 = vadd.f32 %v3134, %v3518
  %v3520 = vpop.f32.mrb[0].mxu0
  %3521 = vmatprep.mubr.f32.mxu0 %v1918
  %3522 = vmatmul.mubr.f32.gmra.mrb[0].mxu0 %v1917
  %v3523 = vpop.f32.mrb[0].mxu0
  %v3524 = vadd.f32 %v3139, %v3523
  %v3525 = vpop.f32.mrb[0].mxu0
  %3526 = vmatprep.mubr.f32.mxu0 %v1922
  %3527 = vmatmul.mubr.f32.gmra.mrb[0].mxu0 %v1921
  %v3528 = vpop.f32.mrb[0].mxu0
  %v3529 = vadd.f32 %v3144, %v3528
  %v3530 = vpop.f32.mrb[0].mxu0
  %3531 = vmatprep.mubr.f32.mxu0 %v1926
  %3532 = vmatmul.mubr.f32.gmra.mrb[0].mxu0 %v1925
  %v3533 = vpop.f32.mrb[0].mxu0
  %v3534 = vadd.f32 %v3149, %v3533
  %v3535 = vpop.f32.mrb[0].mxu0
  %3536 = vmatprep.mubr.f32.mxu0 %v1930
  %3537 = vmatmul.mubr.f32.gmra.mrb[0].mxu0 %v1929
  %v3538 = vpop.f32.mrb[0].mxu0
  %v3539 = vadd.f32 %v3154, %v3538
  %v3540 = vpop.f32.mrb[0].mxu0
  %3541 = vmatprep.mubr.f32.mxu0 %v1934
  %3542 = vmatmul.mubr.f32.gmra.mrb[0].mxu0 %v1933
  %v3543 = vpop.f32.mrb[0].mxu0
  %v3544 = vadd.f32 %v3159, %v3543
  %v3545 = vpop.f32.mrb[0].mxu0
  %3546 = vmatprep.mubr.f32.mxu0 %v1938
  %3547 = vmatmul.mubr.f32.gmra.mrb[0].mxu0 %v1937
  %v3548 = vpop.f32.mrb[0].mxu0
  %v3549 = vadd.f32 %v3164, %v3548
  %v3550 = vpop.f32.mrb[0].mxu0
  %3551 = vmatprep.mubr.f32.mxu0 %v1942
  %3552 = vmatmul.mubr.f32.gmra.mrb[0].mxu0 %v1941
  %v3553 = vpop.f32.mrb[0].mxu0
  %v3554 = vadd.f32 %v3169, %v3553
  %v3555 = vpop.f32.mrb[0].mxu0
  %3556 = vmatprep.mubr.f32.mxu0 %v1946
  %3557 = vmatmul.mubr.f32.gmra.mrb[0].mxu0 %v1945
  %v3558 = vpop.f32.mrb[0].mxu0
  %v3559 = vadd.f32 %v3174, %v3558
  %v3560 = vpop.f32.mrb[0].mxu0
  %3561 = vmatprep.mubr.f32.mxu0 %v1950
  %3562 = vmatmul.mubr.f32.gmra.mrb[0].mxu0 %v1949
  %v3563 = vpop.f32.mrb[0].mxu0
  %v3564 = vadd.f32 %v3179, %v3563
  %v3565 = vpop.f32.mrb[0].mxu0
  %3566 = vmatprep.mubr.f32.mxu0 %v1954
  %3567 = vmatmul.mubr.f32.gmra.mrb[0].mxu0 %v1953
  %v3568 = vpop.f32.mrb[0].mxu0
  %v3569 = vadd.f32 %v3184, %v3568
  %v3570 = vpop.f32.mrb[0].mxu0
  %3571 = vmatprep.mubr.f32.mxu0 %v1958
  %3572 = vmatmul.mubr.f32.gmra.mrb[0].mxu0 %v1957
  %v3573 = vpop.f32.mrb[0].mxu0
  %v3574 = vadd.f32 %v3189, %v3573
  %v3575 = vpop.f32.mrb[0].mxu0
  %3576 = vmatprep.mubr.f32.mxu0 %v1962
  %3577 = vmatmul.mubr.f32.gmra.mrb[0].mxu0 %v1961
  %v3578 = vpop.f32.mrb[0].mxu0
  %v3579 = vadd.f32 %v3194, %v3578
  %v3580 = vpop.f32.mrb[0].mxu0
  %3581 = vmatprep.mubr.f32.mxu0 %v1966
  %3582 = vmatmul.mubr.f32.gmra.mrb[0].mxu0 %v1965
  %v3583 = vpop.f32.mrb[0].mxu0
  %v3584 = vadd.f32 %v3199, %v3583
  %v3585 = vpop.f32.mrb[0].mxu0
  %3586 = vmatprep.mubr.f32.mxu0 %v1970
  %3587 = vmatmul.mubr.f32.gmra.mrb[0].mxu0 %v1969
  %v3588 = vpop.f32.mrb[0].mxu0
  %v3589 = vadd.f32 %v3204, %v3588
  %v3590 = vpop.f32.mrb[0].mxu0
  %3591 = vmatprep.mubr.f32.mxu0 %v1974
  %3592 = vmatmul.mubr.f32.gmra.mrb[0].mxu0 %v1973
  %v3593 = vpop.f32.mrb[0].mxu0
  %v3594 = vadd.f32 %v3209, %v3593
  %v3595 = vpop.f32.mrb[0].mxu0
  %3596 = vmatprep.mubr.f32.mxu0 %v1978
  %3597 = vmatmul.mubr.f32.gmra.mrb[0].mxu0 %v1977
  %v3598 = vpop.f32.mrb[0].mxu0
  %v3599 = vadd.f32 %v3214, %v3598
  %v3600 = vpop.f32.mrb[0].mxu0
  %3601 = vmatprep.mubr.f32.mxu0 %v1982
  %3602 = vmatmul.mubr.f32.gmra.mrb[0].mxu0 %v1981
  %v3603 = vpop.f32.mrb[0].mxu0
  %v3604 = vadd.f32 %v3219, %v3603
  %v3605 = vpop.f32.mrb[0].mxu0
  %3606 = vmatprep.mubr.f32.mxu0 %v1986
  %3607 = vmatmul.mubr.f32.gmra.mrb[0].mxu0 %v1985
  %v3608 = vpop.f32.mrb[0].mxu0
  %v3609 = vadd.f32 %v3224, %v3608
  %v3610 = vpop.f32.mrb[0].mxu0
  %3611 = vmatprep.mubr.f32.mxu0 %v1990
  %3612 = vmatmul.mubr.f32.gmra.mrb[0].mxu0 %v1989
  %v3613 = vpop.f32.mrb[0].mxu0
  %v3614 = vadd.f32 %v3229, %v3613
  %v3615 = vpop.f32.mrb[0].mxu0
  %3616 = vmatprep.mubr.f32.mxu0 %v1994
  %3617 = vmatmul.mubr.f32.gmra.mrb[0].mxu0 %v1993
  %v3618 = vpop.f32.mrb[0].mxu0
  %v3619 = vadd.f32 %v3234, %v3618
  %v3620 = vpop.f32.mrb[0].mxu0
  %3621 = vmatprep.mubr.f32.mxu0 %v1998
  %3622 = vmatmul.mubr.f32.gmra.mrb[0].mxu0 %v1997
  %v3623 = vpop.f32.mrb[0].mxu0
  %v3624 = vadd.f32 %v3239, %v3623
  %v3625 = vpop.f32.mrb[0].mxu0
  %3626 = vmatprep.mubr.f32.mxu0 %v2002
  %3627 = vmatmul.mubr.f32.gmra.mrb[0].mxu0 %v2001
  %v3628 = vpop.f32.mrb[0].mxu0
  %v3629 = vadd.f32 %v3244, %v3628
  %v3630 = vpop.f32.mrb[0].mxu0
  %3631 = vmatprep.mubr.f32.mxu0 %v2006
  %3632 = vmatmul.mubr.f32.gmra.mrb[0].mxu0 %v2005
  %v3633 = vpop.f32.mrb[0].mxu0
  %v3634 = vadd.f32 %v3249, %v3633
  %v3635 = vpop.f32.mrb[0].mxu0
  %3636 = vmatprep.mubr.f32.mxu0 %v2010
  %3637 = vmatmul.mubr.f32.gmra.mrb[0].mxu0 %v2009
  %v3638 = vpop.f32.mrb[0].mxu0
  %v3639 = vadd.f32 %v3254, %v3638
  %v3640 = vpop.f32.mrb[0].mxu0
  %3641 = vmatprep.mubr.f32.mxu0 %v2014
  %3642 = vmatmul.mubr.f32.gmra.mrb[0].mxu0 %v2013
  %v3643 = vpop.f32.mrb[0].mxu0
  %v3644 = vadd.f32 %v3259, %v3643
  %v3645 = vpop.f32.mrb[0].mxu0
  %3646 = vmatprep.mubr.f32.mxu0 %v2018
  %3647 = vmatmul.mubr.f32.gmra.mrb[0].mxu0 %v2017
  %v3648 = vpop.f32.mrb[0].mxu0
  %v3649 = vadd.f32 %v3264, %v3648
  %v3650 = vpop.f32.mrb[0].mxu0
  %3651 = vmatprep.mubr.f32.mxu0 %v2022
  %3652 = vmatmul.mubr.f32.gmra.mrb[0].mxu0 %v2021
  %v3653 = vpop.f32.mrb[0].mxu0
  %v3654 = vadd.f32 %v3269, %v3653
  %v3655 = vpop.f32.mrb[0].mxu0
  %3656 = vmatprep.mubr.f32.mxu0 %v2026
  %3657 = vmatmul.mubr.f32.gmra.mrb[0].mxu0 %v2025
  %v3658 = vpop.f32.mrb[0].mxu0
  %v3659 = vadd.f32 %v3274, %v3658
  %v3660 = vpop.f32.mrb[0].mxu0
  %3661 = vmatprep.mubr.f32.mxu0 %v2030
  %3662 = vmatmul.mubr.f32.gmra.mrb[0].mxu0 %v2029
  %v3663 = vpop.f32.mrb[0].mxu0
  %v3664 = vadd.f32 %v3279, %v3663
  %v3665 = vpop.f32.mrb[0].mxu0
  %3666 = vmatprep.mubr.f32.mxu0 %v2034
  %3667 = vmatmul.mubr.f32.gmra.mrb[0].mxu0 %v2033
  %v3668 = vpop.f32.mrb[0].mxu0
  %v3669 = vadd.f32 %v3284, %v3668
  %v3670 = vpop.f32.mrb[0].mxu0
  %3671 = vmatprep.mubr.f32.mxu0 %v2038
  %3672 = vmatmul.mubr.f32.gmra.mrb[0].mxu0 %v2037
  %v3673 = vpop.f32.mrb[0].mxu0
  %v3674 = vadd.f32 %v3289, %v3673
  %v3675 = vpop.f32.mrb[0].mxu0
  %3676 = vmatprep.mubr.f32.mxu0 %v2042
  %3677 = vmatmul.mubr.f32.gmra.mrb[0].mxu0 %v2041
  %v3678 = vpop.f32.mrb[0].mxu0
  %v3679 = vadd.f32 %v3294, %v3678
  %v3680 = vpop.f32.mrb[0].mxu0
  %3681 = vmatprep.mubr.f32.mxu0 %v2046
  %3682 = vmatmul.mubr.f32.gmra.mrb[0].mxu0 %v2045
  %v3683 = vpop.f32.mrb[0].mxu0
  %v3684 = vadd.f32 %v3299, %v3683
  %v3685 = vpop.f32.mrb[0].mxu0
  %3686 = vmatprep.mubr.f32.mxu0 %v2050
  %3687 = vmatmul.mubr.f32.gmra.mrb[0].mxu0 %v2049
  %v3688 = vpop.f32.mrb[0].mxu0
  %v3689 = vadd.f32 %v3304, %v3688
  %v3690 = vpop.f32.mrb[0].mxu0
  %3691 = vmatprep.mubr.f32.mxu0 %v2054
  %3692 = vmatmul.mubr.f32.gmra.mrb[0].mxu0 %v2053
  %v3693 = vpop.f32.mrb[0].mxu0
  %v3694 = vadd.f32 %v3309, %v3693
  %v3695 = vpop.f32.mrb[0].mxu0
  %3696 = vmatprep.mubr.f32.mxu0 %v2058
  %3697 = vmatmul.mubr.f32.gmra.mrb[0].mxu0 %v2057
  %v3698 = vpop.f32.mrb[0].mxu0
  %v3699 = vadd.f32 %v3314, %v3698
  %v3700 = vpop.f32.mrb[0].mxu0
  %3701 = vmatprep.mubr.f32.mxu0 %v2062
  %3702 = vmatmul.mubr.f32.gmra.mrb[0].mxu0 %v2061
  %v3703 = vpop.f32.mrb[0].mxu0
  %v3704 = vadd.f32 %v3319, %v3703
  %v3705 = vpop.f32.mrb[0].mxu0
  %3706 = vmatprep.mubr.f32.mxu0 %v2066
  %3707 = vmatmul.mubr.f32.gmra.mrb[0].mxu0 %v2065
  %v3708 = vpop.f32.mrb[0].mxu0
  %v3709 = vadd.f32 %v3324, %v3708
  %v3710 = vpop.f32.mrb[0].mxu0
  %3711 = vmatprep.mubr.f32.mxu0 %v2070
  %3712 = vmatmul.mubr.f32.gmra.mrb[0].mxu0 %v2069
  %v3713 = vpop.f32.mrb[0].mxu0
  %v3714 = vadd.f32 %v3329, %v3713
  %v3715 = vpop.f32.mrb[0].mxu0
  %3716 = vmatprep.mubr.f32.mxu0 %v2074
  %3717 = vmatmul.mubr.f32.gmra.mrb[0].mxu0 %v2073
  %v3718 = vpop.f32.mrb[0].mxu0
  %v3719 = vadd.f32 %v3334, %v3718
  %v3720 = vpop.f32.mrb[0].mxu0
  %3721 = vmatprep.mubr.f32.mxu0 %v2078
  %3722 = vmatmul.mubr.f32.gmra.mrb[0].mxu0 %v2077
  %v3723 = vpop.f32.mrb[0].mxu0
  %v3724 = vadd.f32 %v3339, %v3723
  %v3725 = vpop.f32.mrb[0].mxu0
  %3726 = vmatprep.mubr.f32.mxu0 %v2082
  %3727 = vmatmul.mubr.f32.gmra.mrb[0].mxu0 %v2081
  %v3728 = vpop.f32.mrb[0].mxu0
  %v3729 = vadd.f32 %v3344, %v3728
  %v3730 = vpop.f32.mrb[0].mxu0
  %3731 = vmatprep.mubr.f32.mxu0 %v2086
  %3732 = vmatmul.mubr.f32.gmra.mrb[0].mxu0 %v2085
  %v3733 = vpop.f32.mrb[0].mxu0
  %v3734 = vadd.f32 %v3349, %v3733
  %v3735 = vpop.f32.mrb[0].mxu0
  %3736 = vmatprep.mubr.f32.mxu0 %v2090
  %3737 = vmatmul.mubr.f32.gmra.mrb[0].mxu0 %v2089
  %v3738 = vpop.f32.mrb[0].mxu0
  %v3739 = vadd.f32 %v3354, %v3738
  %v3740 = vpop.f32.mrb[0].mxu0
  %3741 = vmatprep.mubr.f32.mxu0 %v2094
  %3742 = vmatmul.mubr.f32.gmra.mrb[0].mxu0 %v2093
  %v3743 = vpop.f32.mrb[0].mxu0
  %v3744 = vadd.f32 %v3359, %v3743
  %v3745 = vpop.f32.mrb[0].mxu0
  %3746 = vmatprep.mubr.f32.mxu0 %v2098
  %3747 = vmatmul.mubr.f32.gmra.mrb[0].mxu0 %v2097
  %v3748 = vpop.f32.mrb[0].mxu0
  %v3749 = vadd.f32 %v3364, %v3748
  %v3750 = vpop.f32.mrb[0].mxu0
  %3751 = vmatprep.mubr.f32.mxu0 %v2102
  %3752 = vmatmul.mubr.f32.gmra.mrb[0].mxu0 %v2101
  %v3753 = vpop.f32.mrb[0].mxu0
  %v3754 = vadd.f32 %v3369, %v3753
  %v3755 = vpop.f32.mrb[0].mxu0
  %3756 = vmatprep.mubr.f32.mxu0 %v2106
  %3757 = vmatmul.mubr.f32.gmra.mrb[0].mxu0 %v2105
  %v3758 = vpop.f32.mrb[0].mxu0
  %v3759 = vadd.f32 %v3374, %v3758
  %v3760 = vpop.f32.mrb[0].mxu0
  %3761 = vmatprep.mubr.f32.mxu0 %v2110
  %3762 = vmatmul.mubr.f32.gmra.mrb[0].mxu0 %v2109
  %v3763 = vpop.f32.mrb[0].mxu0
  %v3764 = vadd.f32 %v3379, %v3763
  %v3765 = vpop.f32.mrb[0].mxu0
  %3766 = vmatprep.mubr.f32.mxu0 %v2114
  %3767 = vmatmul.mubr.f32.gmra.mrb[0].mxu0 %v2113
  %v3768 = vpop.f32.mrb[0].mxu0
  %v3769 = vadd.f32 %v3384, %v3768
  %v3770 = vpop.f32.mrb[0].mxu0
  %3771 = vmatprep.mubr.f32.mxu0 %v2118
  %3772 = vmatmul.mubr.f32.gmra.mrb[0].mxu0 %v2117
  %v3773 = vpop.f32.mrb[0].mxu0
  %v3774 = vadd.f32 %v3389, %v3773
  %v3775 = vpop.f32.mrb[0].mxu0
  %3776 = vmatprep.mubr.f32.mxu0 %v2122
  %3777 = vmatmul.mubr.f32.gmra.mrb[0].mxu0 %v2121
  %v3778 = vpop.f32.mrb[0].mxu0
  %v3779 = vadd.f32 %v3394, %v3778
  %v3780 = vpop.f32.mrb[0].mxu0
  %3781 = vmatprep.mubr.f32.mxu0 %v2126
  %3782 = vmatmul.mubr.f32.gmra.mrb[0].mxu0 %v2125
  %v3783 = vpop.f32.mrb[0].mxu0
  %v3784 = vadd.f32 %v3399, %v3783
  %v3785 = vpop.f32.mrb[0].mxu0
  %3786 = vmatprep.mubr.f32.mxu0 %v2130
  %3787 = vmatmul.mubr.f32.gmra.mrb[0].mxu0 %v2129
  %v3788 = vpop.f32.mrb[0].mxu0
  %v3789 = vadd.f32 %v3404, %v3788
  %v3790 = vpop.f32.mrb[0].mxu0
  %3791 = vmatprep.mubr.f32.mxu0 %v2134
  %3792 = vmatmul.mubr.f32.gmra.mrb[0].mxu0 %v2133
  %v3793 = vpop.f32.mrb[0].mxu0
  %v3794 = vadd.f32 %v3409, %v3793
  %v3795 = vpop.f32.mrb[0].mxu0
  %3796 = vmatprep.mubr.f32.mxu0 %v2138
  %3797 = vmatmul.mubr.f32.gmra.mrb[0].mxu0 %v2137
  %v3798 = vpop.f32.mrb[0].mxu0
  %v3799 = vadd.f32 %v3414, %v3798
  %v3800 = vpop.f32.mrb[0].mxu0
  %3801 = vmatprep.mubr.f32.mxu0 %v2142
  %3802 = vmatmul.mubr.f32.gmra.mrb[0].mxu0 %v2141
  %v3803 = vpop.f32.mrb[0].mxu0
  %v3804 = vadd.f32 %v3419, %v3803
  %v3805 = vpop.f32.mrb[0].mxu0
  %3806 = vmatprep.mubr.f32.mxu0 %v2146
  %3807 = vmatmul.mubr.f32.gmra.mrb[0].mxu0 %v2145
  %v3808 = vpop.f32.mrb[0].mxu0
  %v3809 = vadd.f32 %v3424, %v3808
  %v3810 = vpop.f32.mrb[0].mxu0
  %3811 = vmatprep.mubr.f32.mxu0 %v2150
  %3812 = vmatmul.mubr.f32.gmra.mrb[0].mxu0 %v2149
  %v3813 = vpop.f32.mrb[0].mxu0
  %v3814 = vadd.f32 %v3429, %v3813
  %v3815 = vpop.f32.mrb[0].mxu0
  %3816 = vmatprep.mubr.f32.mxu0 %v2154
  %3817 = vmatmul.mubr.f32.gmra.mrb[0].mxu0 %v2153
  %v3818 = vpop.f32.mrb[0].mxu0
  %v3819 = vadd.f32 %v3434, %v3818
  %v3820 = vpop.f32.mrb[0].mxu0
  %3821 = vmatprep.mubr.f32.mxu0 %v2158
  %3822 = vmatmul.mubr.f32.gmra.mrb[0].mxu0 %v2157
  %v3823 = vpop.f32.mrb[0].mxu0
  %v3824 = vadd.f32 %v3439, %v3823
  %v3825 = vpop.f32.mrb[0].mxu0
  %3826 = vdwg.mxu0
  %v3827 = vmul.f32 %v3509, 0.9
  %v3828 = vmul.f32 %v3514, 0.9
  %v3829 = vmul.f32 %v3519, 0.9
  %v3830 = vmul.f32 %v3524, 0.9
  %v3831 = vmul.f32 %v3529, 0.9
  %v3832 = vmul.f32 %v3534, 0.9
  %v3833 = vmul.f32 %v3539, 0.9
  %v3834 = vmul.f32 %v3544, 0.9
  %v3835 = vmul.f32 %v3549, 0.9
  %v3836 = vmul.f32 %v3554, 0.9
  %v3837 = vmul.f32 %v3559, 0.9
  %v3838 = vmul.f32 %v3564, 0.9
  %v3839 = vmul.f32 %v3569, 0.9
  %v3840 = vmul.f32 %v3574, 0.9
  %v3841 = vmul.f32 %v3579, 0.9
  %v3842 = vmul.f32 %v3584, 0.9
  %v3843 = vmul.f32 %v3589, 0.9
  %v3844 = vmul.f32 %v3594, 0.9
  %v3845 = vmul.f32 %v3599, 0.9
  %v3846 = vmul.f32 %v3604, 0.9
  %v3847 = vmul.f32 %v3609, 0.9
  %v3848 = vmul.f32 %v3614, 0.9
  %v3849 = vmul.f32 %v3619, 0.9
  %v3850 = vmul.f32 %v3624, 0.9
  %v3851 = vmul.f32 %v3629, 0.9
  %v3852 = vmul.f32 %v3634, 0.9
  %v3853 = vmul.f32 %v3639, 0.9
  %v3854 = vmul.f32 %v3644, 0.9
  %v3855 = vmul.f32 %v3649, 0.9
  %v3856 = vmul.f32 %v3654, 0.9
  %v3857 = vmul.f32 %v3659, 0.9
  %v3858 = vmul.f32 %v3664, 0.9
  %v3859 = vmul.f32 %v3669, 0.9
  %v3860 = vmul.f32 %v3674, 0.9
  %v3861 = vmul.f32 %v3679, 0.9
  %v3862 = vmul.f32 %v3684, 0.9
  %v3863 = vmul.f32 %v3689, 0.9
  %v3864 = vmul.f32 %v3694, 0.9
  %v3865 = vmul.f32 %v3699, 0.9
  %v3866 = vmul.f32 %v3704, 0.9
  %v3867 = vmul.f32 %v3709, 0.9
  %v3868 = vmul.f32 %v3714, 0.9
  %v3869 = vmul.f32 %v3719, 0.9
  %v3870 = vmul.f32 %v3724, 0.9
  %v3871 = vmul.f32 %v3729, 0.9
  %v3872 = vmul.f32 %v3734, 0.9
  %v3873 = vmul.f32 %v3739, 0.9
  %v3874 = vmul.f32 %v3744, 0.9
  %v3875 = vmul.f32 %v3749, 0.9
  %v3876 = vmul.f32 %v3754, 0.9
  %v3877 = vmul.f32 %v3759, 0.9
  %v3878 = vmul.f32 %v3764, 0.9
  %v3879 = vmul.f32 %v3769, 0.9
  %v3880 = vmul.f32 %v3774, 0.9
  %v3881 = vmul.f32 %v3779, 0.9
  %v3882 = vmul.f32 %v3784, 0.9
  %v3883 = vmul.f32 %v3789, 0.9
  %v3884 = vmul.f32 %v3794, 0.9
  %v3885 = vmul.f32 %v3799, 0.9
  %v3886 = vmul.f32 %v3804, 0.9
  %v3887 = vmul.f32 %v3809, 0.9
  %v3888 = vmul.f32 %v3814, 0.9
  %v3889 = vmul.f32 %v3819, 0.9
  %v3890 = vmul.f32 %v3824, 0.9
  %v3891 = vtanh.pop %v3827
  %v3892 = vtanh.pop %v3828
  %v3893 = vtanh.pop %v3829
  %v3894 = vtanh.pop %v3830
  %v3895 = vtanh.pop %v3831
  %v3896 = vtanh.pop %v3832
  %v3897 = vtanh.pop %v3833
  %v3898 = vtanh.pop %v3834
  %v3899 = vtanh.pop %v3835
  %v3900 = vtanh.pop %v3836
  %v3901 = vtanh.pop %v3837
  %v3902 = vtanh.pop %v3838
  %v3903 = vtanh.pop %v3839
  %v3904 = vtanh.pop %v3840
  %v3905 = vtanh.pop %v3841
  %v3906 = vtanh.pop %v3842
  %v3907 = vtanh.pop %v3843
  %v3908 = vtanh.pop %v3844
  %v3909 = vtanh.pop %v3845
  %v3910 = vtanh.pop %v3846
  %v3911 = vtanh.pop %v3847
  %v3912 = vtanh.pop %v3848
  %v3913 = vtanh.pop %v3849
  %v3914 = vtanh.pop %v3850
  %v3915 = vtanh.pop %v3851
  %v3916 = vtanh.pop %v3852
  %v3917 = vtanh.pop %v3853
  %v3918 = vtanh.pop %v3854
  %v3919 = vtanh.pop %v3855
  %v3920 = vtanh.pop %v3856
  %v3921 = vtanh.pop %v3857
  %v3922 = vtanh.pop %v3858
  %v3923 = vtanh.pop %v3859
  %v3924 = vtanh.pop %v3860
  %v3925 = vtanh.pop %v3861
  %v3926 = vtanh.pop %v3862
  %v3927 = vtanh.pop %v3863
  %v3928 = vtanh.pop %v3864
  %v3929 = vtanh.pop %v3865
  %v3930 = vtanh.pop %v3866
  %v3931 = vtanh.pop %v3867
  %v3932 = vtanh.pop %v3868
  %v3933 = vtanh.pop %v3869
  %v3934 = vtanh.pop %v3870
  %v3935 = vtanh.pop %v3871
  %v3936 = vtanh.pop %v3872
  %v3937 = vtanh.pop %v3873
  %v3938 = vtanh.pop %v3874
  %v3939 = vtanh.pop %v3875
  %v3940 = vtanh.pop %v3876
  %v3941 = vtanh.pop %v3877
  %v3942 = vtanh.pop %v3878
  %v3943 = vtanh.pop %v3879
  %v3944 = vtanh.pop %v3880
  %v3945 = vtanh.pop %v3881
  %v3946 = vtanh.pop %v3882
  %v3947 = vtanh.pop %v3883
  %v3948 = vtanh.pop %v3884
  %v3949 = vtanh.pop %v3885
  %v3950 = vtanh.pop %v3886
  %v3951 = vtanh.pop %v3887
  %v3952 = vtanh.pop %v3888
  %v3953 = vtanh.pop %v3889
  %v3954 = vtanh.pop %v3890
  %v3955 = vlaneseq
  %v3956 = vand.u32 %v3955, 127
  %vm3957 = vcmp.lt.s32.totalorder %v3956, 4
  %v3958 = vsel %vm3957, %v3891, -1e+30
  %v3959 = vsel %vm3957, %v3892, -1e+30
  %v3960 = vsel %vm3957, %v3893, -1e+30
  %v3961 = vsel %vm3957, %v3894, -1e+30
  %v3962 = vsel %vm3957, %v3895, -1e+30
  %v3963 = vsel %vm3957, %v3896, -1e+30
  %v3964 = vsel %vm3957, %v3897, -1e+30
  %v3965 = vsel %vm3957, %v3898, -1e+30
  %v3966 = vsel %vm3957, %v3899, -1e+30
  %v3967 = vsel %vm3957, %v3900, -1e+30
  %v3968 = vsel %vm3957, %v3901, -1e+30
  %v3969 = vsel %vm3957, %v3902, -1e+30
  %v3970 = vsel %vm3957, %v3903, -1e+30
  %v3971 = vsel %vm3957, %v3904, -1e+30
  %v3972 = vsel %vm3957, %v3905, -1e+30
  %v3973 = vsel %vm3957, %v3906, -1e+30
  %v3974 = vsel %vm3957, %v3907, -1e+30
  %v3975 = vsel %vm3957, %v3908, -1e+30
  %v3976 = vsel %vm3957, %v3909, -1e+30
  %v3977 = vsel %vm3957, %v3910, -1e+30
  %v3978 = vsel %vm3957, %v3911, -1e+30
  %v3979 = vsel %vm3957, %v3912, -1e+30
  %v3980 = vsel %vm3957, %v3913, -1e+30
  %v3981 = vsel %vm3957, %v3914, -1e+30
  %v3982 = vsel %vm3957, %v3915, -1e+30
  %v3983 = vsel %vm3957, %v3916, -1e+30
  %v3984 = vsel %vm3957, %v3917, -1e+30
  %v3985 = vsel %vm3957, %v3918, -1e+30
  %v3986 = vsel %vm3957, %v3919, -1e+30
  %v3987 = vsel %vm3957, %v3920, -1e+30
  %v3988 = vsel %vm3957, %v3921, -1e+30
  %v3989 = vsel %vm3957, %v3922, -1e+30
  %v3990 = vsel %vm3957, %v3923, -1e+30
  %v3991 = vsel %vm3957, %v3924, -1e+30
  %v3992 = vsel %vm3957, %v3925, -1e+30
  %v3993 = vsel %vm3957, %v3926, -1e+30
  %v3994 = vsel %vm3957, %v3927, -1e+30
  %v3995 = vsel %vm3957, %v3928, -1e+30
  %v3996 = vsel %vm3957, %v3929, -1e+30
  %v3997 = vsel %vm3957, %v3930, -1e+30
  %v3998 = vsel %vm3957, %v3931, -1e+30
  %v3999 = vsel %vm3957, %v3932, -1e+30
  %v4000 = vsel %vm3957, %v3933, -1e+30
  %v4001 = vsel %vm3957, %v3934, -1e+30
  %v4002 = vsel %vm3957, %v3935, -1e+30
  %v4003 = vsel %vm3957, %v3936, -1e+30
  %v4004 = vsel %vm3957, %v3937, -1e+30
  %v4005 = vsel %vm3957, %v3938, -1e+30
  %v4006 = vsel %vm3957, %v3939, -1e+30
  %v4007 = vsel %vm3957, %v3940, -1e+30
  %v4008 = vsel %vm3957, %v3941, -1e+30
  %v4009 = vsel %vm3957, %v3942, -1e+30
  %v4010 = vsel %vm3957, %v3943, -1e+30
  %v4011 = vsel %vm3957, %v3944, -1e+30
  %v4012 = vsel %vm3957, %v3945, -1e+30
  %v4013 = vsel %vm3957, %v3946, -1e+30
  %v4014 = vsel %vm3957, %v3947, -1e+30
  %v4015 = vsel %vm3957, %v3948, -1e+30
  %v4016 = vsel %vm3957, %v3949, -1e+30
  %v4017 = vsel %vm3957, %v3950, -1e+30
  %v4018 = vsel %vm3957, %v3951, -1e+30
  %v4019 = vsel %vm3957, %v3952, -1e+30
  %v4020 = vsel %vm3957, %v3953, -1e+30
  %v4021 = vsel %vm3957, %v3954, -1e+30
  %4022 = vmax.xlane.f32.xlu0 %v3958
  %v4023 = vpop.xlane.xlu0 %4022
  %4024 = vmax.xlane.f32.xlu0 %v3959
  %v4025 = vpop.xlane.xlu0 %4024
  %4026 = vmax.xlane.f32.xlu0 %v3960
  %v4027 = vpop.xlane.xlu0 %4026
  %4028 = vmax.xlane.f32.xlu0 %v3961
  %v4029 = vpop.xlane.xlu0 %4028
  %4030 = vmax.xlane.f32.xlu0 %v3962
  %v4031 = vpop.xlane.xlu0 %4030
  %4032 = vmax.xlane.f32.xlu0 %v3963
  %v4033 = vpop.xlane.xlu0 %4032
  %4034 = vmax.xlane.f32.xlu0 %v3964
  %v4035 = vpop.xlane.xlu0 %4034
  %4036 = vmax.xlane.f32.xlu0 %v3965
  %v4037 = vpop.xlane.xlu0 %4036
  %4038 = vmax.xlane.f32.xlu0 %v3966
  %v4039 = vpop.xlane.xlu0 %4038
  %4040 = vmax.xlane.f32.xlu0 %v3967
  %v4041 = vpop.xlane.xlu0 %4040
  %4042 = vmax.xlane.f32.xlu0 %v3968
  %v4043 = vpop.xlane.xlu0 %4042
  %4044 = vmax.xlane.f32.xlu0 %v3969
  %v4045 = vpop.xlane.xlu0 %4044
  %4046 = vmax.xlane.f32.xlu0 %v3970
  %v4047 = vpop.xlane.xlu0 %4046
  %4048 = vmax.xlane.f32.xlu0 %v3971
  %v4049 = vpop.xlane.xlu0 %4048
  %4050 = vmax.xlane.f32.xlu0 %v3972
  %v4051 = vpop.xlane.xlu0 %4050
  %4052 = vmax.xlane.f32.xlu0 %v3973
  %v4053 = vpop.xlane.xlu0 %4052
  %4054 = vmax.xlane.f32.xlu0 %v3974
  %v4055 = vpop.xlane.xlu0 %4054
  %4056 = vmax.xlane.f32.xlu0 %v3975
  %v4057 = vpop.xlane.xlu0 %4056
  %4058 = vmax.xlane.f32.xlu0 %v3976
  %v4059 = vpop.xlane.xlu0 %4058
  %4060 = vmax.xlane.f32.xlu0 %v3977
  %v4061 = vpop.xlane.xlu0 %4060
  %4062 = vmax.xlane.f32.xlu0 %v3978
  %v4063 = vpop.xlane.xlu0 %4062
  %4064 = vmax.xlane.f32.xlu0 %v3979
  %v4065 = vpop.xlane.xlu0 %4064
  %4066 = vmax.xlane.f32.xlu0 %v3980
  %v4067 = vpop.xlane.xlu0 %4066
  %4068 = vmax.xlane.f32.xlu0 %v3981
  %v4069 = vpop.xlane.xlu0 %4068
  %4070 = vmax.xlane.f32.xlu0 %v3982
  %v4071 = vpop.xlane.xlu0 %4070
  %4072 = vmax.xlane.f32.xlu0 %v3983
  %v4073 = vpop.xlane.xlu0 %4072
  %4074 = vmax.xlane.f32.xlu0 %v3984
  %v4075 = vpop.xlane.xlu0 %4074
  %4076 = vmax.xlane.f32.xlu0 %v3985
  %v4077 = vpop.xlane.xlu0 %4076
  %4078 = vmax.xlane.f32.xlu0 %v3986
  %v4079 = vpop.xlane.xlu0 %4078
  %4080 = vmax.xlane.f32.xlu0 %v3987
  %v4081 = vpop.xlane.xlu0 %4080
  %4082 = vmax.xlane.f32.xlu0 %v3988
  %v4083 = vpop.xlane.xlu0 %4082
  %4084 = vmax.xlane.f32.xlu0 %v3989
  %v4085 = vpop.xlane.xlu0 %4084
  %4086 = vmax.xlane.f32.xlu0 %v3990
  %v4087 = vpop.xlane.xlu0 %4086
  %4088 = vmax.xlane.f32.xlu0 %v3991
  %v4089 = vpop.xlane.xlu0 %4088
  %4090 = vmax.xlane.f32.xlu0 %v3992
  %v4091 = vpop.xlane.xlu0 %4090
  %4092 = vmax.xlane.f32.xlu0 %v3993
  %v4093 = vpop.xlane.xlu0 %4092
  %4094 = vmax.xlane.f32.xlu0 %v3994
  %v4095 = vpop.xlane.xlu0 %4094
  %4096 = vmax.xlane.f32.xlu0 %v3995
  %v4097 = vpop.xlane.xlu0 %4096
  %4098 = vmax.xlane.f32.xlu0 %v3996
  %v4099 = vpop.xlane.xlu0 %4098
  %4100 = vmax.xlane.f32.xlu0 %v3997
  %v4101 = vpop.xlane.xlu0 %4100
  %4102 = vmax.xlane.f32.xlu0 %v3998
  %v4103 = vpop.xlane.xlu0 %4102
  %4104 = vmax.xlane.f32.xlu0 %v3999
  %v4105 = vpop.xlane.xlu0 %4104
  %4106 = vmax.xlane.f32.xlu0 %v4000
  %v4107 = vpop.xlane.xlu0 %4106
  %4108 = vmax.xlane.f32.xlu0 %v4001
  %v4109 = vpop.xlane.xlu0 %4108
  %4110 = vmax.xlane.f32.xlu0 %v4002
  %v4111 = vpop.xlane.xlu0 %4110
  %4112 = vmax.xlane.f32.xlu0 %v4003
  %v4113 = vpop.xlane.xlu0 %4112
  %4114 = vmax.xlane.f32.xlu0 %v4004
  %v4115 = vpop.xlane.xlu0 %4114
  %4116 = vmax.xlane.f32.xlu0 %v4005
  %v4117 = vpop.xlane.xlu0 %4116
  %4118 = vmax.xlane.f32.xlu0 %v4006
  %v4119 = vpop.xlane.xlu0 %4118
  %4120 = vmax.xlane.f32.xlu0 %v4007
  %v4121 = vpop.xlane.xlu0 %4120
  %4122 = vmax.xlane.f32.xlu0 %v4008
  %v4123 = vpop.xlane.xlu0 %4122
  %4124 = vmax.xlane.f32.xlu0 %v4009
  %v4125 = vpop.xlane.xlu0 %4124
  %4126 = vmax.xlane.f32.xlu0 %v4010
  %v4127 = vpop.xlane.xlu0 %4126
  %4128 = vmax.xlane.f32.xlu0 %v4011
  %v4129 = vpop.xlane.xlu0 %4128
  %4130 = vmax.xlane.f32.xlu0 %v4012
  %v4131 = vpop.xlane.xlu0 %4130
  %4132 = vmax.xlane.f32.xlu0 %v4013
  %v4133 = vpop.xlane.xlu0 %4132
  %4134 = vmax.xlane.f32.xlu0 %v4014
  %v4135 = vpop.xlane.xlu0 %4134
  %4136 = vmax.xlane.f32.xlu0 %v4015
  %v4137 = vpop.xlane.xlu0 %4136
  %4138 = vmax.xlane.f32.xlu0 %v4016
  %v4139 = vpop.xlane.xlu0 %4138
  %4140 = vmax.xlane.f32.xlu0 %v4017
  %v4141 = vpop.xlane.xlu0 %4140
  %4142 = vmax.xlane.f32.xlu0 %v4018
  %v4143 = vpop.xlane.xlu0 %4142
  %4144 = vmax.xlane.f32.xlu0 %v4019
  %v4145 = vpop.xlane.xlu0 %4144
  %4146 = vmax.xlane.f32.xlu0 %v4020
  %v4147 = vpop.xlane.xlu0 %4146
  %4148 = vmax.xlane.f32.xlu0 %v4021
  %v4149 = vpop.xlane.xlu0 %4148
  %v4150 = vsub.f32 %v3958, %v4023
  %v4151 = vsub.f32 %v3959, %v4025
  %v4152 = vsub.f32 %v3960, %v4027
  %v4153 = vsub.f32 %v3961, %v4029
  %v4154 = vsub.f32 %v3962, %v4031
  %v4155 = vsub.f32 %v3963, %v4033
  %v4156 = vsub.f32 %v3964, %v4035
  %v4157 = vsub.f32 %v3965, %v4037
  %v4158 = vsub.f32 %v3966, %v4039
  %v4159 = vsub.f32 %v3967, %v4041
  %v4160 = vsub.f32 %v3968, %v4043
  %v4161 = vsub.f32 %v3969, %v4045
  %v4162 = vsub.f32 %v3970, %v4047
  %v4163 = vsub.f32 %v3971, %v4049
  %v4164 = vsub.f32 %v3972, %v4051
  %v4165 = vsub.f32 %v3973, %v4053
  %v4166 = vsub.f32 %v3974, %v4055
  %v4167 = vsub.f32 %v3975, %v4057
  %v4168 = vsub.f32 %v3976, %v4059
  %v4169 = vsub.f32 %v3977, %v4061
  %v4170 = vsub.f32 %v3978, %v4063
  %v4171 = vsub.f32 %v3979, %v4065
  %v4172 = vsub.f32 %v3980, %v4067
  %v4173 = vsub.f32 %v3981, %v4069
  %v4174 = vsub.f32 %v3982, %v4071
  %v4175 = vsub.f32 %v3983, %v4073
  %v4176 = vsub.f32 %v3984, %v4075
  %v4177 = vsub.f32 %v3985, %v4077
  %v4178 = vsub.f32 %v3986, %v4079
  %v4179 = vsub.f32 %v3987, %v4081
  %v4180 = vsub.f32 %v3988, %v4083
  %v4181 = vsub.f32 %v3989, %v4085
  %v4182 = vsub.f32 %v3990, %v4087
  %v4183 = vsub.f32 %v3991, %v4089
  %v4184 = vsub.f32 %v3992, %v4091
  %v4185 = vsub.f32 %v3993, %v4093
  %v4186 = vsub.f32 %v3994, %v4095
  %v4187 = vsub.f32 %v3995, %v4097
  %v4188 = vsub.f32 %v3996, %v4099
  %v4189 = vsub.f32 %v3997, %v4101
  %v4190 = vsub.f32 %v3998, %v4103
  %v4191 = vsub.f32 %v3999, %v4105
  %v4192 = vsub.f32 %v4000, %v4107
  %v4193 = vsub.f32 %v4001, %v4109
  %v4194 = vsub.f32 %v4002, %v4111
  %v4195 = vsub.f32 %v4003, %v4113
  %v4196 = vsub.f32 %v4004, %v4115
  %v4197 = vsub.f32 %v4005, %v4117
  %v4198 = vsub.f32 %v4006, %v4119
  %v4199 = vsub.f32 %v4007, %v4121
  %v4200 = vsub.f32 %v4008, %v4123
  %v4201 = vsub.f32 %v4009, %v4125
  %v4202 = vsub.f32 %v4010, %v4127
  %v4203 = vsub.f32 %v4011, %v4129
  %v4204 = vsub.f32 %v4012, %v4131
  %v4205 = vsub.f32 %v4013, %v4133
  %v4206 = vsub.f32 %v4014, %v4135
  %v4207 = vsub.f32 %v4015, %v4137
  %v4208 = vsub.f32 %v4016, %v4139
  %v4209 = vsub.f32 %v4017, %v4141
  %v4210 = vsub.f32 %v4018, %v4143
  %v4211 = vsub.f32 %v4019, %v4145
  %v4212 = vsub.f32 %v4020, %v4147
  %v4213 = vsub.f32 %v4021, %v4149
  %v4214 = vmul.f32 %v4150, 1.442695
  %v4215 = vpow.pop %v4214
  %v4216 = vmul.f32 %v4151, 1.442695
  %v4217 = vpow.pop %v4216
  %v4218 = vmul.f32 %v4152, 1.442695
  %v4219 = vpow.pop %v4218
  %v4220 = vmul.f32 %v4153, 1.442695
  %v4221 = vpow.pop %v4220
  %v4222 = vmul.f32 %v4154, 1.442695
  %v4223 = vpow.pop %v4222
  %v4224 = vmul.f32 %v4155, 1.442695
  %v4225 = vpow.pop %v4224
  %v4226 = vmul.f32 %v4156, 1.442695
  %v4227 = vpow.pop %v4226
  %v4228 = vmul.f32 %v4157, 1.442695
  %v4229 = vpow.pop %v4228
  %v4230 = vmul.f32 %v4158, 1.442695
  %v4231 = vpow.pop %v4230
  %v4232 = vmul.f32 %v4159, 1.442695
  %v4233 = vpow.pop %v4232
  %v4234 = vmul.f32 %v4160, 1.442695
  %v4235 = vpow.pop %v4234
  %v4236 = vmul.f32 %v4161, 1.442695
  %v4237 = vpow.pop %v4236
  %v4238 = vmul.f32 %v4162, 1.442695
  %v4239 = vpow.pop %v4238
  %v4240 = vmul.f32 %v4163, 1.442695
  %v4241 = vpow.pop %v4240
  %v4242 = vmul.f32 %v4164, 1.442695
  %v4243 = vpow.pop %v4242
  %v4244 = vmul.f32 %v4165, 1.442695
  %v4245 = vpow.pop %v4244
  %v4246 = vmul.f32 %v4166, 1.442695
  %v4247 = vpow.pop %v4246
  %v4248 = vmul.f32 %v4167, 1.442695
  %v4249 = vpow.pop %v4248
  %v4250 = vmul.f32 %v4168, 1.442695
  %v4251 = vpow.pop %v4250
  %v4252 = vmul.f32 %v4169, 1.442695
  %v4253 = vpow.pop %v4252
  %v4254 = vmul.f32 %v4170, 1.442695
  %v4255 = vpow.pop %v4254
  %v4256 = vmul.f32 %v4171, 1.442695
  %v4257 = vpow.pop %v4256
  %v4258 = vmul.f32 %v4172, 1.442695
  %v4259 = vpow.pop %v4258
  %v4260 = vmul.f32 %v4173, 1.442695
  %v4261 = vpow.pop %v4260
  %v4262 = vmul.f32 %v4174, 1.442695
  %v4263 = vpow.pop %v4262
  %v4264 = vmul.f32 %v4175, 1.442695
  %v4265 = vpow.pop %v4264
  %v4266 = vmul.f32 %v4176, 1.442695
  %v4267 = vpow.pop %v4266
  %v4268 = vmul.f32 %v4177, 1.442695
  %v4269 = vpow.pop %v4268
  %v4270 = vmul.f32 %v4178, 1.442695
  %v4271 = vpow.pop %v4270
  %v4272 = vmul.f32 %v4179, 1.442695
  %v4273 = vpow.pop %v4272
  %v4274 = vmul.f32 %v4180, 1.442695
  %v4275 = vpow.pop %v4274
  %v4276 = vmul.f32 %v4181, 1.442695
  %v4277 = vpow.pop %v4276
  %v4278 = vmul.f32 %v4182, 1.442695
  %v4279 = vpow.pop %v4278
  %v4280 = vmul.f32 %v4183, 1.442695
  %v4281 = vpow.pop %v4280
  %v4282 = vmul.f32 %v4184, 1.442695
  %v4283 = vpow.pop %v4282
  %v4284 = vmul.f32 %v4185, 1.442695
  %v4285 = vpow.pop %v4284
  %v4286 = vmul.f32 %v4186, 1.442695
  %v4287 = vpow.pop %v4286
  %v4288 = vmul.f32 %v4187, 1.442695
  %v4289 = vpow.pop %v4288
  %v4290 = vmul.f32 %v4188, 1.442695
  %v4291 = vpow.pop %v4290
  %v4292 = vmul.f32 %v4189, 1.442695
  %v4293 = vpow.pop %v4292
  %v4294 = vmul.f32 %v4190, 1.442695
  %v4295 = vpow.pop %v4294
  %v4296 = vmul.f32 %v4191, 1.442695
  %v4297 = vpow.pop %v4296
  %v4298 = vmul.f32 %v4192, 1.442695
  %v4299 = vpow.pop %v4298
  %v4300 = vmul.f32 %v4193, 1.442695
  %v4301 = vpow.pop %v4300
  %v4302 = vmul.f32 %v4194, 1.442695
  %v4303 = vpow.pop %v4302
  %v4304 = vmul.f32 %v4195, 1.442695
  %v4305 = vpow.pop %v4304
  %v4306 = vmul.f32 %v4196, 1.442695
  %v4307 = vpow.pop %v4306
  %v4308 = vmul.f32 %v4197, 1.442695
  %v4309 = vpow.pop %v4308
  %v4310 = vmul.f32 %v4198, 1.442695
  %v4311 = vpow.pop %v4310
  %v4312 = vmul.f32 %v4199, 1.442695
  %v4313 = vpow.pop %v4312
  %v4314 = vmul.f32 %v4200, 1.442695
  %v4315 = vpow.pop %v4314
  %v4316 = vmul.f32 %v4201, 1.442695
  %v4317 = vpow.pop %v4316
  %v4318 = vmul.f32 %v4202, 1.442695
  %v4319 = vpow.pop %v4318
  %v4320 = vmul.f32 %v4203, 1.442695
  %v4321 = vpow.pop %v4320
  %v4322 = vmul.f32 %v4204, 1.442695
  %v4323 = vpow.pop %v4322
  %v4324 = vmul.f32 %v4205, 1.442695
  %v4325 = vpow.pop %v4324
  %v4326 = vmul.f32 %v4206, 1.442695
  %v4327 = vpow.pop %v4326
  %v4328 = vmul.f32 %v4207, 1.442695
  %v4329 = vpow.pop %v4328
  %v4330 = vmul.f32 %v4208, 1.442695
  %v4331 = vpow.pop %v4330
  %v4332 = vmul.f32 %v4209, 1.442695
  %v4333 = vpow.pop %v4332
  %v4334 = vmul.f32 %v4210, 1.442695
  %v4335 = vpow.pop %v4334
  %v4336 = vmul.f32 %v4211, 1.442695
  %v4337 = vpow.pop %v4336
  %v4338 = vmul.f32 %v4212, 1.442695
  %v4339 = vpow.pop %v4338
  %v4340 = vmul.f32 %v4213, 1.442695
  %v4341 = vpow.pop %v4340
  %4342 = vadd.xlane.f32.xlu0 %v4215
  %v4343 = vpop.xlane.xlu0 %4342
  %4344 = vadd.xlane.f32.xlu0 %v4217
  %v4345 = vpop.xlane.xlu0 %4344
  %4346 = vadd.xlane.f32.xlu0 %v4219
  %v4347 = vpop.xlane.xlu0 %4346
  %4348 = vadd.xlane.f32.xlu0 %v4221
  %v4349 = vpop.xlane.xlu0 %4348
  %4350 = vadd.xlane.f32.xlu0 %v4223
  %v4351 = vpop.xlane.xlu0 %4350
  %4352 = vadd.xlane.f32.xlu0 %v4225
  %v4353 = vpop.xlane.xlu0 %4352
  %4354 = vadd.xlane.f32.xlu0 %v4227
  %v4355 = vpop.xlane.xlu0 %4354
  %4356 = vadd.xlane.f32.xlu0 %v4229
  %v4357 = vpop.xlane.xlu0 %4356
  %4358 = vadd.xlane.f32.xlu0 %v4231
  %v4359 = vpop.xlane.xlu0 %4358
  %4360 = vadd.xlane.f32.xlu0 %v4233
  %v4361 = vpop.xlane.xlu0 %4360
  %4362 = vadd.xlane.f32.xlu0 %v4235
  %v4363 = vpop.xlane.xlu0 %4362
  %4364 = vadd.xlane.f32.xlu0 %v4237
  %v4365 = vpop.xlane.xlu0 %4364
  %4366 = vadd.xlane.f32.xlu0 %v4239
  %v4367 = vpop.xlane.xlu0 %4366
  %4368 = vadd.xlane.f32.xlu0 %v4241
  %v4369 = vpop.xlane.xlu0 %4368
  %4370 = vadd.xlane.f32.xlu0 %v4243
  %v4371 = vpop.xlane.xlu0 %4370
  %4372 = vadd.xlane.f32.xlu0 %v4245
  %v4373 = vpop.xlane.xlu0 %4372
  %4374 = vadd.xlane.f32.xlu0 %v4247
  %v4375 = vpop.xlane.xlu0 %4374
  %4376 = vadd.xlane.f32.xlu0 %v4249
  %v4377 = vpop.xlane.xlu0 %4376
  %4378 = vadd.xlane.f32.xlu0 %v4251
  %v4379 = vpop.xlane.xlu0 %4378
  %4380 = vadd.xlane.f32.xlu0 %v4253
  %v4381 = vpop.xlane.xlu0 %4380
  %4382 = vadd.xlane.f32.xlu0 %v4255
  %v4383 = vpop.xlane.xlu0 %4382
  %4384 = vadd.xlane.f32.xlu0 %v4257
  %v4385 = vpop.xlane.xlu0 %4384
  %4386 = vadd.xlane.f32.xlu0 %v4259
  %v4387 = vpop.xlane.xlu0 %4386
  %4388 = vadd.xlane.f32.xlu0 %v4261
  %v4389 = vpop.xlane.xlu0 %4388
  %4390 = vadd.xlane.f32.xlu0 %v4263
  %v4391 = vpop.xlane.xlu0 %4390
  %4392 = vadd.xlane.f32.xlu0 %v4265
  %v4393 = vpop.xlane.xlu0 %4392
  %4394 = vadd.xlane.f32.xlu0 %v4267
  %v4395 = vpop.xlane.xlu0 %4394
  %4396 = vadd.xlane.f32.xlu0 %v4269
  %v4397 = vpop.xlane.xlu0 %4396
  %4398 = vadd.xlane.f32.xlu0 %v4271
  %v4399 = vpop.xlane.xlu0 %4398
  %4400 = vadd.xlane.f32.xlu0 %v4273
  %v4401 = vpop.xlane.xlu0 %4400
  %4402 = vadd.xlane.f32.xlu0 %v4275
  %v4403 = vpop.xlane.xlu0 %4402
  %4404 = vadd.xlane.f32.xlu0 %v4277
  %v4405 = vpop.xlane.xlu0 %4404
  %4406 = vadd.xlane.f32.xlu0 %v4279
  %v4407 = vpop.xlane.xlu0 %4406
  %4408 = vadd.xlane.f32.xlu0 %v4281
  %v4409 = vpop.xlane.xlu0 %4408
  %4410 = vadd.xlane.f32.xlu0 %v4283
  %v4411 = vpop.xlane.xlu0 %4410
  %4412 = vadd.xlane.f32.xlu0 %v4285
  %v4413 = vpop.xlane.xlu0 %4412
  %4414 = vadd.xlane.f32.xlu0 %v4287
  %v4415 = vpop.xlane.xlu0 %4414
  %4416 = vadd.xlane.f32.xlu0 %v4289
  %v4417 = vpop.xlane.xlu0 %4416
  %4418 = vadd.xlane.f32.xlu0 %v4291
  %v4419 = vpop.xlane.xlu0 %4418
  %4420 = vadd.xlane.f32.xlu0 %v4293
  %v4421 = vpop.xlane.xlu0 %4420
  %4422 = vadd.xlane.f32.xlu0 %v4295
  %v4423 = vpop.xlane.xlu0 %4422
  %4424 = vadd.xlane.f32.xlu0 %v4297
  %v4425 = vpop.xlane.xlu0 %4424
  %4426 = vadd.xlane.f32.xlu0 %v4299
  %v4427 = vpop.xlane.xlu0 %4426
  %4428 = vadd.xlane.f32.xlu0 %v4301
  %v4429 = vpop.xlane.xlu0 %4428
  %4430 = vadd.xlane.f32.xlu0 %v4303
  %v4431 = vpop.xlane.xlu0 %4430
  %4432 = vadd.xlane.f32.xlu0 %v4305
  %v4433 = vpop.xlane.xlu0 %4432
  %4434 = vadd.xlane.f32.xlu0 %v4307
  %v4435 = vpop.xlane.xlu0 %4434
  %4436 = vadd.xlane.f32.xlu0 %v4309
  %v4437 = vpop.xlane.xlu0 %4436
  %4438 = vadd.xlane.f32.xlu0 %v4311
  %v4439 = vpop.xlane.xlu0 %4438
  %4440 = vadd.xlane.f32.xlu0 %v4313
  %v4441 = vpop.xlane.xlu0 %4440
  %4442 = vadd.xlane.f32.xlu0 %v4315
  %v4443 = vpop.xlane.xlu0 %4442
  %4444 = vadd.xlane.f32.xlu0 %v4317
  %v4445 = vpop.xlane.xlu0 %4444
  %4446 = vadd.xlane.f32.xlu0 %v4319
  %v4447 = vpop.xlane.xlu0 %4446
  %4448 = vadd.xlane.f32.xlu0 %v4321
  %v4449 = vpop.xlane.xlu0 %4448
  %4450 = vadd.xlane.f32.xlu0 %v4323
  %v4451 = vpop.xlane.xlu0 %4450
  %4452 = vadd.xlane.f32.xlu0 %v4325
  %v4453 = vpop.xlane.xlu0 %4452
  %4454 = vadd.xlane.f32.xlu0 %v4327
  %v4455 = vpop.xlane.xlu0 %4454
  %4456 = vadd.xlane.f32.xlu0 %v4329
  %v4457 = vpop.xlane.xlu0 %4456
  %4458 = vadd.xlane.f32.xlu0 %v4331
  %v4459 = vpop.xlane.xlu0 %4458
  %4460 = vadd.xlane.f32.xlu0 %v4333
  %v4461 = vpop.xlane.xlu0 %4460
  %4462 = vadd.xlane.f32.xlu0 %v4335
  %v4463 = vpop.xlane.xlu0 %4462
  %4464 = vadd.xlane.f32.xlu0 %v4337
  %v4465 = vpop.xlane.xlu0 %4464
  %4466 = vadd.xlane.f32.xlu0 %v4339
  %v4467 = vpop.xlane.xlu0 %4466
  %4468 = vadd.xlane.f32.xlu0 %v4341
  %v4469 = vpop.xlane.xlu0 %4468
  %v4470 = vrcp.pop %v4343
  %v4471 = vmul.f32 %v4215, %v4470
  %v4472 = vrcp.pop %v4345
  %v4473 = vmul.f32 %v4217, %v4472
  %v4474 = vrcp.pop %v4347
  %v4475 = vmul.f32 %v4219, %v4474
  %v4476 = vrcp.pop %v4349
  %v4477 = vmul.f32 %v4221, %v4476
  %v4478 = vrcp.pop %v4351
  %v4479 = vmul.f32 %v4223, %v4478
  %v4480 = vrcp.pop %v4353
  %v4481 = vmul.f32 %v4225, %v4480
  %v4482 = vrcp.pop %v4355
  %v4483 = vmul.f32 %v4227, %v4482
  %v4484 = vrcp.pop %v4357
  %v4485 = vmul.f32 %v4229, %v4484
  %v4486 = vrcp.pop %v4359
  %v4487 = vmul.f32 %v4231, %v4486
  %v4488 = vrcp.pop %v4361
  %v4489 = vmul.f32 %v4233, %v4488
  %v4490 = vrcp.pop %v4363
  %v4491 = vmul.f32 %v4235, %v4490
  %v4492 = vrcp.pop %v4365
  %v4493 = vmul.f32 %v4237, %v4492
  %v4494 = vrcp.pop %v4367
  %v4495 = vmul.f32 %v4239, %v4494
  %v4496 = vrcp.pop %v4369
  %v4497 = vmul.f32 %v4241, %v4496
  %v4498 = vrcp.pop %v4371
  %v4499 = vmul.f32 %v4243, %v4498
  %v4500 = vrcp.pop %v4373
  %v4501 = vmul.f32 %v4245, %v4500
  %v4502 = vrcp.pop %v4375
  %v4503 = vmul.f32 %v4247, %v4502
  %v4504 = vrcp.pop %v4377
  %v4505 = vmul.f32 %v4249, %v4504
  %v4506 = vrcp.pop %v4379
  %v4507 = vmul.f32 %v4251, %v4506
  %v4508 = vrcp.pop %v4381
  %v4509 = vmul.f32 %v4253, %v4508
  %v4510 = vrcp.pop %v4383
  %v4511 = vmul.f32 %v4255, %v4510
  %v4512 = vrcp.pop %v4385
  %v4513 = vmul.f32 %v4257, %v4512
  %v4514 = vrcp.pop %v4387
  %v4515 = vmul.f32 %v4259, %v4514
  %v4516 = vrcp.pop %v4389
  %v4517 = vmul.f32 %v4261, %v4516
  %v4518 = vrcp.pop %v4391
  %v4519 = vmul.f32 %v4263, %v4518
  %v4520 = vrcp.pop %v4393
  %v4521 = vmul.f32 %v4265, %v4520
  %v4522 = vrcp.pop %v4395
  %v4523 = vmul.f32 %v4267, %v4522
  %v4524 = vrcp.pop %v4397
  %v4525 = vmul.f32 %v4269, %v4524
  %v4526 = vrcp.pop %v4399
  %v4527 = vmul.f32 %v4271, %v4526
  %v4528 = vrcp.pop %v4401
  %v4529 = vmul.f32 %v4273, %v4528
  %v4530 = vrcp.pop %v4403
  %v4531 = vmul.f32 %v4275, %v4530
  %v4532 = vrcp.pop %v4405
  %v4533 = vmul.f32 %v4277, %v4532
  %v4534 = vrcp.pop %v4407
  %v4535 = vmul.f32 %v4279, %v4534
  %v4536 = vrcp.pop %v4409
  %v4537 = vmul.f32 %v4281, %v4536
  %v4538 = vrcp.pop %v4411
  %v4539 = vmul.f32 %v4283, %v4538
  %v4540 = vrcp.pop %v4413
  %v4541 = vmul.f32 %v4285, %v4540
  %v4542 = vrcp.pop %v4415
  %v4543 = vmul.f32 %v4287, %v4542
  %v4544 = vrcp.pop %v4417
  %v4545 = vmul.f32 %v4289, %v4544
  %v4546 = vrcp.pop %v4419
  %v4547 = vmul.f32 %v4291, %v4546
  %v4548 = vrcp.pop %v4421
  %v4549 = vmul.f32 %v4293, %v4548
  %v4550 = vrcp.pop %v4423
  %v4551 = vmul.f32 %v4295, %v4550
  %v4552 = vrcp.pop %v4425
  %v4553 = vmul.f32 %v4297, %v4552
  %v4554 = vrcp.pop %v4427
  %v4555 = vmul.f32 %v4299, %v4554
  %v4556 = vrcp.pop %v4429
  %v4557 = vmul.f32 %v4301, %v4556
  %v4558 = vrcp.pop %v4431
  %v4559 = vmul.f32 %v4303, %v4558
  %v4560 = vrcp.pop %v4433
  %v4561 = vmul.f32 %v4305, %v4560
  %v4562 = vrcp.pop %v4435
  %v4563 = vmul.f32 %v4307, %v4562
  %v4564 = vrcp.pop %v4437
  %v4565 = vmul.f32 %v4309, %v4564
  %v4566 = vrcp.pop %v4439
  %v4567 = vmul.f32 %v4311, %v4566
  %v4568 = vrcp.pop %v4441
  %v4569 = vmul.f32 %v4313, %v4568
  %v4570 = vrcp.pop %v4443
  %v4571 = vmul.f32 %v4315, %v4570
  %v4572 = vrcp.pop %v4445
  %v4573 = vmul.f32 %v4317, %v4572
  %v4574 = vrcp.pop %v4447
  %v4575 = vmul.f32 %v4319, %v4574
  %v4576 = vrcp.pop %v4449
  %v4577 = vmul.f32 %v4321, %v4576
  %v4578 = vrcp.pop %v4451
  %v4579 = vmul.f32 %v4323, %v4578
  %v4580 = vrcp.pop %v4453
  %v4581 = vmul.f32 %v4325, %v4580
  %v4582 = vrcp.pop %v4455
  %v4583 = vmul.f32 %v4327, %v4582
  %v4584 = vrcp.pop %v4457
  %v4585 = vmul.f32 %v4329, %v4584
  %v4586 = vrcp.pop %v4459
  %v4587 = vmul.f32 %v4331, %v4586
  %v4588 = vrcp.pop %v4461
  %v4589 = vmul.f32 %v4333, %v4588
  %v4590 = vrcp.pop %v4463
  %v4591 = vmul.f32 %v4335, %v4590
  %v4592 = vrcp.pop %v4465
  %v4593 = vmul.f32 %v4337, %v4592
  %v4594 = vrcp.pop %v4467
  %v4595 = vmul.f32 %v4339, %v4594
  %v4596 = vrcp.pop %v4469
  %v4597 = vmul.f32 %v4341, %v4596
  %vm4598 = vcmask 31744
  %4599 = vst.msk [vmem:[%s6] sm:$0xff] %vm4598, %v4471
  %4600 = vst.msk [vmem:[%s6 + $0x8] sm:$0xff] %vm4598, %v4473
  %4601 = vst.msk [vmem:[%s6 + $0x10] sm:$0xff] %vm4598, %v4475
  %4602 = vst.msk [vmem:[%s6 + $0x18] sm:$0xff] %vm4598, %v4477
  %4603 = vst.msk [vmem:[%s6 + $0x20] sm:$0xff] %vm4598, %v4479
  %4604 = vst.msk [vmem:[%s6 + $0x28] sm:$0xff] %vm4598, %v4481
  %4605 = vst.msk [vmem:[%s6 + $0x30] sm:$0xff] %vm4598, %v4483
  %4606 = vst.msk [vmem:[%s6 + $0x38] sm:$0xff] %vm4598, %v4485
  %4607 = vst.msk [vmem:[%s6 + $0x40] sm:$0xff] %vm4598, %v4487
  %4608 = vst.msk [vmem:[%s6 + $0x48] sm:$0xff] %vm4598, %v4489
  %4609 = vst.msk [vmem:[%s6 + $0x50] sm:$0xff] %vm4598, %v4491
  %4610 = vst.msk [vmem:[%s6 + $0x58] sm:$0xff] %vm4598, %v4493
  %4611 = vst.msk [vmem:[%s6 + $0x60] sm:$0xff] %vm4598, %v4495
  %4612 = vst.msk [vmem:[%s6 + $0x68] sm:$0xff] %vm4598, %v4497
  %4613 = vst.msk [vmem:[%s6 + $0x70] sm:$0xff] %vm4598, %v4499
  %4614 = vst.msk [vmem:[%s6 + $0x78] sm:$0xff] %vm4598, %v4501
  %4615 = vst.msk [vmem:[%s6 + $0x80] sm:$0xff] %vm4598, %v4503
  %4616 = vst.msk [vmem:[%s6 + $0x88] sm:$0xff] %vm4598, %v4505
  %4617 = vst.msk [vmem:[%s6 + $0x90] sm:$0xff] %vm4598, %v4507
  %4618 = vst.msk [vmem:[%s6 + $0x98] sm:$0xff] %vm4598, %v4509
  %4619 = vst.msk [vmem:[%s6 + $0xa0] sm:$0xff] %vm4598, %v4511
  %4620 = vst.msk [vmem:[%s6 + $0xa8] sm:$0xff] %vm4598, %v4513
  %4621 = vst.msk [vmem:[%s6 + $0xb0] sm:$0xff] %vm4598, %v4515
  %4622 = vst.msk [vmem:[%s6 + $0xb8] sm:$0xff] %vm4598, %v4517
  %4623 = vst.msk [vmem:[%s6 + $0xc0] sm:$0xff] %vm4598, %v4519
  %4624 = vst.msk [vmem:[%s6 + $0xc8] sm:$0xff] %vm4598, %v4521
  %4625 = vst.msk [vmem:[%s6 + $0xd0] sm:$0xff] %vm4598, %v4523
  %4626 = vst.msk [vmem:[%s6 + $0xd8] sm:$0xff] %vm4598, %v4525
  %4627 = vst.msk [vmem:[%s6 + $0xe0] sm:$0xff] %vm4598, %v4527
  %4628 = vst.msk [vmem:[%s6 + $0xe8] sm:$0xff] %vm4598, %v4529
  %4629 = vst.msk [vmem:[%s6 + $0xf0] sm:$0xff] %vm4598, %v4531
  %4630 = vst.msk [vmem:[%s6 + $0xf8] sm:$0xff] %vm4598, %v4533
  %4631 = vst.msk [vmem:[%s6 + $0x100] sm:$0xff] %vm4598, %v4535
  %4632 = vst.msk [vmem:[%s6 + $0x108] sm:$0xff] %vm4598, %v4537
  %4633 = vst.msk [vmem:[%s6 + $0x110] sm:$0xff] %vm4598, %v4539
  %4634 = vst.msk [vmem:[%s6 + $0x118] sm:$0xff] %vm4598, %v4541
  %4635 = vst.msk [vmem:[%s6 + $0x120] sm:$0xff] %vm4598, %v4543
  %4636 = vst.msk [vmem:[%s6 + $0x128] sm:$0xff] %vm4598, %v4545
  %4637 = vst.msk [vmem:[%s6 + $0x130] sm:$0xff] %vm4598, %v4547
  %4638 = vst.msk [vmem:[%s6 + $0x138] sm:$0xff] %vm4598, %v4549
  %4639 = vst.msk [vmem:[%s6 + $0x140] sm:$0xff] %vm4598, %v4551
  %4640 = vst.msk [vmem:[%s6 + $0x148] sm:$0xff] %vm4598, %v4553
  %4641 = vst.msk [vmem:[%s6 + $0x150] sm:$0xff] %vm4598, %v4555
  %4642 = vst.msk [vmem:[%s6 + $0x158] sm:$0xff] %vm4598, %v4557
  %4643 = vst.msk [vmem:[%s6 + $0x160] sm:$0xff] %vm4598, %v4559
  %4644 = vst.msk [vmem:[%s6 + $0x168] sm:$0xff] %vm4598, %v4561
  %4645 = vst.msk [vmem:[%s6 + $0x170] sm:$0xff] %vm4598, %v4563
  %4646 = vst.msk [vmem:[%s6 + $0x178] sm:$0xff] %vm4598, %v4565
  %4647 = vst.msk [vmem:[%s6 + $0x180] sm:$0xff] %vm4598, %v4567
  %4648 = vst.msk [vmem:[%s6 + $0x188] sm:$0xff] %vm4598, %v4569
  %4649 = vst.msk [vmem:[%s6 + $0x190] sm:$0xff] %vm4598, %v4571
  %4650 = vst.msk [vmem:[%s6 + $0x198] sm:$0xff] %vm4598, %v4573
  %4651 = vst.msk [vmem:[%s6 + $0x1a0] sm:$0xff] %vm4598, %v4575
  %4652 = vst.msk [vmem:[%s6 + $0x1a8] sm:$0xff] %vm4598, %v4577
  %4653 = vst.msk [vmem:[%s6 + $0x1b0] sm:$0xff] %vm4598, %v4579
  %4654 = vst.msk [vmem:[%s6 + $0x1b8] sm:$0xff] %vm4598, %v4581
  %4655 = vst.msk [vmem:[%s6 + $0x1c0] sm:$0xff] %vm4598, %v4583
  %4656 = vst.msk [vmem:[%s6 + $0x1c8] sm:$0xff] %vm4598, %v4585
  %4657 = vst.msk [vmem:[%s6 + $0x1d0] sm:$0xff] %vm4598, %v4587
  %4658 = vst.msk [vmem:[%s6 + $0x1d8] sm:$0xff] %vm4598, %v4589
  %4659 = vst.msk [vmem:[%s6 + $0x1e0] sm:$0xff] %vm4598, %v4591
  %4660 = vst.msk [vmem:[%s6 + $0x1e8] sm:$0xff] %vm4598, %v4593
  %4661 = vst.msk [vmem:[%s6 + $0x1f0] sm:$0xff] %vm4598, %v4595
  %4662 = vst.msk [vmem:[%s6 + $0x1f8] sm:$0xff] %vm4598, %v4597
  // Predicated region
  $region26: #{plp_forward.1} parent=0 // pred_check
    _
  $region27: #{plp_forward.1} parent=0 // pred_check_branch
    %4664 = sbr.rel (0) target = $region29
  $region28: #{plp_forward.1} parent=0 // pred_region
    _
  $region29: #{plp_forward.1} parent=0 // pred_fallthru
    _
  // Predicated region
  $region30: #{plp_forward.1} parent=0 // pred_check
    _
  $region31: #{plp_forward.1} parent=0 // pred_check_branch
    %4666 = sbr.rel (0) target = $region33
  $region32: #{plp_forward.1} parent=0 // pred_region
    _
  $region33: #{plp_forward.1} parent=0 // pred_fallthru
    _

</llo_original>
